<compile_context>
chip_gen: v7x
topology: tpu7x:2x2x1
jax: 0.10.0
libtpu: 0.0.40
codegen_flags: <defaults>
</compile_context>

<pallas_src>
import math

import jax
import jax.numpy as jnp
from jax.experimental import pallas as pl
from jax.experimental.pallas import tpu as pltpu

# ----------------------------- configuration --------------------------------
D_MODEL = 32          # d_model
D_COND = 16           # d_cond
N_HEADS = 4           # n_heads
D_HEAD = D_MODEL // N_HEADS
N_LAYERS = 2          # n_layers
SEQ = 8               # T
BATCH = 2             # B
NUM_BUCKETS = 32      # attention_num_buckets
MAX_DIST = 128        # attention_max_distance
EPS = 1e-6            # RMSNorm eps

_INV_SQRT_DH = 1.0 / math.sqrt(D_HEAD)
_GELU_C = math.sqrt(2.0 / math.pi)


# ------------------------------ kernel helpers -------------------------------
def _rmsnorm(x, g):
    var = jnp.mean(x * x, axis=-1, keepdims=True)
    return g * (x * jax.lax.rsqrt(var + EPS))


def _new_gelu(x):
    # vampnet NewGELU (tanh approximation)
    return 0.5 * x * (1.0 + jnp.tanh(_GELU_C * (x + 0.044715 * x * x * x)))


# ------------------------------ fused kernel ---------------------------------
def stack_kernel(x_ref, bias_ref, cond_ref,
                 g1_ref, g3_ref, wq_ref, wk_ref, wv_ref, wfc_ref,
                 w1a_ref, w1b_ref, w2_ref, filmw_ref, filmb_ref, gfin_ref,
                 o_ref):
    """Entire TransformerStack forward for the whole (tiny) batch."""
    B, T, D = BATCH, SEQ, D_MODEL
    H, dh = N_HEADS, D_HEAD
    LC = 4 * N_LAYERS * D

    x = x_ref[...]                                    # [B*T, D] residual stream

    # --- FiLM for ALL layers, hoisted: one [B,Dc] x [Dc, L*4*D] matmul, then a
    # single per-batch sublane broadcast to row-align with x.
    film_all = jnp.dot(cond_ref[...], filmw_ref[...],
                       preferred_element_type=jnp.float32) + filmb_ref[...]   # [B, LC]
    film_rows = jnp.concatenate(
        [jnp.broadcast_to(film_all[b:b + 1, :], (T, LC)) for b in range(B)],
        axis=0)                                        # [B*T, LC]

    # --- mask-folded position bias (layer-invariant): [H, B, T, T]
    bias_all = bias_ref[...]

    for l in range(N_LAYERS):                          # static unroll over layers
        base = l * 4 * D
        gamma1 = film_rows[:, base + 0 * D: base + 1 * D]
        beta1 = film_rows[:, base + 1 * D: base + 2 * D]
        gamma3 = film_rows[:, base + 2 * D: base + 3 * D]
        beta3 = film_rows[:, base + 3 * D: base + 4 * D]

        # ---------------- self-attention block ----------------
        y = _rmsnorm(x, g1_ref[l]) * (gamma1 + 1.0) + beta1       # norm_1 + film_1
        # three lane-aligned projections; 1/sqrt(d_head) already folded into wq
        q = jnp.dot(y, wq_ref[l], preferred_element_type=jnp.float32).reshape(B, T, D)
        k = jnp.dot(y, wk_ref[l], preferred_element_type=jnp.float32).reshape(B, T, D)
        v = jnp.dot(y, wv_ref[l], preferred_element_type=jnp.float32).reshape(B, T, D)
        wfc_l = wfc_ref[l]                                         # [D, D]

        attn_out = None
        for h in range(H):                                         # static unroll
            c0, c1 = h * dh, (h + 1) * dh
            s = jnp.einsum('bqd,bkd->bqk', q[:, :, c0:c1], k[:, :, c0:c1],
                           preferred_element_type=jnp.float32)     # [B, T, T]
            s = s + bias_all[h]                       # bias + key mask, pre-folded
            s = s - jnp.max(s, axis=-1, keepdims=True)             # softmax (keys)
            p = jnp.exp(s)
            p = p * pl.reciprocal(jnp.sum(p, axis=-1, keepdims=True), approx=True)
            ctx = jnp.einsum('bqk,bkd->bqd', p, v[:, :, c0:c1],
                             preferred_element_type=jnp.float32)   # [B, T, dh]
            # fold head back through the matching rows of fc: no lane concat
            contrib = jnp.dot(ctx.reshape(B * T, dh), wfc_l[c0:c1, :],
                              preferred_element_type=jnp.float32)  # [B*T, D]
            attn_out = contrib if attn_out is None else attn_out + contrib
        x = x + attn_out                                           # residual

        # ---------------- feed-forward block (geglu) ----------------
        y = _rmsnorm(x, g3_ref[l]) * (gamma3 + 1.0) + beta3        # norm_3 + film_3
        p1 = jnp.dot(y, w1a_ref[l], preferred_element_type=jnp.float32)  # [B*T, 2D]
        p2 = jnp.dot(y, w1b_ref[l], preferred_element_type=jnp.float32)  # [B*T, 2D]
        x = x + jnp.dot(p1 * _new_gelu(p2), w2_ref[l],
                        preferred_element_type=jnp.float32)        # residual

    o_ref[...] = _rmsnorm(x, gfin_ref[...])                        # final RMSNorm


# ----------------------- position bias (init-time glue) ----------------------
def compute_position_bias(t_q, t_kv, emb):
    """T5 relative-position bucket bias; emb: [num_buckets, n_heads] -> [H, T_q, T_kv]."""
    qpos = jnp.arange(t_q)[:, None]
    kpos = jnp.arange(t_kv)[None, :]
    rel = kpos - qpos
    nb = NUM_BUCKETS // 2                                  # bidirectional
    buckets = (rel > 0).astype(jnp.int32) * nb
    rel_abs = jnp.abs(rel)
    max_exact = nb // 2
    is_small = rel_abs < max_exact
    rel_safe = jnp.maximum(rel_abs, 1).astype(jnp.float32)
    if_large = max_exact + (jnp.log(rel_safe / max_exact)
                            / math.log(MAX_DIST / max_exact)
                            * (nb - max_exact)).astype(jnp.int32)
    if_large = jnp.minimum(if_large, nb - 1)
    buckets = buckets + jnp.where(is_small, rel_abs, if_large)
    values = emb[buckets]                                  # [T_q, T_kv, H]
    return jnp.transpose(values, (2, 0, 1))                # 'q k h -> h q k'


# ------------------------------- parameters ----------------------------------
def init_params(key):
    D, Dc, L, T = D_MODEL, D_COND, N_LAYERS, SEQ

    def dense(k, shape, scale=0.02):
        return scale * jax.random.normal(k, shape, dtype=jnp.float32)

    keys = iter(jax.random.split(key, L * 14 + 1))
    wq, wk, wv, wfc, w1a, w1b, w2 = [], [], [], [], [], [], []
    filmw_cols, filmb_cols = [], []
    for _ in range(L):
        wq.append(dense(next(keys), (D, D)) * _INV_SQRT_DH)   # fold 1/sqrt(d_head)
        wk.append(dense(next(keys), (D, D)))
        wv.append(dense(next(keys), (D, D)))
        wfc.append(dense(next(keys), (D, D)))
        w1 = dense(next(keys), (D, 4 * D))                    # geglu w_1, pre-split
        w1a.append(w1[:, :2 * D])
        w1b.append(w1[:, 2 * D:])
        w2.append(dense(next(keys), (2 * D, D)))
        f1gw = dense(next(keys), (Dc, D))
        f1bw = dense(next(keys), (Dc, D))
        f3gw = dense(next(keys), (Dc, D))
        f3bw = dense(next(keys), (Dc, D))
        filmw_cols.append(jnp.concatenate([f1gw, f1bw, f3gw, f3bw], axis=1))  # [Dc, 4D]
        f1gb = dense(next(keys), (1, D))
        f1bb = dense(next(keys), (1, D))
        f3gb = dense(next(keys), (1, D))
        f3bb = dense(next(keys), (1, D))
        filmb_cols.append(jnp.concatenate([f1gb, f1bb, f3gb, f3bb], axis=1))  # [1, 4D]
    rel_bias_emb = jax.random.normal(next(keys), (NUM_BUCKETS, N_HEADS), jnp.float32)
    # position bias depends only on static T -> hoisted to init time
    pos_bias = compute_position_bias(T, T, rel_bias_emb)       # [H, T, T]
    return dict(
        g1=jnp.ones((L, 1, D), jnp.float32),       # norm_1 weights (stacked)
        g3=jnp.ones((L, 1, D), jnp.float32),       # norm_3 weights
        gfin=jnp.ones((1, D), jnp.float32),        # final RMSNorm weight
        wq=jnp.stack(wq), wk=jnp.stack(wk), wv=jnp.stack(wv), wfc=jnp.stack(wfc),
        w1a=jnp.stack(w1a), w1b=jnp.stack(w1b), w2=jnp.stack(w2),
        filmw=jnp.concatenate(filmw_cols, axis=1),  # [Dc, L*4*D]
        filmb=jnp.concatenate(filmb_cols, axis=1),  # [1, L*4*D]
        pos_bias=pos_bias,
    )


# ------------------------------- full stack -----------------------------------
def transformer_stack(x, x_mask, cond, params):
    B, T, D = x.shape
    # Fold the key mask (x_mask.unsqueeze(-2) / masked_fill(-1e9)) into the
    # layer-invariant position bias ONCE: [H, B, T, T].
    neg = jnp.where(x_mask[:, None, :], 0.0, -1000000000.0)          # [B, 1, T]
    mask_bias = params["pos_bias"][:, None, :, :] + neg[None, :, :, :]
    x2d = x.reshape(B * T, D)                                        # free reshape

    vmem = pl.BlockSpec(memory_space=pltpu.MemorySpace.VMEM)         # all-resident
    out2d = pl.pallas_call(
        stack_kernel,
        out_shape=jax.ShapeDtypeStruct((B * T, D), jnp.float32),
        in_specs=[vmem] * 15,
        out_specs=vmem,
    )(x2d, mask_bias, cond,
      params["g1"], params["g3"],
      params["wq"], params["wk"], params["wv"], params["wfc"],
      params["w1a"], params["w1b"], params["w2"],
      params["filmw"], params["filmb"], params["gfin"])
    return out2d.reshape(B, T, D)


# TODO(synk): is_decoder=True cross-attention path and flash_attn path are not
# exercised (defaults are is_decoder=False, flash_attn=False); dropout layers
# are eval-mode identities and LoRA adapters (lora_B == 0 at init) reduce to
# the base Linear, so neither is represented in-kernel.

if __name__ == "__main__":
    key = jax.random.PRNGKey(0)
    k_par, k_x, k_cond = jax.random.split(key, 3)
    params = init_params(k_par)
    x = jax.random.normal(k_x, (BATCH, SEQ, D_MODEL), jnp.float32)
    x_mask = jnp.ones((BATCH, SEQ), jnp.bool_)
    cond = jax.random.normal(k_cond, (BATCH, D_COND), jnp.float32)

    out = jax.jit(transformer_stack)(x, x_mask, cond, params)
    out = jax.block_until_ready(out)
    assert out.shape == (BATCH, SEQ, D_MODEL)
    assert bool(jnp.all(jnp.isfinite(out)))
    print("KERNEL_OK")
</pallas_src>

<mosaic_0001>
module attributes {stable_mosaic.version = 11 : i64} {
  func.func @stack_kernel(%arg0: memref<16x32xf32, #tpu.memory_space<vmem>>, %arg1: memref<4x2x8x8xf32, #tpu.memory_space<vmem>>, %arg2: memref<2x16xf32, #tpu.memory_space<vmem>>, %arg3: memref<2x1x32xf32, #tpu.memory_space<vmem>>, %arg4: memref<2x1x32xf32, #tpu.memory_space<vmem>>, %arg5: memref<2x32x32xf32, #tpu.memory_space<vmem>>, %arg6: memref<2x32x32xf32, #tpu.memory_space<vmem>>, %arg7: memref<2x32x32xf32, #tpu.memory_space<vmem>>, %arg8: memref<2x32x32xf32, #tpu.memory_space<vmem>>, %arg9: memref<2x32x64xf32, #tpu.memory_space<vmem>>, %arg10: memref<2x32x64xf32, #tpu.memory_space<vmem>>, %arg11: memref<2x64x32xf32, #tpu.memory_space<vmem>>, %arg12: memref<16x256xf32, #tpu.memory_space<vmem>>, %arg13: memref<1x256xf32, #tpu.memory_space<vmem>>, %arg14: memref<1x32xf32, #tpu.memory_space<vmem>>, %arg15: memref<16x32xf32, #tpu.memory_space<vmem>>) attributes {dimension_semantics = [], scalar_prefetch = 0 : i64, scratch_operands = 0 : i64, tpu.core_type = #tpu.core_type<tc>} {
    %c0 = arith.constant 0 : index
    %c0_0 = arith.constant 0 : index
    %0 = vector.load %arg0[%c0, %c0_0] : memref<16x32xf32, #tpu.memory_space<vmem>>, vector<16x32xf32>
    %c0_1 = arith.constant 0 : index
    %c0_2 = arith.constant 0 : index
    %1 = vector.load %arg2[%c0_1, %c0_2] : memref<2x16xf32, #tpu.memory_space<vmem>>, vector<2x16xf32>
    %c0_3 = arith.constant 0 : index
    %c0_4 = arith.constant 0 : index
    %2 = vector.load %arg12[%c0_3, %c0_4] : memref<16x256xf32, #tpu.memory_space<vmem>>, vector<16x256xf32>
    %cst = arith.constant dense<0.000000e+00> : vector<2x256xf32>
    %3 = tpu.matmul %1, %2, %cst {dimension_numbers = #tpu.dot_dimension_numbers<[1], [0], [0], [1], [0, 0, 1, 1], [], []>} : vector<2x16xf32>, vector<16x256xf32>, vector<2x256xf32> -> vector<2x256xf32>
    %c0_5 = arith.constant 0 : index
    %c0_6 = arith.constant 0 : index
    %4 = vector.load %arg13[%c0_5, %c0_6] : memref<1x256xf32, #tpu.memory_space<vmem>>, vector<1x256xf32>
    %5 = vector.broadcast %4 : vector<1x256xf32> to vector<2x256xf32>
    %6 = arith.addf %3, %5 : vector<2x256xf32>
    %7 = vector.extract_strided_slice %6 {offsets = [0, 0], sizes = [1, 256], strides = [1, 1]} : vector<2x256xf32> to vector<1x256xf32>
    %8 = vector.shape_cast %7 : vector<1x256xf32> to vector<1x256xf32>
    %9 = vector.broadcast %8 : vector<1x256xf32> to vector<8x256xf32>
    %10 = vector.extract_strided_slice %6 {offsets = [1, 0], sizes = [1, 256], strides = [1, 1]} : vector<2x256xf32> to vector<1x256xf32>
    %11 = vector.shape_cast %10 : vector<1x256xf32> to vector<1x256xf32>
    %12 = vector.broadcast %11 : vector<1x256xf32> to vector<8x256xf32>
    %13 = tpu.concatenate %9, %12 in 0 : vector<8x256xf32>, vector<8x256xf32> -> vector<16x256xf32>
    %c0_7 = arith.constant 0 : index
    %c0_8 = arith.constant 0 : index
    %c0_9 = arith.constant 0 : index
    %c0_10 = arith.constant 0 : index
    %14 = vector.load %arg1[%c0_7, %c0_8, %c0_9, %c0_10] : memref<4x2x8x8xf32, #tpu.memory_space<vmem>>, vector<4x2x8x8xf32>
    %15 = vector.extract_strided_slice %13 {offsets = [0, 0], sizes = [16, 32], strides = [1, 1]} : vector<16x256xf32> to vector<16x32xf32>
    %16 = vector.extract_strided_slice %13 {offsets = [0, 32], sizes = [16, 32], strides = [1, 1]} : vector<16x256xf32> to vector<16x32xf32>
    %17 = vector.extract_strided_slice %13 {offsets = [0, 64], sizes = [16, 32], strides = [1, 1]} : vector<16x256xf32> to vector<16x32xf32>
    %18 = vector.extract_strided_slice %13 {offsets = [0, 96], sizes = [16, 32], strides = [1, 1]} : vector<16x256xf32> to vector<16x32xf32>
    %c0_11 = arith.constant 0 : index
    %c0_12 = arith.constant 0 : index
    %c0_13 = arith.constant 0 : index
    %19 = vector.load %arg3[%c0_11, %c0_12, %c0_13] : memref<2x1x32xf32, #tpu.memory_space<vmem>>, vector<1x1x32xf32>
    %20 = vector.shape_cast %19 : vector<1x1x32xf32> to vector<1x32xf32>
    %21 = arith.mulf %0, %0 : vector<16x32xf32>
    %cst_14 = arith.constant dense<0.000000e+00> : vector<16xf32>
    %22 = vector.multi_reduction <add>, %21, %cst_14 [1] : vector<16x32xf32> to vector<16xf32>
    %23 = vector.shape_cast %22 : vector<16xf32> to vector<16x1xf32>
    %cst_15 = arith.constant 3.200000e+01 : f32
    %24 = vector.broadcast %cst_15 : f32 to vector<16x1xf32>
    %25 = arith.divf %23, %24 : vector<16x1xf32>
    %cst_16 = arith.constant 9.99999997E-7 : f32
    %26 = vector.broadcast %cst_16 : f32 to vector<16x1xf32>
    %27 = arith.addf %25, %26 : vector<16x1xf32>
    %28 = math.rsqrt %27 : vector<16x1xf32>
    %29 = vector.broadcast %28 : vector<16x1xf32> to vector<16x32xf32>
    %30 = arith.mulf %0, %29 : vector<16x32xf32>
    %31 = vector.broadcast %20 : vector<1x32xf32> to vector<16x32xf32>
    %32 = arith.mulf %31, %30 : vector<16x32xf32>
    %cst_17 = arith.constant 1.000000e+00 : f32
    %33 = vector.broadcast %cst_17 : f32 to vector<16x32xf32>
    %34 = arith.addf %15, %33 : vector<16x32xf32>
    %35 = arith.mulf %32, %34 : vector<16x32xf32>
    %36 = arith.addf %35, %16 : vector<16x32xf32>
    %c0_18 = arith.constant 0 : index
    %c0_19 = arith.constant 0 : index
    %c0_20 = arith.constant 0 : index
    %37 = vector.load %arg5[%c0_18, %c0_19, %c0_20] : memref<2x32x32xf32, #tpu.memory_space<vmem>>, vector<1x32x32xf32>
    %38 = vector.shape_cast %37 : vector<1x32x32xf32> to vector<32x32xf32>
    %cst_21 = arith.constant dense<0.000000e+00> : vector<16x32xf32>
    %39 = tpu.matmul %36, %38, %cst_21 {dimension_numbers = #tpu.dot_dimension_numbers<[1], [0], [0], [1], [0, 0, 1, 1], [], []>} : vector<16x32xf32>, vector<32x32xf32>, vector<16x32xf32> -> vector<16x32xf32>
    %40 = vector.shape_cast %39 : vector<16x32xf32> to vector<2x8x32xf32>
    %c0_22 = arith.constant 0 : index
    %c0_23 = arith.constant 0 : index
    %c0_24 = arith.constant 0 : index
    %41 = vector.load %arg6[%c0_22, %c0_23, %c0_24] : memref<2x32x32xf32, #tpu.memory_space<vmem>>, vector<1x32x32xf32>
    %42 = vector.shape_cast %41 : vector<1x32x32xf32> to vector<32x32xf32>
    %cst_25 = arith.constant dense<0.000000e+00> : vector<16x32xf32>
    %43 = tpu.matmul %36, %42, %cst_25 {dimension_numbers = #tpu.dot_dimension_numbers<[1], [0], [0], [1], [0, 0, 1, 1], [], []>} : vector<16x32xf32>, vector<32x32xf32>, vector<16x32xf32> -> vector<16x32xf32>
    %44 = vector.shape_cast %43 : vector<16x32xf32> to vector<2x8x32xf32>
    %c0_26 = arith.constant 0 : index
    %c0_27 = arith.constant 0 : index
    %c0_28 = arith.constant 0 : index
    %45 = vector.load %arg7[%c0_26, %c0_27, %c0_28] : memref<2x32x32xf32, #tpu.memory_space<vmem>>, vector<1x32x32xf32>
    %46 = vector.shape_cast %45 : vector<1x32x32xf32> to vector<32x32xf32>
    %cst_29 = arith.constant dense<0.000000e+00> : vector<16x32xf32>
    %47 = tpu.matmul %36, %46, %cst_29 {dimension_numbers = #tpu.dot_dimension_numbers<[1], [0], [0], [1], [0, 0, 1, 1], [], []>} : vector<16x32xf32>, vector<32x32xf32>, vector<16x32xf32> -> vector<16x32xf32>
    %48 = vector.shape_cast %47 : vector<16x32xf32> to vector<2x8x32xf32>
    %c0_30 = arith.constant 0 : index
    %c0_31 = arith.constant 0 : index
    %c0_32 = arith.constant 0 : index
    %49 = vector.load %arg8[%c0_30, %c0_31, %c0_32] : memref<2x32x32xf32, #tpu.memory_space<vmem>>, vector<1x32x32xf32>
    %50 = vector.shape_cast %49 : vector<1x32x32xf32> to vector<32x32xf32>
    %51 = vector.extract_strided_slice %40 {offsets = [0, 0, 0], sizes = [2, 8, 8], strides = [1, 1, 1]} : vector<2x8x32xf32> to vector<2x8x8xf32>
    %52 = vector.extract_strided_slice %44 {offsets = [0, 0, 0], sizes = [2, 8, 8], strides = [1, 1, 1]} : vector<2x8x32xf32> to vector<2x8x8xf32>
    "tpu.trace_start"() <{level = 10 : i32, message = "bqd,bkd->bqk"}> : () -> ()
    %cst_33 = arith.constant dense<0.000000e+00> : vector<2x8x8xf32>
    %53 = tpu.matmul %51, %52, %cst_33 {dimension_numbers = #tpu.dot_dimension_numbers<[2], [2], [1], [1], [0, 0, 0, 1, 1, 1], [0], [0]>} : vector<2x8x8xf32>, vector<2x8x8xf32>, vector<2x8x8xf32> -> vector<2x8x8xf32>
    "tpu.trace_stop"() : () -> ()
    %54 = vector.extract_strided_slice %14 {offsets = [0, 0, 0, 0], sizes = [1, 2, 8, 8], strides = [1, 1, 1, 1]} : vector<4x2x8x8xf32> to vector<1x2x8x8xf32>
    %55 = vector.shape_cast %54 : vector<1x2x8x8xf32> to vector<2x8x8xf32>
    %56 = arith.addf %53, %55 : vector<2x8x8xf32>
    %cst_34 = arith.constant dense<0xFF800000> : vector<2x8xf32>
    %57 = vector.multi_reduction <maximumf>, %56, %cst_34 [2] : vector<2x8x8xf32> to vector<2x8xf32>
    %58 = vector.shape_cast %57 : vector<2x8xf32> to vector<2x8x1xf32>
    %59 = vector.broadcast %58 : vector<2x8x1xf32> to vector<2x8x8xf32>
    %60 = arith.subf %56, %59 : vector<2x8x8xf32>
    %61 = math.exp %60 : vector<2x8x8xf32>
    %cst_35 = arith.constant dense<0.000000e+00> : vector<2x8xf32>
    %62 = vector.multi_reduction <add>, %61, %cst_35 [2] : vector<2x8x8xf32> to vector<2x8xf32>
    %63 = vector.shape_cast %62 : vector<2x8xf32> to vector<2x8x1xf32>
    %64 = tpu.reciprocal %63 {approx = true} : vector<2x8x1xf32> -> vector<2x8x1xf32>
    %65 = vector.broadcast %64 : vector<2x8x1xf32> to vector<2x8x8xf32>
    %66 = arith.mulf %61, %65 : vector<2x8x8xf32>
    %67 = vector.extract_strided_slice %48 {offsets = [0, 0, 0], sizes = [2, 8, 8], strides = [1, 1, 1]} : vector<2x8x32xf32> to vector<2x8x8xf32>
    "tpu.trace_start"() <{level = 10 : i32, message = "bqk,bkd->bqd"}> : () -> ()
    %cst_36 = arith.constant dense<0.000000e+00> : vector<2x8x8xf32>
    %68 = tpu.matmul %66, %67, %cst_36 {dimension_numbers = #tpu.dot_dimension_numbers<[2], [1], [1], [2], [0, 0, 0, 1, 1, 2], [0], [0]>} : vector<2x8x8xf32>, vector<2x8x8xf32>, vector<2x8x8xf32> -> vector<2x8x8xf32>
    "tpu.trace_stop"() : () -> ()
    %69 = vector.shape_cast %68 : vector<2x8x8xf32> to vector<16x8xf32>
    %70 = vector.extract_strided_slice %50 {offsets = [0, 0], sizes = [8, 32], strides = [1, 1]} : vector<32x32xf32> to vector<8x32xf32>
    %cst_37 = arith.constant dense<0.000000e+00> : vector<16x32xf32>
    %71 = tpu.matmul %69, %70, %cst_37 {dimension_numbers = #tpu.dot_dimension_numbers<[1], [0], [0], [1], [0, 0, 1, 1], [], []>} : vector<16x8xf32>, vector<8x32xf32>, vector<16x32xf32> -> vector<16x32xf32>
    %72 = vector.extract_strided_slice %40 {offsets = [0, 0, 8], sizes = [2, 8, 8], strides = [1, 1, 1]} : vector<2x8x32xf32> to vector<2x8x8xf32>
    %73 = vector.extract_strided_slice %44 {offsets = [0, 0, 8], sizes = [2, 8, 8], strides = [1, 1, 1]} : vector<2x8x32xf32> to vector<2x8x8xf32>
    "tpu.trace_start"() <{level = 10 : i32, message = "bqd,bkd->bqk"}> : () -> ()
    %cst_38 = arith.constant dense<0.000000e+00> : vector<2x8x8xf32>
    %74 = tpu.matmul %72, %73, %cst_38 {dimension_numbers = #tpu.dot_dimension_numbers<[2], [2], [1], [1], [0, 0, 0, 1, 1, 1], [0], [0]>} : vector<2x8x8xf32>, vector<2x8x8xf32>, vector<2x8x8xf32> -> vector<2x8x8xf32>
    "tpu.trace_stop"() : () -> ()
    %75 = vector.extract_strided_slice %14 {offsets = [1, 0, 0, 0], sizes = [1, 2, 8, 8], strides = [1, 1, 1, 1]} : vector<4x2x8x8xf32> to vector<1x2x8x8xf32>
    %76 = vector.shape_cast %75 : vector<1x2x8x8xf32> to vector<2x8x8xf32>
    %77 = arith.addf %74, %76 : vector<2x8x8xf32>
    %cst_39 = arith.constant dense<0xFF800000> : vector<2x8xf32>
    %78 = vector.multi_reduction <maximumf>, %77, %cst_39 [2] : vector<2x8x8xf32> to vector<2x8xf32>
    %79 = vector.shape_cast %78 : vector<2x8xf32> to vector<2x8x1xf32>
    %80 = vector.broadcast %79 : vector<2x8x1xf32> to vector<2x8x8xf32>
    %81 = arith.subf %77, %80 : vector<2x8x8xf32>
    %82 = math.exp %81 : vector<2x8x8xf32>
    %cst_40 = arith.constant dense<0.000000e+00> : vector<2x8xf32>
    %83 = vector.multi_reduction <add>, %82, %cst_40 [2] : vector<2x8x8xf32> to vector<2x8xf32>
    %84 = vector.shape_cast %83 : vector<2x8xf32> to vector<2x8x1xf32>
    %85 = tpu.reciprocal %84 {approx = true} : vector<2x8x1xf32> -> vector<2x8x1xf32>
    %86 = vector.broadcast %85 : vector<2x8x1xf32> to vector<2x8x8xf32>
    %87 = arith.mulf %82, %86 : vector<2x8x8xf32>
    %88 = vector.extract_strided_slice %48 {offsets = [0, 0, 8], sizes = [2, 8, 8], strides = [1, 1, 1]} : vector<2x8x32xf32> to vector<2x8x8xf32>
    "tpu.trace_start"() <{level = 10 : i32, message = "bqk,bkd->bqd"}> : () -> ()
    %cst_41 = arith.constant dense<0.000000e+00> : vector<2x8x8xf32>
    %89 = tpu.matmul %87, %88, %cst_41 {dimension_numbers = #tpu.dot_dimension_numbers<[2], [1], [1], [2], [0, 0, 0, 1, 1, 2], [0], [0]>} : vector<2x8x8xf32>, vector<2x8x8xf32>, vector<2x8x8xf32> -> vector<2x8x8xf32>
    "tpu.trace_stop"() : () -> ()
    %90 = vector.shape_cast %89 : vector<2x8x8xf32> to vector<16x8xf32>
    %91 = vector.extract_strided_slice %50 {offsets = [8, 0], sizes = [8, 32], strides = [1, 1]} : vector<32x32xf32> to vector<8x32xf32>
    %cst_42 = arith.constant dense<0.000000e+00> : vector<16x32xf32>
    %92 = tpu.matmul %90, %91, %cst_42 {dimension_numbers = #tpu.dot_dimension_numbers<[1], [0], [0], [1], [0, 0, 1, 1], [], []>} : vector<16x8xf32>, vector<8x32xf32>, vector<16x32xf32> -> vector<16x32xf32>
    %93 = arith.addf %71, %92 : vector<16x32xf32>
    %94 = vector.extract_strided_slice %40 {offsets = [0, 0, 16], sizes = [2, 8, 8], strides = [1, 1, 1]} : vector<2x8x32xf32> to vector<2x8x8xf32>
    %95 = vector.extract_strided_slice %44 {offsets = [0, 0, 16], sizes = [2, 8, 8], strides = [1, 1, 1]} : vector<2x8x32xf32> to vector<2x8x8xf32>
    "tpu.trace_start"() <{level = 10 : i32, message = "bqd,bkd->bqk"}> : () -> ()
    %cst_43 = arith.constant dense<0.000000e+00> : vector<2x8x8xf32>
    %96 = tpu.matmul %94, %95, %cst_43 {dimension_numbers = #tpu.dot_dimension_numbers<[2], [2], [1], [1], [0, 0, 0, 1, 1, 1], [0], [0]>} : vector<2x8x8xf32>, vector<2x8x8xf32>, vector<2x8x8xf32> -> vector<2x8x8xf32>
    "tpu.trace_stop"() : () -> ()
    %97 = vector.extract_strided_slice %14 {offsets = [2, 0, 0, 0], sizes = [1, 2, 8, 8], strides = [1, 1, 1, 1]} : vector<4x2x8x8xf32> to vector<1x2x8x8xf32>
    %98 = vector.shape_cast %97 : vector<1x2x8x8xf32> to vector<2x8x8xf32>
    %99 = arith.addf %96, %98 : vector<2x8x8xf32>
    %cst_44 = arith.constant dense<0xFF800000> : vector<2x8xf32>
    %100 = vector.multi_reduction <maximumf>, %99, %cst_44 [2] : vector<2x8x8xf32> to vector<2x8xf32>
    %101 = vector.shape_cast %100 : vector<2x8xf32> to vector<2x8x1xf32>
    %102 = vector.broadcast %101 : vector<2x8x1xf32> to vector<2x8x8xf32>
    %103 = arith.subf %99, %102 : vector<2x8x8xf32>
    %104 = math.exp %103 : vector<2x8x8xf32>
    %cst_45 = arith.constant dense<0.000000e+00> : vector<2x8xf32>
    %105 = vector.multi_reduction <add>, %104, %cst_45 [2] : vector<2x8x8xf32> to vector<2x8xf32>
    %106 = vector.shape_cast %105 : vector<2x8xf32> to vector<2x8x1xf32>
    %107 = tpu.reciprocal %106 {approx = true} : vector<2x8x1xf32> -> vector<2x8x1xf32>
    %108 = vector.broadcast %107 : vector<2x8x1xf32> to vector<2x8x8xf32>
    %109 = arith.mulf %104, %108 : vector<2x8x8xf32>
    %110 = vector.extract_strided_slice %48 {offsets = [0, 0, 16], sizes = [2, 8, 8], strides = [1, 1, 1]} : vector<2x8x32xf32> to vector<2x8x8xf32>
    "tpu.trace_start"() <{level = 10 : i32, message = "bqk,bkd->bqd"}> : () -> ()
    %cst_46 = arith.constant dense<0.000000e+00> : vector<2x8x8xf32>
    %111 = tpu.matmul %109, %110, %cst_46 {dimension_numbers = #tpu.dot_dimension_numbers<[2], [1], [1], [2], [0, 0, 0, 1, 1, 2], [0], [0]>} : vector<2x8x8xf32>, vector<2x8x8xf32>, vector<2x8x8xf32> -> vector<2x8x8xf32>
    "tpu.trace_stop"() : () -> ()
    %112 = vector.shape_cast %111 : vector<2x8x8xf32> to vector<16x8xf32>
    %113 = vector.extract_strided_slice %50 {offsets = [16, 0], sizes = [8, 32], strides = [1, 1]} : vector<32x32xf32> to vector<8x32xf32>
    %cst_47 = arith.constant dense<0.000000e+00> : vector<16x32xf32>
    %114 = tpu.matmul %112, %113, %cst_47 {dimension_numbers = #tpu.dot_dimension_numbers<[1], [0], [0], [1], [0, 0, 1, 1], [], []>} : vector<16x8xf32>, vector<8x32xf32>, vector<16x32xf32> -> vector<16x32xf32>
    %115 = arith.addf %93, %114 : vector<16x32xf32>
    %116 = vector.extract_strided_slice %40 {offsets = [0, 0, 24], sizes = [2, 8, 8], strides = [1, 1, 1]} : vector<2x8x32xf32> to vector<2x8x8xf32>
    %117 = vector.extract_strided_slice %44 {offsets = [0, 0, 24], sizes = [2, 8, 8], strides = [1, 1, 1]} : vector<2x8x32xf32> to vector<2x8x8xf32>
    "tpu.trace_start"() <{level = 10 : i32, message = "bqd,bkd->bqk"}> : () -> ()
    %cst_48 = arith.constant dense<0.000000e+00> : vector<2x8x8xf32>
    %118 = tpu.matmul %116, %117, %cst_48 {dimension_numbers = #tpu.dot_dimension_numbers<[2], [2], [1], [1], [0, 0, 0, 1, 1, 1], [0], [0]>} : vector<2x8x8xf32>, vector<2x8x8xf32>, vector<2x8x8xf32> -> vector<2x8x8xf32>
    "tpu.trace_stop"() : () -> ()
    %119 = vector.extract_strided_slice %14 {offsets = [3, 0, 0, 0], sizes = [1, 2, 8, 8], strides = [1, 1, 1, 1]} : vector<4x2x8x8xf32> to vector<1x2x8x8xf32>
    %120 = vector.shape_cast %119 : vector<1x2x8x8xf32> to vector<2x8x8xf32>
    %121 = arith.addf %118, %120 : vector<2x8x8xf32>
    %cst_49 = arith.constant dense<0xFF800000> : vector<2x8xf32>
    %122 = vector.multi_reduction <maximumf>, %121, %cst_49 [2] : vector<2x8x8xf32> to vector<2x8xf32>
    %123 = vector.shape_cast %122 : vector<2x8xf32> to vector<2x8x1xf32>
    %124 = vector.broadcast %123 : vector<2x8x1xf32> to vector<2x8x8xf32>
    %125 = arith.subf %121, %124 : vector<2x8x8xf32>
    %126 = math.exp %125 : vector<2x8x8xf32>
    %cst_50 = arith.constant dense<0.000000e+00> : vector<2x8xf32>
    %127 = vector.multi_reduction <add>, %126, %cst_50 [2] : vector<2x8x8xf32> to vector<2x8xf32>
    %128 = vector.shape_cast %127 : vector<2x8xf32> to vector<2x8x1xf32>
    %129 = tpu.reciprocal %128 {approx = true} : vector<2x8x1xf32> -> vector<2x8x1xf32>
    %130 = vector.broadcast %129 : vector<2x8x1xf32> to vector<2x8x8xf32>
    %131 = arith.mulf %126, %130 : vector<2x8x8xf32>
    %132 = vector.extract_strided_slice %48 {offsets = [0, 0, 24], sizes = [2, 8, 8], strides = [1, 1, 1]} : vector<2x8x32xf32> to vector<2x8x8xf32>
    "tpu.trace_start"() <{level = 10 : i32, message = "bqk,bkd->bqd"}> : () -> ()
    %cst_51 = arith.constant dense<0.000000e+00> : vector<2x8x8xf32>
    %133 = tpu.matmul %131, %132, %cst_51 {dimension_numbers = #tpu.dot_dimension_numbers<[2], [1], [1], [2], [0, 0, 0, 1, 1, 2], [0], [0]>} : vector<2x8x8xf32>, vector<2x8x8xf32>, vector<2x8x8xf32> -> vector<2x8x8xf32>
    "tpu.trace_stop"() : () -> ()
    %134 = vector.shape_cast %133 : vector<2x8x8xf32> to vector<16x8xf32>
    %135 = vector.extract_strided_slice %50 {offsets = [24, 0], sizes = [8, 32], strides = [1, 1]} : vector<32x32xf32> to vector<8x32xf32>
    %cst_52 = arith.constant dense<0.000000e+00> : vector<16x32xf32>
    %136 = tpu.matmul %134, %135, %cst_52 {dimension_numbers = #tpu.dot_dimension_numbers<[1], [0], [0], [1], [0, 0, 1, 1], [], []>} : vector<16x8xf32>, vector<8x32xf32>, vector<16x32xf32> -> vector<16x32xf32>
    %137 = arith.addf %115, %136 : vector<16x32xf32>
    %138 = arith.addf %0, %137 : vector<16x32xf32>
    %c0_53 = arith.constant 0 : index
    %c0_54 = arith.constant 0 : index
    %c0_55 = arith.constant 0 : index
    %139 = vector.load %arg4[%c0_53, %c0_54, %c0_55] : memref<2x1x32xf32, #tpu.memory_space<vmem>>, vector<1x1x32xf32>
    %140 = vector.shape_cast %139 : vector<1x1x32xf32> to vector<1x32xf32>
    %141 = arith.mulf %138, %138 : vector<16x32xf32>
    %cst_56 = arith.constant dense<0.000000e+00> : vector<16xf32>
    %142 = vector.multi_reduction <add>, %141, %cst_56 [1] : vector<16x32xf32> to vector<16xf32>
    %143 = vector.shape_cast %142 : vector<16xf32> to vector<16x1xf32>
    %cst_57 = arith.constant 3.200000e+01 : f32
    %144 = vector.broadcast %cst_57 : f32 to vector<16x1xf32>
    %145 = arith.divf %143, %144 : vector<16x1xf32>
    %cst_58 = arith.constant 9.99999997E-7 : f32
    %146 = vector.broadcast %cst_58 : f32 to vector<16x1xf32>
    %147 = arith.addf %145, %146 : vector<16x1xf32>
    %148 = math.rsqrt %147 : vector<16x1xf32>
    %149 = vector.broadcast %148 : vector<16x1xf32> to vector<16x32xf32>
    %150 = arith.mulf %138, %149 : vector<16x32xf32>
    %151 = vector.broadcast %140 : vector<1x32xf32> to vector<16x32xf32>
    %152 = arith.mulf %151, %150 : vector<16x32xf32>
    %cst_59 = arith.constant 1.000000e+00 : f32
    %153 = vector.broadcast %cst_59 : f32 to vector<16x32xf32>
    %154 = arith.addf %17, %153 : vector<16x32xf32>
    %155 = arith.mulf %152, %154 : vector<16x32xf32>
    %156 = arith.addf %155, %18 : vector<16x32xf32>
    %c0_60 = arith.constant 0 : index
    %c0_61 = arith.constant 0 : index
    %c0_62 = arith.constant 0 : index
    %157 = vector.load %arg9[%c0_60, %c0_61, %c0_62] : memref<2x32x64xf32, #tpu.memory_space<vmem>>, vector<1x32x64xf32>
    %158 = vector.shape_cast %157 : vector<1x32x64xf32> to vector<32x64xf32>
    %cst_63 = arith.constant dense<0.000000e+00> : vector<16x64xf32>
    %159 = tpu.matmul %156, %158, %cst_63 {dimension_numbers = #tpu.dot_dimension_numbers<[1], [0], [0], [1], [0, 0, 1, 1], [], []>} : vector<16x32xf32>, vector<32x64xf32>, vector<16x64xf32> -> vector<16x64xf32>
    %c0_64 = arith.constant 0 : index
    %c0_65 = arith.constant 0 : index
    %c0_66 = arith.constant 0 : index
    %160 = vector.load %arg10[%c0_64, %c0_65, %c0_66] : memref<2x32x64xf32, #tpu.memory_space<vmem>>, vector<1x32x64xf32>
    %161 = vector.shape_cast %160 : vector<1x32x64xf32> to vector<32x64xf32>
    %cst_67 = arith.constant dense<0.000000e+00> : vector<16x64xf32>
    %162 = tpu.matmul %156, %161, %cst_67 {dimension_numbers = #tpu.dot_dimension_numbers<[1], [0], [0], [1], [0, 0, 1, 1], [], []>} : vector<16x32xf32>, vector<32x64xf32>, vector<16x64xf32> -> vector<16x64xf32>
    %cst_68 = arith.constant 5.000000e-01 : f32
    %163 = vector.broadcast %cst_68 : f32 to vector<16x64xf32>
    %164 = arith.mulf %163, %162 : vector<16x64xf32>
    %cst_69 = arith.constant 4.471500e-02 : f32
    %165 = vector.broadcast %cst_69 : f32 to vector<16x64xf32>
    %166 = arith.mulf %165, %162 : vector<16x64xf32>
    %167 = arith.mulf %166, %162 : vector<16x64xf32>
    %168 = arith.mulf %167, %162 : vector<16x64xf32>
    %169 = arith.addf %162, %168 : vector<16x64xf32>
    %cst_70 = arith.constant 0.797884583 : f32
    %170 = vector.broadcast %cst_70 : f32 to vector<16x64xf32>
    %171 = arith.mulf %170, %169 : vector<16x64xf32>
    %172 = math.tanh %171 : vector<16x64xf32>
    %cst_71 = arith.constant 1.000000e+00 : f32
    %173 = vector.broadcast %cst_71 : f32 to vector<16x64xf32>
    %174 = arith.addf %173, %172 : vector<16x64xf32>
    %175 = arith.mulf %164, %174 : vector<16x64xf32>
    %176 = arith.mulf %159, %175 : vector<16x64xf32>
    %c0_72 = arith.constant 0 : index
    %c0_73 = arith.constant 0 : index
    %c0_74 = arith.constant 0 : index
    %177 = vector.load %arg11[%c0_72, %c0_73, %c0_74] : memref<2x64x32xf32, #tpu.memory_space<vmem>>, vector<1x64x32xf32>
    %178 = vector.shape_cast %177 : vector<1x64x32xf32> to vector<64x32xf32>
    %cst_75 = arith.constant dense<0.000000e+00> : vector<16x32xf32>
    %179 = tpu.matmul %176, %178, %cst_75 {dimension_numbers = #tpu.dot_dimension_numbers<[1], [0], [0], [1], [0, 0, 1, 1], [], []>} : vector<16x64xf32>, vector<64x32xf32>, vector<16x32xf32> -> vector<16x32xf32>
    %180 = arith.addf %138, %179 : vector<16x32xf32>
    %181 = vector.extract_strided_slice %13 {offsets = [0, 128], sizes = [16, 32], strides = [1, 1]} : vector<16x256xf32> to vector<16x32xf32>
    %182 = vector.extract_strided_slice %13 {offsets = [0, 160], sizes = [16, 32], strides = [1, 1]} : vector<16x256xf32> to vector<16x32xf32>
    %183 = vector.extract_strided_slice %13 {offsets = [0, 192], sizes = [16, 32], strides = [1, 1]} : vector<16x256xf32> to vector<16x32xf32>
    %184 = vector.extract_strided_slice %13 {offsets = [0, 224], sizes = [16, 32], strides = [1, 1]} : vector<16x256xf32> to vector<16x32xf32>
    %c1 = arith.constant 1 : index
    %c0_76 = arith.constant 0 : index
    %c0_77 = arith.constant 0 : index
    %185 = vector.load %arg3[%c1, %c0_76, %c0_77] : memref<2x1x32xf32, #tpu.memory_space<vmem>>, vector<1x1x32xf32>
    %186 = vector.shape_cast %185 : vector<1x1x32xf32> to vector<1x32xf32>
    %187 = arith.mulf %180, %180 : vector<16x32xf32>
    %cst_78 = arith.constant dense<0.000000e+00> : vector<16xf32>
    %188 = vector.multi_reduction <add>, %187, %cst_78 [1] : vector<16x32xf32> to vector<16xf32>
    %189 = vector.shape_cast %188 : vector<16xf32> to vector<16x1xf32>
    %cst_79 = arith.constant 3.200000e+01 : f32
    %190 = vector.broadcast %cst_79 : f32 to vector<16x1xf32>
    %191 = arith.divf %189, %190 : vector<16x1xf32>
    %cst_80 = arith.constant 9.99999997E-7 : f32
    %192 = vector.broadcast %cst_80 : f32 to vector<16x1xf32>
    %193 = arith.addf %191, %192 : vector<16x1xf32>
    %194 = math.rsqrt %193 : vector<16x1xf32>
    %195 = vector.broadcast %194 : vector<16x1xf32> to vector<16x32xf32>
    %196 = arith.mulf %180, %195 : vector<16x32xf32>
    %197 = vector.broadcast %186 : vector<1x32xf32> to vector<16x32xf32>
    %198 = arith.mulf %197, %196 : vector<16x32xf32>
    %cst_81 = arith.constant 1.000000e+00 : f32
    %199 = vector.broadcast %cst_81 : f32 to vector<16x32xf32>
    %200 = arith.addf %181, %199 : vector<16x32xf32>
    %201 = arith.mulf %198, %200 : vector<16x32xf32>
    %202 = arith.addf %201, %182 : vector<16x32xf32>
    %c1_82 = arith.constant 1 : index
    %c0_83 = arith.constant 0 : index
    %c0_84 = arith.constant 0 : index
    %203 = vector.load %arg5[%c1_82, %c0_83, %c0_84] : memref<2x32x32xf32, #tpu.memory_space<vmem>>, vector<1x32x32xf32>
    %204 = vector.shape_cast %203 : vector<1x32x32xf32> to vector<32x32xf32>
    %cst_85 = arith.constant dense<0.000000e+00> : vector<16x32xf32>
    %205 = tpu.matmul %202, %204, %cst_85 {dimension_numbers = #tpu.dot_dimension_numbers<[1], [0], [0], [1], [0, 0, 1, 1], [], []>} : vector<16x32xf32>, vector<32x32xf32>, vector<16x32xf32> -> vector<16x32xf32>
    %206 = vector.shape_cast %205 : vector<16x32xf32> to vector<2x8x32xf32>
    %c1_86 = arith.constant 1 : index
    %c0_87 = arith.constant 0 : index
    %c0_88 = arith.constant 0 : index
    %207 = vector.load %arg6[%c1_86, %c0_87, %c0_88] : memref<2x32x32xf32, #tpu.memory_space<vmem>>, vector<1x32x32xf32>
    %208 = vector.shape_cast %207 : vector<1x32x32xf32> to vector<32x32xf32>
    %cst_89 = arith.constant dense<0.000000e+00> : vector<16x32xf32>
    %209 = tpu.matmul %202, %208, %cst_89 {dimension_numbers = #tpu.dot_dimension_numbers<[1], [0], [0], [1], [0, 0, 1, 1], [], []>} : vector<16x32xf32>, vector<32x32xf32>, vector<16x32xf32> -> vector<16x32xf32>
    %210 = vector.shape_cast %209 : vector<16x32xf32> to vector<2x8x32xf32>
    %c1_90 = arith.constant 1 : index
    %c0_91 = arith.constant 0 : index
    %c0_92 = arith.constant 0 : index
    %211 = vector.load %arg7[%c1_90, %c0_91, %c0_92] : memref<2x32x32xf32, #tpu.memory_space<vmem>>, vector<1x32x32xf32>
    %212 = vector.shape_cast %211 : vector<1x32x32xf32> to vector<32x32xf32>
    %cst_93 = arith.constant dense<0.000000e+00> : vector<16x32xf32>
    %213 = tpu.matmul %202, %212, %cst_93 {dimension_numbers = #tpu.dot_dimension_numbers<[1], [0], [0], [1], [0, 0, 1, 1], [], []>} : vector<16x32xf32>, vector<32x32xf32>, vector<16x32xf32> -> vector<16x32xf32>
    %214 = vector.shape_cast %213 : vector<16x32xf32> to vector<2x8x32xf32>
    %c1_94 = arith.constant 1 : index
    %c0_95 = arith.constant 0 : index
    %c0_96 = arith.constant 0 : index
    %215 = vector.load %arg8[%c1_94, %c0_95, %c0_96] : memref<2x32x32xf32, #tpu.memory_space<vmem>>, vector<1x32x32xf32>
    %216 = vector.shape_cast %215 : vector<1x32x32xf32> to vector<32x32xf32>
    %217 = vector.extract_strided_slice %206 {offsets = [0, 0, 0], sizes = [2, 8, 8], strides = [1, 1, 1]} : vector<2x8x32xf32> to vector<2x8x8xf32>
    %218 = vector.extract_strided_slice %210 {offsets = [0, 0, 0], sizes = [2, 8, 8], strides = [1, 1, 1]} : vector<2x8x32xf32> to vector<2x8x8xf32>
    "tpu.trace_start"() <{level = 10 : i32, message = "bqd,bkd->bqk"}> : () -> ()
    %cst_97 = arith.constant dense<0.000000e+00> : vector<2x8x8xf32>
    %219 = tpu.matmul %217, %218, %cst_97 {dimension_numbers = #tpu.dot_dimension_numbers<[2], [2], [1], [1], [0, 0, 0, 1, 1, 1], [0], [0]>} : vector<2x8x8xf32>, vector<2x8x8xf32>, vector<2x8x8xf32> -> vector<2x8x8xf32>
    "tpu.trace_stop"() : () -> ()
    %220 = vector.extract_strided_slice %14 {offsets = [0, 0, 0, 0], sizes = [1, 2, 8, 8], strides = [1, 1, 1, 1]} : vector<4x2x8x8xf32> to vector<1x2x8x8xf32>
    %221 = vector.shape_cast %220 : vector<1x2x8x8xf32> to vector<2x8x8xf32>
    %222 = arith.addf %219, %221 : vector<2x8x8xf32>
    %cst_98 = arith.constant dense<0xFF800000> : vector<2x8xf32>
    %223 = vector.multi_reduction <maximumf>, %222, %cst_98 [2] : vector<2x8x8xf32> to vector<2x8xf32>
    %224 = vector.shape_cast %223 : vector<2x8xf32> to vector<2x8x1xf32>
    %225 = vector.broadcast %224 : vector<2x8x1xf32> to vector<2x8x8xf32>
    %226 = arith.subf %222, %225 : vector<2x8x8xf32>
    %227 = math.exp %226 : vector<2x8x8xf32>
    %cst_99 = arith.constant dense<0.000000e+00> : vector<2x8xf32>
    %228 = vector.multi_reduction <add>, %227, %cst_99 [2] : vector<2x8x8xf32> to vector<2x8xf32>
    %229 = vector.shape_cast %228 : vector<2x8xf32> to vector<2x8x1xf32>
    %230 = tpu.reciprocal %229 {approx = true} : vector<2x8x1xf32> -> vector<2x8x1xf32>
    %231 = vector.broadcast %230 : vector<2x8x1xf32> to vector<2x8x8xf32>
    %232 = arith.mulf %227, %231 : vector<2x8x8xf32>
    %233 = vector.extract_strided_slice %214 {offsets = [0, 0, 0], sizes = [2, 8, 8], strides = [1, 1, 1]} : vector<2x8x32xf32> to vector<2x8x8xf32>
    "tpu.trace_start"() <{level = 10 : i32, message = "bqk,bkd->bqd"}> : () -> ()
    %cst_100 = arith.constant dense<0.000000e+00> : vector<2x8x8xf32>
    %234 = tpu.matmul %232, %233, %cst_100 {dimension_numbers = #tpu.dot_dimension_numbers<[2], [1], [1], [2], [0, 0, 0, 1, 1, 2], [0], [0]>} : vector<2x8x8xf32>, vector<2x8x8xf32>, vector<2x8x8xf32> -> vector<2x8x8xf32>
    "tpu.trace_stop"() : () -> ()
    %235 = vector.shape_cast %234 : vector<2x8x8xf32> to vector<16x8xf32>
    %236 = vector.extract_strided_slice %216 {offsets = [0, 0], sizes = [8, 32], strides = [1, 1]} : vector<32x32xf32> to vector<8x32xf32>
    %cst_101 = arith.constant dense<0.000000e+00> : vector<16x32xf32>
    %237 = tpu.matmul %235, %236, %cst_101 {dimension_numbers = #tpu.dot_dimension_numbers<[1], [0], [0], [1], [0, 0, 1, 1], [], []>} : vector<16x8xf32>, vector<8x32xf32>, vector<16x32xf32> -> vector<16x32xf32>
    %238 = vector.extract_strided_slice %206 {offsets = [0, 0, 8], sizes = [2, 8, 8], strides = [1, 1, 1]} : vector<2x8x32xf32> to vector<2x8x8xf32>
    %239 = vector.extract_strided_slice %210 {offsets = [0, 0, 8], sizes = [2, 8, 8], strides = [1, 1, 1]} : vector<2x8x32xf32> to vector<2x8x8xf32>
    "tpu.trace_start"() <{level = 10 : i32, message = "bqd,bkd->bqk"}> : () -> ()
    %cst_102 = arith.constant dense<0.000000e+00> : vector<2x8x8xf32>
    %240 = tpu.matmul %238, %239, %cst_102 {dimension_numbers = #tpu.dot_dimension_numbers<[2], [2], [1], [1], [0, 0, 0, 1, 1, 1], [0], [0]>} : vector<2x8x8xf32>, vector<2x8x8xf32>, vector<2x8x8xf32> -> vector<2x8x8xf32>
    "tpu.trace_stop"() : () -> ()
    %241 = vector.extract_strided_slice %14 {offsets = [1, 0, 0, 0], sizes = [1, 2, 8, 8], strides = [1, 1, 1, 1]} : vector<4x2x8x8xf32> to vector<1x2x8x8xf32>
    %242 = vector.shape_cast %241 : vector<1x2x8x8xf32> to vector<2x8x8xf32>
    %243 = arith.addf %240, %242 : vector<2x8x8xf32>
    %cst_103 = arith.constant dense<0xFF800000> : vector<2x8xf32>
    %244 = vector.multi_reduction <maximumf>, %243, %cst_103 [2] : vector<2x8x8xf32> to vector<2x8xf32>
    %245 = vector.shape_cast %244 : vector<2x8xf32> to vector<2x8x1xf32>
    %246 = vector.broadcast %245 : vector<2x8x1xf32> to vector<2x8x8xf32>
    %247 = arith.subf %243, %246 : vector<2x8x8xf32>
    %248 = math.exp %247 : vector<2x8x8xf32>
    %cst_104 = arith.constant dense<0.000000e+00> : vector<2x8xf32>
    %249 = vector.multi_reduction <add>, %248, %cst_104 [2] : vector<2x8x8xf32> to vector<2x8xf32>
    %250 = vector.shape_cast %249 : vector<2x8xf32> to vector<2x8x1xf32>
    %251 = tpu.reciprocal %250 {approx = true} : vector<2x8x1xf32> -> vector<2x8x1xf32>
    %252 = vector.broadcast %251 : vector<2x8x1xf32> to vector<2x8x8xf32>
    %253 = arith.mulf %248, %252 : vector<2x8x8xf32>
    %254 = vector.extract_strided_slice %214 {offsets = [0, 0, 8], sizes = [2, 8, 8], strides = [1, 1, 1]} : vector<2x8x32xf32> to vector<2x8x8xf32>
    "tpu.trace_start"() <{level = 10 : i32, message = "bqk,bkd->bqd"}> : () -> ()
    %cst_105 = arith.constant dense<0.000000e+00> : vector<2x8x8xf32>
    %255 = tpu.matmul %253, %254, %cst_105 {dimension_numbers = #tpu.dot_dimension_numbers<[2], [1], [1], [2], [0, 0, 0, 1, 1, 2], [0], [0]>} : vector<2x8x8xf32>, vector<2x8x8xf32>, vector<2x8x8xf32> -> vector<2x8x8xf32>
    "tpu.trace_stop"() : () -> ()
    %256 = vector.shape_cast %255 : vector<2x8x8xf32> to vector<16x8xf32>
    %257 = vector.extract_strided_slice %216 {offsets = [8, 0], sizes = [8, 32], strides = [1, 1]} : vector<32x32xf32> to vector<8x32xf32>
    %cst_106 = arith.constant dense<0.000000e+00> : vector<16x32xf32>
    %258 = tpu.matmul %256, %257, %cst_106 {dimension_numbers = #tpu.dot_dimension_numbers<[1], [0], [0], [1], [0, 0, 1, 1], [], []>} : vector<16x8xf32>, vector<8x32xf32>, vector<16x32xf32> -> vector<16x32xf32>
    %259 = arith.addf %237, %258 : vector<16x32xf32>
    %260 = vector.extract_strided_slice %206 {offsets = [0, 0, 16], sizes = [2, 8, 8], strides = [1, 1, 1]} : vector<2x8x32xf32> to vector<2x8x8xf32>
    %261 = vector.extract_strided_slice %210 {offsets = [0, 0, 16], sizes = [2, 8, 8], strides = [1, 1, 1]} : vector<2x8x32xf32> to vector<2x8x8xf32>
    "tpu.trace_start"() <{level = 10 : i32, message = "bqd,bkd->bqk"}> : () -> ()
    %cst_107 = arith.constant dense<0.000000e+00> : vector<2x8x8xf32>
    %262 = tpu.matmul %260, %261, %cst_107 {dimension_numbers = #tpu.dot_dimension_numbers<[2], [2], [1], [1], [0, 0, 0, 1, 1, 1], [0], [0]>} : vector<2x8x8xf32>, vector<2x8x8xf32>, vector<2x8x8xf32> -> vector<2x8x8xf32>
    "tpu.trace_stop"() : () -> ()
    %263 = vector.extract_strided_slice %14 {offsets = [2, 0, 0, 0], sizes = [1, 2, 8, 8], strides = [1, 1, 1, 1]} : vector<4x2x8x8xf32> to vector<1x2x8x8xf32>
    %264 = vector.shape_cast %263 : vector<1x2x8x8xf32> to vector<2x8x8xf32>
    %265 = arith.addf %262, %264 : vector<2x8x8xf32>
    %cst_108 = arith.constant dense<0xFF800000> : vector<2x8xf32>
    %266 = vector.multi_reduction <maximumf>, %265, %cst_108 [2] : vector<2x8x8xf32> to vector<2x8xf32>
    %267 = vector.shape_cast %266 : vector<2x8xf32> to vector<2x8x1xf32>
    %268 = vector.broadcast %267 : vector<2x8x1xf32> to vector<2x8x8xf32>
    %269 = arith.subf %265, %268 : vector<2x8x8xf32>
    %270 = math.exp %269 : vector<2x8x8xf32>
    %cst_109 = arith.constant dense<0.000000e+00> : vector<2x8xf32>
    %271 = vector.multi_reduction <add>, %270, %cst_109 [2] : vector<2x8x8xf32> to vector<2x8xf32>
    %272 = vector.shape_cast %271 : vector<2x8xf32> to vector<2x8x1xf32>
    %273 = tpu.reciprocal %272 {approx = true} : vector<2x8x1xf32> -> vector<2x8x1xf32>
    %274 = vector.broadcast %273 : vector<2x8x1xf32> to vector<2x8x8xf32>
    %275 = arith.mulf %270, %274 : vector<2x8x8xf32>
    %276 = vector.extract_strided_slice %214 {offsets = [0, 0, 16], sizes = [2, 8, 8], strides = [1, 1, 1]} : vector<2x8x32xf32> to vector<2x8x8xf32>
    "tpu.trace_start"() <{level = 10 : i32, message = "bqk,bkd->bqd"}> : () -> ()
    %cst_110 = arith.constant dense<0.000000e+00> : vector<2x8x8xf32>
    %277 = tpu.matmul %275, %276, %cst_110 {dimension_numbers = #tpu.dot_dimension_numbers<[2], [1], [1], [2], [0, 0, 0, 1, 1, 2], [0], [0]>} : vector<2x8x8xf32>, vector<2x8x8xf32>, vector<2x8x8xf32> -> vector<2x8x8xf32>
    "tpu.trace_stop"() : () -> ()
    %278 = vector.shape_cast %277 : vector<2x8x8xf32> to vector<16x8xf32>
    %279 = vector.extract_strided_slice %216 {offsets = [16, 0], sizes = [8, 32], strides = [1, 1]} : vector<32x32xf32> to vector<8x32xf32>
    %cst_111 = arith.constant dense<0.000000e+00> : vector<16x32xf32>
    %280 = tpu.matmul %278, %279, %cst_111 {dimension_numbers = #tpu.dot_dimension_numbers<[1], [0], [0], [1], [0, 0, 1, 1], [], []>} : vector<16x8xf32>, vector<8x32xf32>, vector<16x32xf32> -> vector<16x32xf32>
    %281 = arith.addf %259, %280 : vector<16x32xf32>
    %282 = vector.extract_strided_slice %206 {offsets = [0, 0, 24], sizes = [2, 8, 8], strides = [1, 1, 1]} : vector<2x8x32xf32> to vector<2x8x8xf32>
    %283 = vector.extract_strided_slice %210 {offsets = [0, 0, 24], sizes = [2, 8, 8], strides = [1, 1, 1]} : vector<2x8x32xf32> to vector<2x8x8xf32>
    "tpu.trace_start"() <{level = 10 : i32, message = "bqd,bkd->bqk"}> : () -> ()
    %cst_112 = arith.constant dense<0.000000e+00> : vector<2x8x8xf32>
    %284 = tpu.matmul %282, %283, %cst_112 {dimension_numbers = #tpu.dot_dimension_numbers<[2], [2], [1], [1], [0, 0, 0, 1, 1, 1], [0], [0]>} : vector<2x8x8xf32>, vector<2x8x8xf32>, vector<2x8x8xf32> -> vector<2x8x8xf32>
    "tpu.trace_stop"() : () -> ()
    %285 = vector.extract_strided_slice %14 {offsets = [3, 0, 0, 0], sizes = [1, 2, 8, 8], strides = [1, 1, 1, 1]} : vector<4x2x8x8xf32> to vector<1x2x8x8xf32>
    %286 = vector.shape_cast %285 : vector<1x2x8x8xf32> to vector<2x8x8xf32>
    %287 = arith.addf %284, %286 : vector<2x8x8xf32>
    %cst_113 = arith.constant dense<0xFF800000> : vector<2x8xf32>
    %288 = vector.multi_reduction <maximumf>, %287, %cst_113 [2] : vector<2x8x8xf32> to vector<2x8xf32>
    %289 = vector.shape_cast %288 : vector<2x8xf32> to vector<2x8x1xf32>
    %290 = vector.broadcast %289 : vector<2x8x1xf32> to vector<2x8x8xf32>
    %291 = arith.subf %287, %290 : vector<2x8x8xf32>
    %292 = math.exp %291 : vector<2x8x8xf32>
    %cst_114 = arith.constant dense<0.000000e+00> : vector<2x8xf32>
    %293 = vector.multi_reduction <add>, %292, %cst_114 [2] : vector<2x8x8xf32> to vector<2x8xf32>
    %294 = vector.shape_cast %293 : vector<2x8xf32> to vector<2x8x1xf32>
    %295 = tpu.reciprocal %294 {approx = true} : vector<2x8x1xf32> -> vector<2x8x1xf32>
    %296 = vector.broadcast %295 : vector<2x8x1xf32> to vector<2x8x8xf32>
    %297 = arith.mulf %292, %296 : vector<2x8x8xf32>
    %298 = vector.extract_strided_slice %214 {offsets = [0, 0, 24], sizes = [2, 8, 8], strides = [1, 1, 1]} : vector<2x8x32xf32> to vector<2x8x8xf32>
    "tpu.trace_start"() <{level = 10 : i32, message = "bqk,bkd->bqd"}> : () -> ()
    %cst_115 = arith.constant dense<0.000000e+00> : vector<2x8x8xf32>
    %299 = tpu.matmul %297, %298, %cst_115 {dimension_numbers = #tpu.dot_dimension_numbers<[2], [1], [1], [2], [0, 0, 0, 1, 1, 2], [0], [0]>} : vector<2x8x8xf32>, vector<2x8x8xf32>, vector<2x8x8xf32> -> vector<2x8x8xf32>
    "tpu.trace_stop"() : () -> ()
    %300 = vector.shape_cast %299 : vector<2x8x8xf32> to vector<16x8xf32>
    %301 = vector.extract_strided_slice %216 {offsets = [24, 0], sizes = [8, 32], strides = [1, 1]} : vector<32x32xf32> to vector<8x32xf32>
    %cst_116 = arith.constant dense<0.000000e+00> : vector<16x32xf32>
    %302 = tpu.matmul %300, %301, %cst_116 {dimension_numbers = #tpu.dot_dimension_numbers<[1], [0], [0], [1], [0, 0, 1, 1], [], []>} : vector<16x8xf32>, vector<8x32xf32>, vector<16x32xf32> -> vector<16x32xf32>
    %303 = arith.addf %281, %302 : vector<16x32xf32>
    %304 = arith.addf %180, %303 : vector<16x32xf32>
    %c1_117 = arith.constant 1 : index
    %c0_118 = arith.constant 0 : index
    %c0_119 = arith.constant 0 : index
    %305 = vector.load %arg4[%c1_117, %c0_118, %c0_119] : memref<2x1x32xf32, #tpu.memory_space<vmem>>, vector<1x1x32xf32>
    %306 = vector.shape_cast %305 : vector<1x1x32xf32> to vector<1x32xf32>
    %307 = arith.mulf %304, %304 : vector<16x32xf32>
    %cst_120 = arith.constant dense<0.000000e+00> : vector<16xf32>
    %308 = vector.multi_reduction <add>, %307, %cst_120 [1] : vector<16x32xf32> to vector<16xf32>
    %309 = vector.shape_cast %308 : vector<16xf32> to vector<16x1xf32>
    %cst_121 = arith.constant 3.200000e+01 : f32
    %310 = vector.broadcast %cst_121 : f32 to vector<16x1xf32>
    %311 = arith.divf %309, %310 : vector<16x1xf32>
    %cst_122 = arith.constant 9.99999997E-7 : f32
    %312 = vector.broadcast %cst_122 : f32 to vector<16x1xf32>
    %313 = arith.addf %311, %312 : vector<16x1xf32>
    %314 = math.rsqrt %313 : vector<16x1xf32>
    %315 = vector.broadcast %314 : vector<16x1xf32> to vector<16x32xf32>
    %316 = arith.mulf %304, %315 : vector<16x32xf32>
    %317 = vector.broadcast %306 : vector<1x32xf32> to vector<16x32xf32>
    %318 = arith.mulf %317, %316 : vector<16x32xf32>
    %cst_123 = arith.constant 1.000000e+00 : f32
    %319 = vector.broadcast %cst_123 : f32 to vector<16x32xf32>
    %320 = arith.addf %183, %319 : vector<16x32xf32>
    %321 = arith.mulf %318, %320 : vector<16x32xf32>
    %322 = arith.addf %321, %184 : vector<16x32xf32>
    %c1_124 = arith.constant 1 : index
    %c0_125 = arith.constant 0 : index
    %c0_126 = arith.constant 0 : index
    %323 = vector.load %arg9[%c1_124, %c0_125, %c0_126] : memref<2x32x64xf32, #tpu.memory_space<vmem>>, vector<1x32x64xf32>
    %324 = vector.shape_cast %323 : vector<1x32x64xf32> to vector<32x64xf32>
    %cst_127 = arith.constant dense<0.000000e+00> : vector<16x64xf32>
    %325 = tpu.matmul %322, %324, %cst_127 {dimension_numbers = #tpu.dot_dimension_numbers<[1], [0], [0], [1], [0, 0, 1, 1], [], []>} : vector<16x32xf32>, vector<32x64xf32>, vector<16x64xf32> -> vector<16x64xf32>
    %c1_128 = arith.constant 1 : index
    %c0_129 = arith.constant 0 : index
    %c0_130 = arith.constant 0 : index
    %326 = vector.load %arg10[%c1_128, %c0_129, %c0_130] : memref<2x32x64xf32, #tpu.memory_space<vmem>>, vector<1x32x64xf32>
    %327 = vector.shape_cast %326 : vector<1x32x64xf32> to vector<32x64xf32>
    %cst_131 = arith.constant dense<0.000000e+00> : vector<16x64xf32>
    %328 = tpu.matmul %322, %327, %cst_131 {dimension_numbers = #tpu.dot_dimension_numbers<[1], [0], [0], [1], [0, 0, 1, 1], [], []>} : vector<16x32xf32>, vector<32x64xf32>, vector<16x64xf32> -> vector<16x64xf32>
    %cst_132 = arith.constant 5.000000e-01 : f32
    %329 = vector.broadcast %cst_132 : f32 to vector<16x64xf32>
    %330 = arith.mulf %329, %328 : vector<16x64xf32>
    %cst_133 = arith.constant 4.471500e-02 : f32
    %331 = vector.broadcast %cst_133 : f32 to vector<16x64xf32>
    %332 = arith.mulf %331, %328 : vector<16x64xf32>
    %333 = arith.mulf %332, %328 : vector<16x64xf32>
    %334 = arith.mulf %333, %328 : vector<16x64xf32>
    %335 = arith.addf %328, %334 : vector<16x64xf32>
    %cst_134 = arith.constant 0.797884583 : f32
    %336 = vector.broadcast %cst_134 : f32 to vector<16x64xf32>
    %337 = arith.mulf %336, %335 : vector<16x64xf32>
    %338 = math.tanh %337 : vector<16x64xf32>
    %cst_135 = arith.constant 1.000000e+00 : f32
    %339 = vector.broadcast %cst_135 : f32 to vector<16x64xf32>
    %340 = arith.addf %339, %338 : vector<16x64xf32>
    %341 = arith.mulf %330, %340 : vector<16x64xf32>
    %342 = arith.mulf %325, %341 : vector<16x64xf32>
    %c1_136 = arith.constant 1 : index
    %c0_137 = arith.constant 0 : index
    %c0_138 = arith.constant 0 : index
    %343 = vector.load %arg11[%c1_136, %c0_137, %c0_138] : memref<2x64x32xf32, #tpu.memory_space<vmem>>, vector<1x64x32xf32>
    %344 = vector.shape_cast %343 : vector<1x64x32xf32> to vector<64x32xf32>
    %cst_139 = arith.constant dense<0.000000e+00> : vector<16x32xf32>
    %345 = tpu.matmul %342, %344, %cst_139 {dimension_numbers = #tpu.dot_dimension_numbers<[1], [0], [0], [1], [0, 0, 1, 1], [], []>} : vector<16x64xf32>, vector<64x32xf32>, vector<16x32xf32> -> vector<16x32xf32>
    %346 = arith.addf %304, %345 : vector<16x32xf32>
    %c0_140 = arith.constant 0 : index
    %c0_141 = arith.constant 0 : index
    %347 = vector.load %arg14[%c0_140, %c0_141] : memref<1x32xf32, #tpu.memory_space<vmem>>, vector<1x32xf32>
    %348 = arith.mulf %346, %346 : vector<16x32xf32>
    %cst_142 = arith.constant dense<0.000000e+00> : vector<16xf32>
    %349 = vector.multi_reduction <add>, %348, %cst_142 [1] : vector<16x32xf32> to vector<16xf32>
    %350 = vector.shape_cast %349 : vector<16xf32> to vector<16x1xf32>
    %cst_143 = arith.constant 3.200000e+01 : f32
    %351 = vector.broadcast %cst_143 : f32 to vector<16x1xf32>
    %352 = arith.divf %350, %351 : vector<16x1xf32>
    %cst_144 = arith.constant 9.99999997E-7 : f32
    %353 = vector.broadcast %cst_144 : f32 to vector<16x1xf32>
    %354 = arith.addf %352, %353 : vector<16x1xf32>
    %355 = math.rsqrt %354 : vector<16x1xf32>
    %356 = vector.broadcast %355 : vector<16x1xf32> to vector<16x32xf32>
    %357 = arith.mulf %346, %356 : vector<16x32xf32>
    %358 = vector.broadcast %347 : vector<1x32xf32> to vector<16x32xf32>
    %359 = arith.mulf %358, %357 : vector<16x32xf32>
    %c0_145 = arith.constant 0 : index
    %c0_146 = arith.constant 0 : index
    %360 = vector.load %arg15[%c0_145, %c0_146] : memref<16x32xf32, #tpu.memory_space<vmem>>, vector<16x32xf32>
    tpu.vector_store %arg15[%c0_145, %c0_146], %359 {strides = array<i32>} : memref<16x32xf32, #tpu.memory_space<vmem>>, vector<16x32xf32>,
    return
  }
}

</mosaic_0001>

<llo_original>
// kernel: transformer_stack.1
$region0: #{transformer_stack.1}
  #allocation0 [shape = 'u32[]', space=smem, size = 0x4, offset = 0x4, fixed_abs, tag = 'smem constant byte address 0x4 - core index']
  #allocation1 [shape = 'u32[144,128]{1,0:T(1,128)}', space=vmem, size = 0x12000, scoped, tag = 'internal scratch']
  %s0 = inlined_call_operand.hbm [shape: f32[16,32], index: 0, kind: input, shape index: {}]
  %s1 = inlined_call_operand.vmem [shape: f32[4,2,8,8], index: 1, kind: input, shape index: {}]
  %s2 = inlined_call_operand.hbm [shape: f32[2,16], index: 2, kind: input, shape index: {}]
  %s3 = inlined_call_operand.hbm [shape: f32[2,1,32], index: 3, kind: input, shape index: {}]
  %s4 = inlined_call_operand.hbm [shape: f32[2,1,32], index: 4, kind: input, shape index: {}]
  %s5 = inlined_call_operand.vmem [shape: f32[2,32,32], index: 5, kind: input, shape index: {}]
  %s6 = inlined_call_operand.vmem [shape: f32[2,32,32], index: 6, kind: input, shape index: {}]
  %s7 = inlined_call_operand.vmem [shape: f32[2,32,32], index: 7, kind: input, shape index: {}]
  %s8 = inlined_call_operand.vmem [shape: f32[2,32,32], index: 8, kind: input, shape index: {}]
  %s9 = inlined_call_operand.hbm [shape: f32[2,32,64], index: 9, kind: input, shape index: {}]
  %s10 = inlined_call_operand.hbm [shape: f32[2,32,64], index: 10, kind: input, shape index: {}]
  %s11 = inlined_call_operand.vmem [shape: f32[2,64,32], index: 11, kind: input, shape index: {}]
  %s12 = inlined_call_operand.hbm [shape: f32[16,256], index: 12, kind: input, shape index: {}]
  %s13 = inlined_call_operand.hbm [shape: f32[1,256], index: 13, kind: input, shape index: {}]
  %s14 = inlined_call_operand.vmem [shape: f32[1,32], index: 14, kind: input, shape index: {}]
  %s15 = inlined_call_operand.hbm [shape: f32[16,32], index: 15, kind: output, shape index: {}]
  %s16 = sld [smem:[#allocation0]]
  $region102: #{transformer_stack.1} parent=0
    _
  %s18 = ssub.s32 1, %s16
  %s19 = scalar_select 0, %s18, %s16
  $region1: #{transformer_stack.1} parent=0
    #allocation2 [shape = 'u8[8192]{0}', space=vmem, size = 0x2000, scoped, tag = 'input window, operand 0, single buffered']
    #allocation3 [shape = 's32[1]{0}', space=sflag, size = 0x4, scoped, tag = 'scoped memory for transformer_stack.1']
    #allocation4 [shape = 's32[1]{0}', space=sflag, size = 0x4, scoped, tag = 'scoped memory for transformer_stack.1']
    #allocation5 [shape = 'u8[1024]{0}', space=vmem, size = 0x400, scoped, tag = 'input window, operand 2, single buffered']
    #allocation6 [shape = 's32[1]{0}', space=sflag, size = 0x4, scoped, tag = 'scoped memory for transformer_stack.1']
    #allocation7 [shape = 'u8[1024]{0}', space=vmem, size = 0x400, scoped, tag = 'input window, operand 3, single buffered']
    #allocation8 [shape = 'u8[1024]{0}', space=vmem, size = 0x400, scoped, tag = 'input window, operand 4, single buffered']
    #allocation9 [shape = 's32[1]{0}', space=sflag, size = 0x4, scoped, tag = 'scoped memory for transformer_stack.1']
    #allocation10 [shape = 'u8[32768]{0}', space=vmem, size = 0x8000, scoped, tag = 'input window, operand 9, single buffered']
    #allocation11 [shape = 'u8[32768]{0}', space=vmem, size = 0x8000, scoped, tag = 'input window, operand 10, single buffered']
    #allocation12 [shape = 's32[1]{0}', space=sflag, size = 0x4, scoped, tag = 'scoped memory for transformer_stack.1']
    #allocation13 [shape = 'u8[16384]{0}', space=vmem, size = 0x4000, scoped, tag = 'input window, operand 12, single buffered']
    #allocation14 [shape = 'u8[1024]{0}', space=vmem, size = 0x400, scoped, tag = 'input window, operand 13, single buffered']
    #allocation15 [shape = 's32[1]{0}', space=sflag, size = 0x4, scoped, tag = 'scoped memory for transformer_stack.1']
    #allocation16 [shape = 'u8[8192]{0}', space=vmem, size = 0x2000, scoped, tag = 'output window, operand 0, single buffered']
    %20 = vsyncpa [#allocation3], 0
    %21 = vsyncpa [#allocation6], 0
    %22 = vsyncpa [#allocation9], 0
    %23 = vsyncpa [#allocation12], 0
    %24 = vsyncpa [#allocation15], 0
    %25 = vsyncpa [#allocation4], 0
    // Predicated region
    $region2: #{transformer_stack.1} parent=1 // pred_check
      _
    $region3: #{transformer_stack.1} parent=1 // pred_check_branch
      %27 = sbr.rel (0) target = $region5
    $region4: #{transformer_stack.1} parent=1 // pred_region
      %s29 = ssub.s32 256, 256
      %30 = vsyncadd [#allocation3], %s29
      %s31 = sshll.u32 [#allocation2], 4
      %s32 = int_to_ptr.vmem [resolvable:$true] %s31
      %37 = dma.hbm_to_vmem [thread:$0]  %s0, 256, %s32, [#allocation3], 128, 128, 8
    $region5: #{transformer_stack.1} parent=1 // pred_fallthru
      _
    // Predicated region
    $region6: #{transformer_stack.1} parent=1 // pred_check
      _
    $region7: #{transformer_stack.1} parent=1 // pred_check_branch
      %39 = sbr.rel (0) target = $region9
    $region8: #{transformer_stack.1} parent=1 // pred_region
      _
    $region9: #{transformer_stack.1} parent=1 // pred_fallthru
      _
    // Predicated region
    $region10: #{transformer_stack.1} parent=1 // pred_check
      _
    $region11: #{transformer_stack.1} parent=1 // pred_check_branch
      %41 = sbr.rel (0) target = $region13
    $region12: #{transformer_stack.1} parent=1 // pred_region
      %s43 = ssub.s32 32, 32
      %44 = vsyncadd [#allocation6], %s43
      %s46 = sshll.u32 [#allocation5], 4
      %s47 = int_to_ptr.vmem [resolvable:$true] %s46
      %49 = dma.hbm_to_vmem [thread:$0]  %s2, 32, %s47, [#allocation6]
    $region13: #{transformer_stack.1} parent=1 // pred_fallthru
      _
    // Predicated region
    $region14: #{transformer_stack.1} parent=1 // pred_check
      _
    $region15: #{transformer_stack.1} parent=1 // pred_check_branch
      %51 = sbr.rel (0) target = $region17
    $region16: #{transformer_stack.1} parent=1 // pred_region
      %s53 = ssub.s32 32, 32
      %54 = vsyncadd [#allocation6], %s53
      %s55 = sshll.u32 [#allocation7], 4
      %s56 = int_to_ptr.vmem [resolvable:$true] %s55
      %61 = dma.hbm_to_vmem [thread:$0]  %s3, 32, %s56, [#allocation6], 16, 16, 1
    $region17: #{transformer_stack.1} parent=1 // pred_fallthru
      _
    // Predicated region
    $region18: #{transformer_stack.1} parent=1 // pred_check
      _
    $region19: #{transformer_stack.1} parent=1 // pred_check_branch
      %63 = sbr.rel (0) target = $region21
    $region20: #{transformer_stack.1} parent=1 // pred_region
      %s65 = ssub.s32 32, 32
      %66 = vsyncadd [#allocation9], %s65
      %s67 = sshll.u32 [#allocation8], 4
      %s68 = int_to_ptr.vmem [resolvable:$true] %s67
      %73 = dma.hbm_to_vmem [thread:$0]  %s4, 32, %s68, [#allocation9], 16, 16, 1
    $region21: #{transformer_stack.1} parent=1 // pred_fallthru
      _
    // Predicated region
    $region22: #{transformer_stack.1} parent=1 // pred_check
      _
    $region23: #{transformer_stack.1} parent=1 // pred_check_branch
      %75 = sbr.rel (0) target = $region25
    $region24: #{transformer_stack.1} parent=1 // pred_region
      _
    $region25: #{transformer_stack.1} parent=1 // pred_fallthru
      _
    // Predicated region
    $region26: #{transformer_stack.1} parent=1 // pred_check
      _
    $region27: #{transformer_stack.1} parent=1 // pred_check_branch
      %77 = sbr.rel (0) target = $region29
    $region28: #{transformer_stack.1} parent=1 // pred_region
      _
    $region29: #{transformer_stack.1} parent=1 // pred_fallthru
      _
    // Predicated region
    $region30: #{transformer_stack.1} parent=1 // pred_check
      _
    $region31: #{transformer_stack.1} parent=1 // pred_check_branch
      %79 = sbr.rel (0) target = $region33
    $region32: #{transformer_stack.1} parent=1 // pred_region
      _
    $region33: #{transformer_stack.1} parent=1 // pred_fallthru
      _
    // Predicated region
    $region34: #{transformer_stack.1} parent=1 // pred_check
      _
    $region35: #{transformer_stack.1} parent=1 // pred_check_branch
      %81 = sbr.rel (0) target = $region37
    $region36: #{transformer_stack.1} parent=1 // pred_region
      _
    $region37: #{transformer_stack.1} parent=1 // pred_fallthru
      _
    // Predicated region
    $region38: #{transformer_stack.1} parent=1 // pred_check
      _
    $region39: #{transformer_stack.1} parent=1 // pred_check_branch
      %83 = sbr.rel (0) target = $region41
    $region40: #{transformer_stack.1} parent=1 // pred_region
      %s85 = ssub.s32 1024, 1024
      %86 = vsyncadd [#allocation9], %s85
      %s87 = sshll.u32 [#allocation10], 4
      %s88 = int_to_ptr.vmem [resolvable:$true] %s87
      %93 = dma.hbm_to_vmem [thread:$0]  %s9, 1024, %s88, [#allocation9], 128, 128, 8
    $region41: #{transformer_stack.1} parent=1 // pred_fallthru
      _
    // Predicated region
    $region42: #{transformer_stack.1} parent=1 // pred_check
      _
    $region43: #{transformer_stack.1} parent=1 // pred_check_branch
      %95 = sbr.rel (0) target = $region45
    $region44: #{transformer_stack.1} parent=1 // pred_region
      %s97 = ssub.s32 1024, 1024
      %98 = vsyncadd [#allocation12], %s97
      %s99 = sshll.u32 [#allocation11], 4
      %s100 = int_to_ptr.vmem [resolvable:$true] %s99
      %105 = dma.hbm_to_vmem [thread:$0]  %s10, 1024, %s100, [#allocation12], 128, 128, 8
    $region45: #{transformer_stack.1} parent=1 // pred_fallthru
      _
    // Predicated region
    $region46: #{transformer_stack.1} parent=1 // pred_check
      _
    $region47: #{transformer_stack.1} parent=1 // pred_check_branch
      %107 = sbr.rel (0) target = $region49
    $region48: #{transformer_stack.1} parent=1 // pred_region
      _
    $region49: #{transformer_stack.1} parent=1 // pred_fallthru
      _
    // Predicated region
    $region50: #{transformer_stack.1} parent=1 // pred_check
      _
    $region51: #{transformer_stack.1} parent=1 // pred_check_branch
      %109 = sbr.rel (0) target = $region53
    $region52: #{transformer_stack.1} parent=1 // pred_region
      %s111 = ssub.s32 512, 512
      %112 = vsyncadd [#allocation12], %s111
      %s113 = sshll.u32 [#allocation13], 4
      %s114 = int_to_ptr.vmem [resolvable:$true] %s113
      %119 = dma.hbm_to_vmem [thread:$0]  %s12, 512, %s114, [#allocation12], 256, 256, 16
    $region53: #{transformer_stack.1} parent=1 // pred_fallthru
      _
    // Predicated region
    $region54: #{transformer_stack.1} parent=1 // pred_check
      _
    $region55: #{transformer_stack.1} parent=1 // pred_check_branch
      %121 = sbr.rel (0) target = $region57
    $region56: #{transformer_stack.1} parent=1 // pred_region
      %s123 = ssub.s32 32, 32
      %124 = vsyncadd [#allocation15], %s123
      %s126 = sshll.u32 [#allocation14], 4
      %s127 = int_to_ptr.vmem [resolvable:$true] %s126
      %129 = dma.hbm_to_vmem [thread:$0]  %s13, 32, %s127, [#allocation15]
    $region57: #{transformer_stack.1} parent=1 // pred_fallthru
      _
    // Predicated region
    $region58: #{transformer_stack.1} parent=1 // pred_check
      _
    $region59: #{transformer_stack.1} parent=1 // pred_check_branch
      %131 = sbr.rel (0) target = $region61
    $region60: #{transformer_stack.1} parent=1 // pred_region
      _
    $region61: #{transformer_stack.1} parent=1 // pred_fallthru
      _
    // Predicated region
    $region62: #{transformer_stack.1} parent=1 // pred_check
      _
    $region63: #{transformer_stack.1} parent=1 // pred_check_branch
      %133 = sbr.rel (0) target = $region65
    $region64: #{transformer_stack.1} parent=1 // pred_region
      %134 = dma.done [#allocation3], 256
    $region65: #{transformer_stack.1} parent=1 // pred_fallthru
      _
    // Predicated region
    $region66: #{transformer_stack.1} parent=1 // pred_check
      _
    $region67: #{transformer_stack.1} parent=1 // pred_check_branch
      %136 = sbr.rel (0) target = $region69
    $region68: #{transformer_stack.1} parent=1 // pred_region
      %137 = dma.done [#allocation6], 32
    $region69: #{transformer_stack.1} parent=1 // pred_fallthru
      _
    // Predicated region
    $region70: #{transformer_stack.1} parent=1 // pred_check
      _
    $region71: #{transformer_stack.1} parent=1 // pred_check_branch
      %139 = sbr.rel (0) target = $region73
    $region72: #{transformer_stack.1} parent=1 // pred_region
      %140 = dma.done [#allocation6], 32
    $region73: #{transformer_stack.1} parent=1 // pred_fallthru
      _
    // Predicated region
    $region74: #{transformer_stack.1} parent=1 // pred_check
      _
    $region75: #{transformer_stack.1} parent=1 // pred_check_branch
      %142 = sbr.rel (0) target = $region77
    $region76: #{transformer_stack.1} parent=1 // pred_region
      %143 = dma.done [#allocation9], 32
    $region77: #{transformer_stack.1} parent=1 // pred_fallthru
      _
    // Predicated region
    $region78: #{transformer_stack.1} parent=1 // pred_check
      _
    $region79: #{transformer_stack.1} parent=1 // pred_check_branch
      %145 = sbr.rel (0) target = $region81
    $region80: #{transformer_stack.1} parent=1 // pred_region
      %146 = dma.done [#allocation9], 1024
    $region81: #{transformer_stack.1} parent=1 // pred_fallthru
      _
    // Predicated region
    $region82: #{transformer_stack.1} parent=1 // pred_check
      _
    $region83: #{transformer_stack.1} parent=1 // pred_check_branch
      %148 = sbr.rel (0) target = $region85
    $region84: #{transformer_stack.1} parent=1 // pred_region
      %149 = dma.done [#allocation12], 1024
    $region85: #{transformer_stack.1} parent=1 // pred_fallthru
      _
    // Predicated region
    $region86: #{transformer_stack.1} parent=1 // pred_check
      _
    $region87: #{transformer_stack.1} parent=1 // pred_check_branch
      %151 = sbr.rel (0) target = $region89
    $region88: #{transformer_stack.1} parent=1 // pred_region
      %152 = dma.done [#allocation12], 512
    $region89: #{transformer_stack.1} parent=1 // pred_fallthru
      _
    // Predicated region
    $region90: #{transformer_stack.1} parent=1 // pred_check
      _
    $region91: #{transformer_stack.1} parent=1 // pred_check_branch
      %154 = sbr.rel (0) target = $region93
    $region92: #{transformer_stack.1} parent=1 // pred_region
      %155 = dma.done [#allocation15], 32
    $region93: #{transformer_stack.1} parent=1 // pred_fallthru
      _
    %v156 = vld [vmem:[#allocation2] sm:$0xff]
    %v157 = vld [vmem:[#allocation2 + $0x8] sm:$0xff]
    %v158 = vld [vmem:[#allocation5] sm:$0x3]
    %v159 = vld [vmem:[#allocation13] sm:$0xff]
    %v160 = vld [vmem:[#allocation13 + $0x8] sm:$0xff]
    %v161 = vld [vmem:[#allocation13 + $0x10] sm:$0xff]
    %v162 = vld [vmem:[#allocation13 + $0x18] sm:$0xff]
    %v163 = vld [vmem:[#allocation14] sm:$0x3]
    %v165 = vlaneseq
    %v166 = vshrl.u32 %v165, 7
    %v167 = vsub.s32 0, %v166
    %v168 = vrot.slane %v163, %v167
    %v169 = vlaneseq
    %v170 = vshrl.u32 %v169, 7
    %v171 = vsub.s32 1, %v170
    %v172 = vrot.slane %v163, %v171
    %vm175 = vcmask 130048
    %v177 = vsel %vm175, %v158, 0
    %179 = vmatprep.subr.mxu0 %v160
    %180 = vmatpush1.msra.mxu0 %v159
    %181 = vmatprep.subr.mxu0 %v162
    %182 = vmatpush1.msra.mxu0 %v161
    %183 = vmatprep.subr.mxu0 0.0
    %184 = vmatpush1.msra.mxu0 0.0
    %185 = vmatprep.subr.mxu0 0.0
    %186 = vmatpush1.msra.mxu0 0.0
    %187 = vmatprep.subr.mxu0 0.0
    %188 = vmatpush1.msra.mxu0 0.0
    %189 = vmatprep.subr.mxu0 0.0
    %190 = vmatpush1.msra.mxu0 0.0
    %191 = vmatprep.subr.mxu0 0.0
    %192 = vmatpush1.msra.mxu0 0.0
    %193 = vmatprep.subr.mxu0 0.0
    %194 = vmatpush1.msra.mxu0 0.0
    %195 = vmatprep.subr.mxu0 0.0
    %196 = vmatpush1.msra.mxu0 0.0
    %197 = vmatprep.subr.mxu0 0.0
    %198 = vmatpush1.msra.mxu0 0.0
    %199 = vmatprep.subr.mxu0 0.0
    %200 = vmatpush1.msra.mxu0 0.0
    %201 = vmatprep.subr.mxu0 0.0
    %202 = vmatpush1.msra.mxu0 0.0
    %203 = vmatprep.subr.mxu0 0.0
    %204 = vmatpush1.msra.mxu0 0.0
    %205 = vmatprep.subr.mxu0 0.0
    %206 = vmatpush1.msra.mxu0 0.0
    %207 = vmatprep.subr.mxu0 0.0
    %208 = vmatpush1.msra.mxu0 0.0
    %209 = vmatprep.subr.mxu0 0.0
    %210 = vmatpush1.msra.mxu0 0.0
    %211 = vmatprep.subr.mxu0 0.0
    %212 = vmatpush1.msra.mxu0 0.0
    %213 = vmatprep.subr.mxu0 0.0
    %214 = vmatpush1.msra.mxu0 0.0
    %215 = vmatprep.subr.mxu0 0.0
    %216 = vmatpush1.msra.mxu0 0.0
    %217 = vmatprep.subr.mxu0 0.0
    %218 = vmatpush1.msra.mxu0 0.0
    %219 = vmatprep.subr.mxu0 0.0
    %220 = vmatpush1.msra.mxu0 0.0
    %221 = vmatprep.subr.mxu0 0.0
    %222 = vmatpush1.msra.mxu0 0.0
    %223 = vmatprep.subr.mxu0 0.0
    %224 = vmatpush1.msra.mxu0 0.0
    %225 = vmatprep.subr.mxu0 0.0
    %226 = vmatpush1.msra.mxu0 0.0
    %227 = vmatprep.subr.mxu0 0.0
    %228 = vmatpush1.msra.mxu0 0.0
    %229 = vmatprep.subr.mxu0 0.0
    %230 = vmatpush1.msra.mxu0 0.0
    %231 = vmatprep.subr.mxu0 0.0
    %232 = vmatpush1.msra.mxu0 0.0
    %233 = vmatprep.subr.mxu0 0.0
    %234 = vmatpush1.msra.mxu0 0.0
    %235 = vmatprep.subr.mxu0 0.0
    %236 = vmatpush1.msra.mxu0 0.0
    %237 = vmatprep.subr.mxu0 0.0
    %238 = vmatpush1.msra.mxu0 0.0
    %239 = vmatprep.subr.mxu0 0.0
    %240 = vmatpush1.msra.mxu0 0.0
    %241 = vmatprep.subr.mxu0 0.0
    %242 = vmatpush1.msra.mxu0 0.0
    %243 = vmatprep.mubr.f32.mxu0 0.0
    %244 = vmatmul.mubr.f32.gmra.mrb[0].mxu0 %v177
    %v245 = vpop.f32.mrb[0].mxu0
    %v246 = vadd.f32 %v168, %v245
    %v247 = vpop.f32.mrb[0].mxu0
    %v248 = vadd.f32 %v172, %v247
    %249 = vdwg.mxu0
    %v250 = vlaneseq
    %v251 = vshrl.u32 %v250, 7
    %v252 = vsub.s32 0, %v251
    %v253 = vrot.slane %v246, %v252
    %v254 = vlaneseq
    %v255 = vshrl.u32 %v254, 7
    %v256 = vsub.s32 0, %v255
    %v257 = vrot.slane %v248, %v256
    %v258 = vlaneseq
    %v259 = vshrl.u32 %v258, 7
    %v260 = vsub.s32 1, %v259
    %v261 = vrot.slane %v246, %v260
    %v262 = vlaneseq
    %v263 = vshrl.u32 %v262, 7
    %v264 = vsub.s32 1, %v263
    %v265 = vrot.slane %v248, %v264
    %v266 = vld [vmem:[%s1] sm:$0xff]
    %v267 = vld [vmem:[%s1 + $0x8] sm:$0xff]
    %v268 = vld [vmem:[%s1 + $0x10] sm:$0xff]
    %v269 = vld [vmem:[%s1 + $0x18] sm:$0xff]
    %v270 = vld [vmem:[%s1 + $0x20] sm:$0xff]
    %v271 = vld [vmem:[%s1 + $0x28] sm:$0xff]
    %v272 = vld [vmem:[%s1 + $0x30] sm:$0xff]
    %v273 = vld [vmem:[%s1 + $0x38] sm:$0xff]
    %v274 = vld [vmem:[#allocation7] sm:$0x1]
    %v275 = vmul.f32 %v156, %v156
    %v276 = vmul.f32 %v157, %v157
    %vm277 = vcmask 261120
    %v278 = vsel %vm277, %v275, 0.0
    %279 = vadd.xlane.f32.xlu0 %v278
    %v280 = vpop.xlane.xlu0 %279
    %v281 = vsel %vm277, %v276, 0.0
    %282 = vadd.xlane.f32.xlu0 %v281
    %v283 = vpop.xlane.xlu0 %282
    %v284 = vrcp.pop 32.0
    %v285 = vmul.f32 %v280, %v284
    %v286 = vmul.f32 %v283, %v284
    %v287 = vadd.f32 %v285, 1e-06
    %v288 = vadd.f32 %v286, 1e-06
    %v289 = vrsqrt.pop %v287
    %v290 = vrsqrt.pop %v288
    %v291 = vmul.f32 %v156, %v289
    %v292 = vmul.f32 %v157, %v290
    %v294 = vlaneseq
    %v295 = vshrl.u32 %v294, 7
    %v296 = vsub.s32 0, %v295
    %v297 = vrot.slane %v274, %v296
    %v299 = vmul.f32 %v297, %v291
    %v300 = vmul.f32 %v297, %v292
    %v301 = vadd.f32 %v253, 1.0
    %v302 = vadd.f32 %v261, 1.0
    %v303 = vmul.f32 %v299, %v301
    %v304 = vmul.f32 %v300, %v302
    %307 = vrot.lane.b32.xlu0 %v253, 96
    %v308 = vpop.permute.xlu0 %307
    %309 = vrot.lane.b32.xlu0 %v261, 96
    %v310 = vpop.permute.xlu0 %309
    %v313 = vadd.f32 %v303, %v308
    %v314 = vadd.f32 %v304, %v310
    %v315 = vld [vmem:[%s5] sm:$0xff]
    %v316 = vld [vmem:[%s5 + $0x8] sm:$0xff]
    %v317 = vld [vmem:[%s5 + $0x10] sm:$0xff]
    %v318 = vld [vmem:[%s5 + $0x18] sm:$0xff]
    %v320 = vsel %vm277, %v313, 0
    %v323 = vsel %vm277, %v314, 0
    %325 = vmatprep.subr.mxu0 0.0
    %326 = vmatpush1.msra.mxu0 %v315
    %327 = vmatprep.subr.mxu0 0.0
    %328 = vmatpush1.msra.mxu0 %v316
    %329 = vmatprep.subr.mxu0 0.0
    %330 = vmatpush1.msra.mxu0 %v317
    %331 = vmatprep.subr.mxu0 0.0
    %332 = vmatpush1.msra.mxu0 %v318
    %333 = vmatprep.subr.mxu0 0.0
    %334 = vmatpush1.msra.mxu0 0.0
    %335 = vmatprep.subr.mxu0 0.0
    %336 = vmatpush1.msra.mxu0 0.0
    %337 = vmatprep.subr.mxu0 0.0
    %338 = vmatpush1.msra.mxu0 0.0
    %339 = vmatprep.subr.mxu0 0.0
    %340 = vmatpush1.msra.mxu0 0.0
    %341 = vmatprep.subr.mxu0 0.0
    %342 = vmatpush1.msra.mxu0 0.0
    %343 = vmatprep.subr.mxu0 0.0
    %344 = vmatpush1.msra.mxu0 0.0
    %345 = vmatprep.subr.mxu0 0.0
    %346 = vmatpush1.msra.mxu0 0.0
    %347 = vmatprep.subr.mxu0 0.0
    %348 = vmatpush1.msra.mxu0 0.0
    %349 = vmatprep.subr.mxu0 0.0
    %350 = vmatpush1.msra.mxu0 0.0
    %351 = vmatprep.subr.mxu0 0.0
    %352 = vmatpush1.msra.mxu0 0.0
    %353 = vmatprep.subr.mxu0 0.0
    %354 = vmatpush1.msra.mxu0 0.0
    %355 = vmatprep.subr.mxu0 0.0
    %356 = vmatpush1.msra.mxu0 0.0
    %357 = vmatprep.subr.mxu0 0.0
    %358 = vmatpush1.msra.mxu0 0.0
    %359 = vmatprep.subr.mxu0 0.0
    %360 = vmatpush1.msra.mxu0 0.0
    %361 = vmatprep.subr.mxu0 0.0
    %362 = vmatpush1.msra.mxu0 0.0
    %363 = vmatprep.subr.mxu0 0.0
    %364 = vmatpush1.msra.mxu0 0.0
    %365 = vmatprep.subr.mxu0 0.0
    %366 = vmatpush1.msra.mxu0 0.0
    %367 = vmatprep.subr.mxu0 0.0
    %368 = vmatpush1.msra.mxu0 0.0
    %369 = vmatprep.subr.mxu0 0.0
    %370 = vmatpush1.msra.mxu0 0.0
    %371 = vmatprep.subr.mxu0 0.0
    %372 = vmatpush1.msra.mxu0 0.0
    %373 = vmatprep.subr.mxu0 0.0
    %374 = vmatpush1.msra.mxu0 0.0
    %375 = vmatprep.subr.mxu0 0.0
    %376 = vmatpush1.msra.mxu0 0.0
    %377 = vmatprep.subr.mxu0 0.0
    %378 = vmatpush1.msra.mxu0 0.0
    %379 = vmatprep.subr.mxu0 0.0
    %380 = vmatpush1.msra.mxu0 0.0
    %381 = vmatprep.subr.mxu0 0.0
    %382 = vmatpush1.msra.mxu0 0.0
    %383 = vmatprep.subr.mxu0 0.0
    %384 = vmatpush1.msra.mxu0 0.0
    %385 = vmatprep.subr.mxu0 0.0
    %386 = vmatpush1.msra.mxu0 0.0
    %387 = vmatprep.subr.mxu0 0.0
    %388 = vmatpush1.msra.mxu0 0.0
    %389 = vmatprep.mubr.f32.mxu0 0.0
    %390 = vmatmul.mubr.f32.gmra.mrb[0].mxu0 %v320
    %v391 = vpop.f32.mrb[0].mxu0
    %v392 = vadd.f32 0.0, %v391
    %v393 = vpop.f32.mrb[0].mxu0
    %394 = vmatprep.mubr.f32.mxu0 0.0
    %395 = vmatmul.mubr.f32.gmra.mrb[0].mxu0 %v323
    %v396 = vpop.f32.mrb[0].mxu0
    %v397 = vadd.f32 0.0, %v396
    %v398 = vpop.f32.mrb[0].mxu0
    %399 = vdwg.mxu0
    %v400 = vld [vmem:[%s6] sm:$0xff]
    %v401 = vld [vmem:[%s6 + $0x8] sm:$0xff]
    %v402 = vld [vmem:[%s6 + $0x10] sm:$0xff]
    %v403 = vld [vmem:[%s6 + $0x18] sm:$0xff]
    %404 = vmatprep.subr.mxu0 0.0
    %405 = vmatpush1.msra.mxu0 %v400
    %406 = vmatprep.subr.mxu0 0.0
    %407 = vmatpush1.msra.mxu0 %v401
    %408 = vmatprep.subr.mxu0 0.0
    %409 = vmatpush1.msra.mxu0 %v402
    %410 = vmatprep.subr.mxu0 0.0
    %411 = vmatpush1.msra.mxu0 %v403
    %412 = vmatprep.subr.mxu0 0.0
    %413 = vmatpush1.msra.mxu0 0.0
    %414 = vmatprep.subr.mxu0 0.0
    %415 = vmatpush1.msra.mxu0 0.0
    %416 = vmatprep.subr.mxu0 0.0
    %417 = vmatpush1.msra.mxu0 0.0
    %418 = vmatprep.subr.mxu0 0.0
    %419 = vmatpush1.msra.mxu0 0.0
    %420 = vmatprep.subr.mxu0 0.0
    %421 = vmatpush1.msra.mxu0 0.0
    %422 = vmatprep.subr.mxu0 0.0
    %423 = vmatpush1.msra.mxu0 0.0
    %424 = vmatprep.subr.mxu0 0.0
    %425 = vmatpush1.msra.mxu0 0.0
    %426 = vmatprep.subr.mxu0 0.0
    %427 = vmatpush1.msra.mxu0 0.0
    %428 = vmatprep.subr.mxu0 0.0
    %429 = vmatpush1.msra.mxu0 0.0
    %430 = vmatprep.subr.mxu0 0.0
    %431 = vmatpush1.msra.mxu0 0.0
    %432 = vmatprep.subr.mxu0 0.0
    %433 = vmatpush1.msra.mxu0 0.0
    %434 = vmatprep.subr.mxu0 0.0
    %435 = vmatpush1.msra.mxu0 0.0
    %436 = vmatprep.subr.mxu0 0.0
    %437 = vmatpush1.msra.mxu0 0.0
    %438 = vmatprep.subr.mxu0 0.0
    %439 = vmatpush1.msra.mxu0 0.0
    %440 = vmatprep.subr.mxu0 0.0
    %441 = vmatpush1.msra.mxu0 0.0
    %442 = vmatprep.subr.mxu0 0.0
    %443 = vmatpush1.msra.mxu0 0.0
    %444 = vmatprep.subr.mxu0 0.0
    %445 = vmatpush1.msra.mxu0 0.0
    %446 = vmatprep.subr.mxu0 0.0
    %447 = vmatpush1.msra.mxu0 0.0
    %448 = vmatprep.subr.mxu0 0.0
    %449 = vmatpush1.msra.mxu0 0.0
    %450 = vmatprep.subr.mxu0 0.0
    %451 = vmatpush1.msra.mxu0 0.0
    %452 = vmatprep.subr.mxu0 0.0
    %453 = vmatpush1.msra.mxu0 0.0
    %454 = vmatprep.subr.mxu0 0.0
    %455 = vmatpush1.msra.mxu0 0.0
    %456 = vmatprep.subr.mxu0 0.0
    %457 = vmatpush1.msra.mxu0 0.0
    %458 = vmatprep.subr.mxu0 0.0
    %459 = vmatpush1.msra.mxu0 0.0
    %460 = vmatprep.subr.mxu0 0.0
    %461 = vmatpush1.msra.mxu0 0.0
    %462 = vmatprep.subr.mxu0 0.0
    %463 = vmatpush1.msra.mxu0 0.0
    %464 = vmatprep.subr.mxu0 0.0
    %465 = vmatpush1.msra.mxu0 0.0
    %466 = vmatprep.subr.mxu0 0.0
    %467 = vmatpush1.msra.mxu0 0.0
    %468 = vmatprep.mubr.f32.mxu0 0.0
    %469 = vmatmul.mubr.f32.gmra.mrb[0].mxu0 %v320
    %v470 = vpop.f32.mrb[0].mxu0
    %v471 = vadd.f32 0.0, %v470
    %v472 = vpop.f32.mrb[0].mxu0
    %473 = vmatprep.mubr.f32.mxu0 0.0
    %474 = vmatmul.mubr.f32.gmra.mrb[0].mxu0 %v323
    %v475 = vpop.f32.mrb[0].mxu0
    %v476 = vadd.f32 0.0, %v475
    %v477 = vpop.f32.mrb[0].mxu0
    %478 = vdwg.mxu0
    %v479 = vld [vmem:[%s7] sm:$0xff]
    %v480 = vld [vmem:[%s7 + $0x8] sm:$0xff]
    %v481 = vld [vmem:[%s7 + $0x10] sm:$0xff]
    %v482 = vld [vmem:[%s7 + $0x18] sm:$0xff]
    %483 = vmatprep.subr.mxu0 0.0
    %484 = vmatpush1.msra.mxu0 %v479
    %485 = vmatprep.subr.mxu0 0.0
    %486 = vmatpush1.msra.mxu0 %v480
    %487 = vmatprep.subr.mxu0 0.0
    %488 = vmatpush1.msra.mxu0 %v481
    %489 = vmatprep.subr.mxu0 0.0
    %490 = vmatpush1.msra.mxu0 %v482
    %491 = vmatprep.subr.mxu0 0.0
    %492 = vmatpush1.msra.mxu0 0.0
    %493 = vmatprep.subr.mxu0 0.0
    %494 = vmatpush1.msra.mxu0 0.0
    %495 = vmatprep.subr.mxu0 0.0
    %496 = vmatpush1.msra.mxu0 0.0
    %497 = vmatprep.subr.mxu0 0.0
    %498 = vmatpush1.msra.mxu0 0.0
    %499 = vmatprep.subr.mxu0 0.0
    %500 = vmatpush1.msra.mxu0 0.0
    %501 = vmatprep.subr.mxu0 0.0
    %502 = vmatpush1.msra.mxu0 0.0
    %503 = vmatprep.subr.mxu0 0.0
    %504 = vmatpush1.msra.mxu0 0.0
    %505 = vmatprep.subr.mxu0 0.0
    %506 = vmatpush1.msra.mxu0 0.0
    %507 = vmatprep.subr.mxu0 0.0
    %508 = vmatpush1.msra.mxu0 0.0
    %509 = vmatprep.subr.mxu0 0.0
    %510 = vmatpush1.msra.mxu0 0.0
    %511 = vmatprep.subr.mxu0 0.0
    %512 = vmatpush1.msra.mxu0 0.0
    %513 = vmatprep.subr.mxu0 0.0
    %514 = vmatpush1.msra.mxu0 0.0
    %515 = vmatprep.subr.mxu0 0.0
    %516 = vmatpush1.msra.mxu0 0.0
    %517 = vmatprep.subr.mxu0 0.0
    %518 = vmatpush1.msra.mxu0 0.0
    %519 = vmatprep.subr.mxu0 0.0
    %520 = vmatpush1.msra.mxu0 0.0
    %521 = vmatprep.subr.mxu0 0.0
    %522 = vmatpush1.msra.mxu0 0.0
    %523 = vmatprep.subr.mxu0 0.0
    %524 = vmatpush1.msra.mxu0 0.0
    %525 = vmatprep.subr.mxu0 0.0
    %526 = vmatpush1.msra.mxu0 0.0
    %527 = vmatprep.subr.mxu0 0.0
    %528 = vmatpush1.msra.mxu0 0.0
    %529 = vmatprep.subr.mxu0 0.0
    %530 = vmatpush1.msra.mxu0 0.0
    %531 = vmatprep.subr.mxu0 0.0
    %532 = vmatpush1.msra.mxu0 0.0
    %533 = vmatprep.subr.mxu0 0.0
    %534 = vmatpush1.msra.mxu0 0.0
    %535 = vmatprep.subr.mxu0 0.0
    %536 = vmatpush1.msra.mxu0 0.0
    %537 = vmatprep.subr.mxu0 0.0
    %538 = vmatpush1.msra.mxu0 0.0
    %539 = vmatprep.subr.mxu0 0.0
    %540 = vmatpush1.msra.mxu0 0.0
    %541 = vmatprep.subr.mxu0 0.0
    %542 = vmatpush1.msra.mxu0 0.0
    %543 = vmatprep.subr.mxu0 0.0
    %544 = vmatpush1.msra.mxu0 0.0
    %545 = vmatprep.subr.mxu0 0.0
    %546 = vmatpush1.msra.mxu0 0.0
    %547 = vmatprep.mubr.f32.mxu0 0.0
    %548 = vmatmul.mubr.f32.gmra.mrb[0].mxu0 %v320
    %v549 = vpop.f32.mrb[0].mxu0
    %v550 = vadd.f32 0.0, %v549
    %v551 = vpop.f32.mrb[0].mxu0
    %552 = vmatprep.mubr.f32.mxu0 0.0
    %553 = vmatmul.mubr.f32.gmra.mrb[0].mxu0 %v323
    %v554 = vpop.f32.mrb[0].mxu0
    %v555 = vadd.f32 0.0, %v554
    %v556 = vpop.f32.mrb[0].mxu0
    %557 = vdwg.mxu0
    %v558 = vld [vmem:[%s8] sm:$0xff]
    %v559 = vld [vmem:[%s8 + $0x8] sm:$0xff]
    %v560 = vld [vmem:[%s8 + $0x10] sm:$0xff]
    %v561 = vld [vmem:[%s8 + $0x18] sm:$0xff]
    %vm562 = vcmask 64512
    %v564 = vsel %vm562, %v392, 0
    %v567 = vsel %vm562, %v471, 0
    %569 = vmatprep.subr.mxu0 0.0
    %570 = vmatpush1.xpose.msra.mxu0 %v567
    %571 = vmatprep.subr.mxu0 0.0
    %572 = vmatpush1.xpose.msra.mxu0 0.0
    %573 = vmatprep.subr.mxu0 0.0
    %574 = vmatpush1.xpose.msra.mxu0 0.0
    %575 = vmatprep.subr.mxu0 0.0
    %576 = vmatpush1.xpose.msra.mxu0 0.0
    %577 = vmatprep.subr.mxu0 0.0
    %578 = vmatpush1.xpose.msra.mxu0 0.0
    %579 = vmatprep.subr.mxu0 0.0
    %580 = vmatpush1.xpose.msra.mxu0 0.0
    %581 = vmatprep.subr.mxu0 0.0
    %582 = vmatpush1.xpose.msra.mxu0 0.0
    %583 = vmatprep.subr.mxu0 0.0
    %584 = vmatpush1.xpose.msra.mxu0 0.0
    %585 = vmatprep.subr.mxu0 0.0
    %586 = vmatpush1.xpose.msra.mxu0 0.0
    %587 = vmatprep.subr.mxu0 0.0
    %588 = vmatpush1.xpose.msra.mxu0 0.0
    %589 = vmatprep.subr.mxu0 0.0
    %590 = vmatpush1.xpose.msra.mxu0 0.0
    %591 = vmatprep.subr.mxu0 0.0
    %592 = vmatpush1.xpose.msra.mxu0 0.0
    %593 = vmatprep.subr.mxu0 0.0
    %594 = vmatpush1.xpose.msra.mxu0 0.0
    %595 = vmatprep.subr.mxu0 0.0
    %596 = vmatpush1.xpose.msra.mxu0 0.0
    %597 = vmatprep.subr.mxu0 0.0
    %598 = vmatpush1.xpose.msra.mxu0 0.0
    %599 = vmatprep.subr.mxu0 0.0
    %600 = vmatpush1.xpose.msra.mxu0 0.0
    %601 = vmatprep.subr.mxu0 0.0
    %602 = vmatpush1.xpose.msra.mxu0 0.0
    %603 = vmatprep.subr.mxu0 0.0
    %604 = vmatpush1.xpose.msra.mxu0 0.0
    %605 = vmatprep.subr.mxu0 0.0
    %606 = vmatpush1.xpose.msra.mxu0 0.0
    %607 = vmatprep.subr.mxu0 0.0
    %608 = vmatpush1.xpose.msra.mxu0 0.0
    %609 = vmatprep.subr.mxu0 0.0
    %610 = vmatpush1.xpose.msra.mxu0 0.0
    %611 = vmatprep.subr.mxu0 0.0
    %612 = vmatpush1.xpose.msra.mxu0 0.0
    %613 = vmatprep.subr.mxu0 0.0
    %614 = vmatpush1.xpose.msra.mxu0 0.0
    %615 = vmatprep.subr.mxu0 0.0
    %616 = vmatpush1.xpose.msra.mxu0 0.0
    %617 = vmatprep.subr.mxu0 0.0
    %618 = vmatpush1.xpose.msra.mxu0 0.0
    %619 = vmatprep.subr.mxu0 0.0
    %620 = vmatpush1.xpose.msra.mxu0 0.0
    %621 = vmatprep.subr.mxu0 0.0
    %622 = vmatpush1.xpose.msra.mxu0 0.0
    %623 = vmatprep.subr.mxu0 0.0
    %624 = vmatpush1.xpose.msra.mxu0 0.0
    %625 = vmatprep.subr.mxu0 0.0
    %626 = vmatpush1.xpose.msra.mxu0 0.0
    %627 = vmatprep.subr.mxu0 0.0
    %628 = vmatpush1.xpose.msra.mxu0 0.0
    %629 = vmatprep.subr.mxu0 0.0
    %630 = vmatpush1.xpose.msra.mxu0 0.0
    %631 = vmatprep.subr.mxu0 0.0
    %632 = vmatpush1.xpose.msra.mxu0 0.0
    %633 = vmatprep.mubr.f32.mxu0 0.0
    %634 = vmatmul.mubr.f32.gmra.mrb[0].mxu0 %v564
    %v635 = vpop.f32.mrb[0].mxu0
    %v636 = vadd.f32 %v266, %v635
    %v637 = vpop.f32.mrb[0].mxu0
    %638 = vdwg.mxu0
    %v640 = vsel %vm562, %v397, 0
    %v643 = vsel %vm562, %v476, 0
    %645 = vmatprep.subr.mxu0 0.0
    %646 = vmatpush1.xpose.msra.mxu0 %v643
    %647 = vmatprep.subr.mxu0 0.0
    %648 = vmatpush1.xpose.msra.mxu0 0.0
    %649 = vmatprep.subr.mxu0 0.0
    %650 = vmatpush1.xpose.msra.mxu0 0.0
    %651 = vmatprep.subr.mxu0 0.0
    %652 = vmatpush1.xpose.msra.mxu0 0.0
    %653 = vmatprep.subr.mxu0 0.0
    %654 = vmatpush1.xpose.msra.mxu0 0.0
    %655 = vmatprep.subr.mxu0 0.0
    %656 = vmatpush1.xpose.msra.mxu0 0.0
    %657 = vmatprep.subr.mxu0 0.0
    %658 = vmatpush1.xpose.msra.mxu0 0.0
    %659 = vmatprep.subr.mxu0 0.0
    %660 = vmatpush1.xpose.msra.mxu0 0.0
    %661 = vmatprep.subr.mxu0 0.0
    %662 = vmatpush1.xpose.msra.mxu0 0.0
    %663 = vmatprep.subr.mxu0 0.0
    %664 = vmatpush1.xpose.msra.mxu0 0.0
    %665 = vmatprep.subr.mxu0 0.0
    %666 = vmatpush1.xpose.msra.mxu0 0.0
    %667 = vmatprep.subr.mxu0 0.0
    %668 = vmatpush1.xpose.msra.mxu0 0.0
    %669 = vmatprep.subr.mxu0 0.0
    %670 = vmatpush1.xpose.msra.mxu0 0.0
    %671 = vmatprep.subr.mxu0 0.0
    %672 = vmatpush1.xpose.msra.mxu0 0.0
    %673 = vmatprep.subr.mxu0 0.0
    %674 = vmatpush1.xpose.msra.mxu0 0.0
    %675 = vmatprep.subr.mxu0 0.0
    %676 = vmatpush1.xpose.msra.mxu0 0.0
    %677 = vmatprep.subr.mxu0 0.0
    %678 = vmatpush1.xpose.msra.mxu0 0.0
    %679 = vmatprep.subr.mxu0 0.0
    %680 = vmatpush1.xpose.msra.mxu0 0.0
    %681 = vmatprep.subr.mxu0 0.0
    %682 = vmatpush1.xpose.msra.mxu0 0.0
    %683 = vmatprep.subr.mxu0 0.0
    %684 = vmatpush1.xpose.msra.mxu0 0.0
    %685 = vmatprep.subr.mxu0 0.0
    %686 = vmatpush1.xpose.msra.mxu0 0.0
    %687 = vmatprep.subr.mxu0 0.0
    %688 = vmatpush1.xpose.msra.mxu0 0.0
    %689 = vmatprep.subr.mxu0 0.0
    %690 = vmatpush1.xpose.msra.mxu0 0.0
    %691 = vmatprep.subr.mxu0 0.0
    %692 = vmatpush1.xpose.msra.mxu0 0.0
    %693 = vmatprep.subr.mxu0 0.0
    %694 = vmatpush1.xpose.msra.mxu0 0.0
    %695 = vmatprep.subr.mxu0 0.0
    %696 = vmatpush1.xpose.msra.mxu0 0.0
    %697 = vmatprep.subr.mxu0 0.0
    %698 = vmatpush1.xpose.msra.mxu0 0.0
    %699 = vmatprep.subr.mxu0 0.0
    %700 = vmatpush1.xpose.msra.mxu0 0.0
    %701 = vmatprep.subr.mxu0 0.0
    %702 = vmatpush1.xpose.msra.mxu0 0.0
    %703 = vmatprep.subr.mxu0 0.0
    %704 = vmatpush1.xpose.msra.mxu0 0.0
    %705 = vmatprep.subr.mxu0 0.0
    %706 = vmatpush1.xpose.msra.mxu0 0.0
    %707 = vmatprep.subr.mxu0 0.0
    %708 = vmatpush1.xpose.msra.mxu0 0.0
    %709 = vmatprep.mubr.f32.mxu0 0.0
    %710 = vmatmul.mubr.f32.gmra.mrb[0].mxu0 %v640
    %v711 = vpop.f32.mrb[0].mxu0
    %v712 = vadd.f32 %v267, %v711
    %v713 = vpop.f32.mrb[0].mxu0
    %714 = vdwg.mxu0
    %v715 = vsel %vm562, %v636, -inf
    %716 = vmax.xlane.f32.xlu0 %v715
    %v717 = vpop.xlane.xlu0 %716
    %v718 = vsel %vm562, %v712, -inf
    %719 = vmax.xlane.f32.xlu0 %v718
    %v720 = vpop.xlane.xlu0 %719
    %v721 = vsub.f32 %v636, %v717
    %v722 = vsub.f32 %v712, %v720
    %v723 = vmul.f32 %v721, 1.442695
    %v724 = vpow.pop %v723
    %v725 = vmul.f32 %v722, 1.442695
    %v726 = vpow.pop %v725
    %v727 = vsel %vm562, %v724, 0.0
    %728 = vadd.xlane.f32.xlu0 %v727
    %v729 = vpop.xlane.xlu0 %728
    %v730 = vsel %vm562, %v726, 0.0
    %731 = vadd.xlane.f32.xlu0 %v730
    %v732 = vpop.xlane.xlu0 %731
    %v733 = vrcp.pop %v729
    %v734 = vrcp.pop %v732
    %v735 = vmul.f32 %v724, %v733
    %v736 = vmul.f32 %v726, %v734
    %v738 = vsel %vm562, %v735, 0
    %740 = vmatprep.subr.mxu0 0.0
    %741 = vmatpush1.msra.mxu0 %v550
    %742 = vmatprep.subr.mxu0 0.0
    %743 = vmatpush1.msra.mxu0 0.0
    %744 = vmatprep.subr.mxu0 0.0
    %745 = vmatpush1.msra.mxu0 0.0
    %746 = vmatprep.subr.mxu0 0.0
    %747 = vmatpush1.msra.mxu0 0.0
    %748 = vmatprep.subr.mxu0 0.0
    %749 = vmatpush1.msra.mxu0 0.0
    %750 = vmatprep.subr.mxu0 0.0
    %751 = vmatpush1.msra.mxu0 0.0
    %752 = vmatprep.subr.mxu0 0.0
    %753 = vmatpush1.msra.mxu0 0.0
    %754 = vmatprep.subr.mxu0 0.0
    %755 = vmatpush1.msra.mxu0 0.0
    %756 = vmatprep.subr.mxu0 0.0
    %757 = vmatpush1.msra.mxu0 0.0
    %758 = vmatprep.subr.mxu0 0.0
    %759 = vmatpush1.msra.mxu0 0.0
    %760 = vmatprep.subr.mxu0 0.0
    %761 = vmatpush1.msra.mxu0 0.0
    %762 = vmatprep.subr.mxu0 0.0
    %763 = vmatpush1.msra.mxu0 0.0
    %764 = vmatprep.subr.mxu0 0.0
    %765 = vmatpush1.msra.mxu0 0.0
    %766 = vmatprep.subr.mxu0 0.0
    %767 = vmatpush1.msra.mxu0 0.0
    %768 = vmatprep.subr.mxu0 0.0
    %769 = vmatpush1.msra.mxu0 0.0
    %770 = vmatprep.subr.mxu0 0.0
    %771 = vmatpush1.msra.mxu0 0.0
    %772 = vmatprep.subr.mxu0 0.0
    %773 = vmatpush1.msra.mxu0 0.0
    %774 = vmatprep.subr.mxu0 0.0
    %775 = vmatpush1.msra.mxu0 0.0
    %776 = vmatprep.subr.mxu0 0.0
    %777 = vmatpush1.msra.mxu0 0.0
    %778 = vmatprep.subr.mxu0 0.0
    %779 = vmatpush1.msra.mxu0 0.0
    %780 = vmatprep.subr.mxu0 0.0
    %781 = vmatpush1.msra.mxu0 0.0
    %782 = vmatprep.subr.mxu0 0.0
    %783 = vmatpush1.msra.mxu0 0.0
    %784 = vmatprep.subr.mxu0 0.0
    %785 = vmatpush1.msra.mxu0 0.0
    %786 = vmatprep.subr.mxu0 0.0
    %787 = vmatpush1.msra.mxu0 0.0
    %788 = vmatprep.subr.mxu0 0.0
    %789 = vmatpush1.msra.mxu0 0.0
    %790 = vmatprep.subr.mxu0 0.0
    %791 = vmatpush1.msra.mxu0 0.0
    %792 = vmatprep.subr.mxu0 0.0
    %793 = vmatpush1.msra.mxu0 0.0
    %794 = vmatprep.subr.mxu0 0.0
    %795 = vmatpush1.msra.mxu0 0.0
    %796 = vmatprep.subr.mxu0 0.0
    %797 = vmatpush1.msra.mxu0 0.0
    %798 = vmatprep.subr.mxu0 0.0
    %799 = vmatpush1.msra.mxu0 0.0
    %800 = vmatprep.subr.mxu0 0.0
    %801 = vmatpush1.msra.mxu0 0.0
    %802 = vmatprep.subr.mxu0 0.0
    %803 = vmatpush1.msra.mxu0 0.0
    %804 = vmatprep.mubr.f32.mxu0 0.0
    %805 = vmatmul.mubr.f32.gmra.mrb[0].mxu0 %v738
    %v806 = vpop.f32.mrb[0].mxu0
    %v807 = vadd.f32 0.0, %v806
    %v808 = vpop.f32.mrb[0].mxu0
    %809 = vdwg.mxu0
    %v811 = vsel %vm562, %v736, 0
    %813 = vmatprep.subr.mxu0 0.0
    %814 = vmatpush1.msra.mxu0 %v555
    %815 = vmatprep.subr.mxu0 0.0
    %816 = vmatpush1.msra.mxu0 0.0
    %817 = vmatprep.subr.mxu0 0.0
    %818 = vmatpush1.msra.mxu0 0.0
    %819 = vmatprep.subr.mxu0 0.0
    %820 = vmatpush1.msra.mxu0 0.0
    %821 = vmatprep.subr.mxu0 0.0
    %822 = vmatpush1.msra.mxu0 0.0
    %823 = vmatprep.subr.mxu0 0.0
    %824 = vmatpush1.msra.mxu0 0.0
    %825 = vmatprep.subr.mxu0 0.0
    %826 = vmatpush1.msra.mxu0 0.0
    %827 = vmatprep.subr.mxu0 0.0
    %828 = vmatpush1.msra.mxu0 0.0
    %829 = vmatprep.subr.mxu0 0.0
    %830 = vmatpush1.msra.mxu0 0.0
    %831 = vmatprep.subr.mxu0 0.0
    %832 = vmatpush1.msra.mxu0 0.0
    %833 = vmatprep.subr.mxu0 0.0
    %834 = vmatpush1.msra.mxu0 0.0
    %835 = vmatprep.subr.mxu0 0.0
    %836 = vmatpush1.msra.mxu0 0.0
    %837 = vmatprep.subr.mxu0 0.0
    %838 = vmatpush1.msra.mxu0 0.0
    %839 = vmatprep.subr.mxu0 0.0
    %840 = vmatpush1.msra.mxu0 0.0
    %841 = vmatprep.subr.mxu0 0.0
    %842 = vmatpush1.msra.mxu0 0.0
    %843 = vmatprep.subr.mxu0 0.0
    %844 = vmatpush1.msra.mxu0 0.0
    %845 = vmatprep.subr.mxu0 0.0
    %846 = vmatpush1.msra.mxu0 0.0
    %847 = vmatprep.subr.mxu0 0.0
    %848 = vmatpush1.msra.mxu0 0.0
    %849 = vmatprep.subr.mxu0 0.0
    %850 = vmatpush1.msra.mxu0 0.0
    %851 = vmatprep.subr.mxu0 0.0
    %852 = vmatpush1.msra.mxu0 0.0
    %853 = vmatprep.subr.mxu0 0.0
    %854 = vmatpush1.msra.mxu0 0.0
    %855 = vmatprep.subr.mxu0 0.0
    %856 = vmatpush1.msra.mxu0 0.0
    %857 = vmatprep.subr.mxu0 0.0
    %858 = vmatpush1.msra.mxu0 0.0
    %859 = vmatprep.subr.mxu0 0.0
    %860 = vmatpush1.msra.mxu0 0.0
    %861 = vmatprep.subr.mxu0 0.0
    %862 = vmatpush1.msra.mxu0 0.0
    %863 = vmatprep.subr.mxu0 0.0
    %864 = vmatpush1.msra.mxu0 0.0
    %865 = vmatprep.subr.mxu0 0.0
    %866 = vmatpush1.msra.mxu0 0.0
    %867 = vmatprep.subr.mxu0 0.0
    %868 = vmatpush1.msra.mxu0 0.0
    %869 = vmatprep.subr.mxu0 0.0
    %870 = vmatpush1.msra.mxu0 0.0
    %871 = vmatprep.subr.mxu0 0.0
    %872 = vmatpush1.msra.mxu0 0.0
    %873 = vmatprep.subr.mxu0 0.0
    %874 = vmatpush1.msra.mxu0 0.0
    %875 = vmatprep.subr.mxu0 0.0
    %876 = vmatpush1.msra.mxu0 0.0
    %877 = vmatprep.mubr.f32.mxu0 0.0
    %878 = vmatmul.mubr.f32.gmra.mrb[0].mxu0 %v811
    %v879 = vpop.f32.mrb[0].mxu0
    %v880 = vadd.f32 0.0, %v879
    %v881 = vpop.f32.mrb[0].mxu0
    %882 = vdwg.mxu0
    %883 = vrot.lane.b32.xlu0 %v392, 120
    %v884 = vpop.permute.xlu0 %883
    %885 = vrot.lane.b32.xlu0 %v471, 120
    %v886 = vpop.permute.xlu0 %885
    %v887 = vsel %vm562, %v884, 0
    %v889 = vsel %vm562, %v886, 0
    %891 = vmatprep.subr.mxu0 0.0
    %892 = vmatpush1.xpose.msra.mxu0 %v889
    %893 = vmatprep.subr.mxu0 0.0
    %894 = vmatpush1.xpose.msra.mxu0 0.0
    %895 = vmatprep.subr.mxu0 0.0
    %896 = vmatpush1.xpose.msra.mxu0 0.0
    %897 = vmatprep.subr.mxu0 0.0
    %898 = vmatpush1.xpose.msra.mxu0 0.0
    %899 = vmatprep.subr.mxu0 0.0
    %900 = vmatpush1.xpose.msra.mxu0 0.0
    %901 = vmatprep.subr.mxu0 0.0
    %902 = vmatpush1.xpose.msra.mxu0 0.0
    %903 = vmatprep.subr.mxu0 0.0
    %904 = vmatpush1.xpose.msra.mxu0 0.0
    %905 = vmatprep.subr.mxu0 0.0
    %906 = vmatpush1.xpose.msra.mxu0 0.0
    %907 = vmatprep.subr.mxu0 0.0
    %908 = vmatpush1.xpose.msra.mxu0 0.0
    %909 = vmatprep.subr.mxu0 0.0
    %910 = vmatpush1.xpose.msra.mxu0 0.0
    %911 = vmatprep.subr.mxu0 0.0
    %912 = vmatpush1.xpose.msra.mxu0 0.0
    %913 = vmatprep.subr.mxu0 0.0
    %914 = vmatpush1.xpose.msra.mxu0 0.0
    %915 = vmatprep.subr.mxu0 0.0
    %916 = vmatpush1.xpose.msra.mxu0 0.0
    %917 = vmatprep.subr.mxu0 0.0
    %918 = vmatpush1.xpose.msra.mxu0 0.0
    %919 = vmatprep.subr.mxu0 0.0
    %920 = vmatpush1.xpose.msra.mxu0 0.0
    %921 = vmatprep.subr.mxu0 0.0
    %922 = vmatpush1.xpose.msra.mxu0 0.0
    %923 = vmatprep.subr.mxu0 0.0
    %924 = vmatpush1.xpose.msra.mxu0 0.0
    %925 = vmatprep.subr.mxu0 0.0
    %926 = vmatpush1.xpose.msra.mxu0 0.0
    %927 = vmatprep.subr.mxu0 0.0
    %928 = vmatpush1.xpose.msra.mxu0 0.0
    %929 = vmatprep.subr.mxu0 0.0
    %930 = vmatpush1.xpose.msra.mxu0 0.0
    %931 = vmatprep.subr.mxu0 0.0
    %932 = vmatpush1.xpose.msra.mxu0 0.0
    %933 = vmatprep.subr.mxu0 0.0
    %934 = vmatpush1.xpose.msra.mxu0 0.0
    %935 = vmatprep.subr.mxu0 0.0
    %936 = vmatpush1.xpose.msra.mxu0 0.0
    %937 = vmatprep.subr.mxu0 0.0
    %938 = vmatpush1.xpose.msra.mxu0 0.0
    %939 = vmatprep.subr.mxu0 0.0
    %940 = vmatpush1.xpose.msra.mxu0 0.0
    %941 = vmatprep.subr.mxu0 0.0
    %942 = vmatpush1.xpose.msra.mxu0 0.0
    %943 = vmatprep.subr.mxu0 0.0
    %944 = vmatpush1.xpose.msra.mxu0 0.0
    %945 = vmatprep.subr.mxu0 0.0
    %946 = vmatpush1.xpose.msra.mxu0 0.0
    %947 = vmatprep.subr.mxu0 0.0
    %948 = vmatpush1.xpose.msra.mxu0 0.0
    %949 = vmatprep.subr.mxu0 0.0
    %950 = vmatpush1.xpose.msra.mxu0 0.0
    %951 = vmatprep.subr.mxu0 0.0
    %952 = vmatpush1.xpose.msra.mxu0 0.0
    %953 = vmatprep.subr.mxu0 0.0
    %954 = vmatpush1.xpose.msra.mxu0 0.0
    %955 = vmatprep.mubr.f32.mxu0 0.0
    %956 = vmatmul.mubr.f32.gmra.mrb[0].mxu0 %v887
    %v957 = vpop.f32.mrb[0].mxu0
    %v958 = vadd.f32 %v268, %v957
    %v959 = vpop.f32.mrb[0].mxu0
    %960 = vdwg.mxu0
    %961 = vrot.lane.b32.xlu0 %v397, 120
    %v962 = vpop.permute.xlu0 %961
    %963 = vrot.lane.b32.xlu0 %v476, 120
    %v964 = vpop.permute.xlu0 %963
    %v965 = vsel %vm562, %v962, 0
    %v967 = vsel %vm562, %v964, 0
    %969 = vmatprep.subr.mxu0 0.0
    %970 = vmatpush1.xpose.msra.mxu0 %v967
    %971 = vmatprep.subr.mxu0 0.0
    %972 = vmatpush1.xpose.msra.mxu0 0.0
    %973 = vmatprep.subr.mxu0 0.0
    %974 = vmatpush1.xpose.msra.mxu0 0.0
    %975 = vmatprep.subr.mxu0 0.0
    %976 = vmatpush1.xpose.msra.mxu0 0.0
    %977 = vmatprep.subr.mxu0 0.0
    %978 = vmatpush1.xpose.msra.mxu0 0.0
    %979 = vmatprep.subr.mxu0 0.0
    %980 = vmatpush1.xpose.msra.mxu0 0.0
    %981 = vmatprep.subr.mxu0 0.0
    %982 = vmatpush1.xpose.msra.mxu0 0.0
    %983 = vmatprep.subr.mxu0 0.0
    %984 = vmatpush1.xpose.msra.mxu0 0.0
    %985 = vmatprep.subr.mxu0 0.0
    %986 = vmatpush1.xpose.msra.mxu0 0.0
    %987 = vmatprep.subr.mxu0 0.0
    %988 = vmatpush1.xpose.msra.mxu0 0.0
    %989 = vmatprep.subr.mxu0 0.0
    %990 = vmatpush1.xpose.msra.mxu0 0.0
    %991 = vmatprep.subr.mxu0 0.0
    %992 = vmatpush1.xpose.msra.mxu0 0.0
    %993 = vmatprep.subr.mxu0 0.0
    %994 = vmatpush1.xpose.msra.mxu0 0.0
    %995 = vmatprep.subr.mxu0 0.0
    %996 = vmatpush1.xpose.msra.mxu0 0.0
    %997 = vmatprep.subr.mxu0 0.0
    %998 = vmatpush1.xpose.msra.mxu0 0.0
    %999 = vmatprep.subr.mxu0 0.0
    %1000 = vmatpush1.xpose.msra.mxu0 0.0
    %1001 = vmatprep.subr.mxu0 0.0
    %1002 = vmatpush1.xpose.msra.mxu0 0.0
    %1003 = vmatprep.subr.mxu0 0.0
    %1004 = vmatpush1.xpose.msra.mxu0 0.0
    %1005 = vmatprep.subr.mxu0 0.0
    %1006 = vmatpush1.xpose.msra.mxu0 0.0
    %1007 = vmatprep.subr.mxu0 0.0
    %1008 = vmatpush1.xpose.msra.mxu0 0.0
    %1009 = vmatprep.subr.mxu0 0.0
    %1010 = vmatpush1.xpose.msra.mxu0 0.0
    %1011 = vmatprep.subr.mxu0 0.0
    %1012 = vmatpush1.xpose.msra.mxu0 0.0
    %1013 = vmatprep.subr.mxu0 0.0
    %1014 = vmatpush1.xpose.msra.mxu0 0.0
    %1015 = vmatprep.subr.mxu0 0.0
    %1016 = vmatpush1.xpose.msra.mxu0 0.0
    %1017 = vmatprep.subr.mxu0 0.0
    %1018 = vmatpush1.xpose.msra.mxu0 0.0
    %1019 = vmatprep.subr.mxu0 0.0
    %1020 = vmatpush1.xpose.msra.mxu0 0.0
    %1021 = vmatprep.subr.mxu0 0.0
    %1022 = vmatpush1.xpose.msra.mxu0 0.0
    %1023 = vmatprep.subr.mxu0 0.0
    %1024 = vmatpush1.xpose.msra.mxu0 0.0
    %1025 = vmatprep.subr.mxu0 0.0
    %1026 = vmatpush1.xpose.msra.mxu0 0.0
    %1027 = vmatprep.subr.mxu0 0.0
    %1028 = vmatpush1.xpose.msra.mxu0 0.0
    %1029 = vmatprep.subr.mxu0 0.0
    %1030 = vmatpush1.xpose.msra.mxu0 0.0
    %1031 = vmatprep.subr.mxu0 0.0
    %1032 = vmatpush1.xpose.msra.mxu0 0.0
    %1033 = vmatprep.mubr.f32.mxu0 0.0
    %1034 = vmatmul.mubr.f32.gmra.mrb[0].mxu0 %v965
    %v1035 = vpop.f32.mrb[0].mxu0
    %v1036 = vadd.f32 %v269, %v1035
    %v1037 = vpop.f32.mrb[0].mxu0
    %1038 = vdwg.mxu0
    %v1039 = vsel %vm562, %v958, -inf
    %1040 = vmax.xlane.f32.xlu0 %v1039
    %v1041 = vpop.xlane.xlu0 %1040
    %v1042 = vsel %vm562, %v1036, -inf
    %1043 = vmax.xlane.f32.xlu0 %v1042
    %v1044 = vpop.xlane.xlu0 %1043
    %v1045 = vsub.f32 %v958, %v1041
    %v1046 = vsub.f32 %v1036, %v1044
    %v1047 = vmul.f32 %v1045, 1.442695
    %v1048 = vpow.pop %v1047
    %v1049 = vmul.f32 %v1046, 1.442695
    %v1050 = vpow.pop %v1049
    %v1051 = vsel %vm562, %v1048, 0.0
    %1052 = vadd.xlane.f32.xlu0 %v1051
    %v1053 = vpop.xlane.xlu0 %1052
    %v1054 = vsel %vm562, %v1050, 0.0
    %1055 = vadd.xlane.f32.xlu0 %v1054
    %v1056 = vpop.xlane.xlu0 %1055
    %v1057 = vrcp.pop %v1053
    %v1058 = vrcp.pop %v1056
    %v1059 = vmul.f32 %v1048, %v1057
    %v1060 = vmul.f32 %v1050, %v1058
    %1062 = vrot.lane.b32.xlu0 %v550, 120
    %v1063 = vpop.permute.xlu0 %1062
    %v1066 = vsel %vm562, %v1059, 0
    %1068 = vmatprep.subr.mxu0 0.0
    %1069 = vmatpush1.msra.mxu0 %v1063
    %1070 = vmatprep.subr.mxu0 0.0
    %1071 = vmatpush1.msra.mxu0 0.0
    %1072 = vmatprep.subr.mxu0 0.0
    %1073 = vmatpush1.msra.mxu0 0.0
    %1074 = vmatprep.subr.mxu0 0.0
    %1075 = vmatpush1.msra.mxu0 0.0
    %1076 = vmatprep.subr.mxu0 0.0
    %1077 = vmatpush1.msra.mxu0 0.0
    %1078 = vmatprep.subr.mxu0 0.0
    %1079 = vmatpush1.msra.mxu0 0.0
    %1080 = vmatprep.subr.mxu0 0.0
    %1081 = vmatpush1.msra.mxu0 0.0
    %1082 = vmatprep.subr.mxu0 0.0
    %1083 = vmatpush1.msra.mxu0 0.0
    %1084 = vmatprep.subr.mxu0 0.0
    %1085 = vmatpush1.msra.mxu0 0.0
    %1086 = vmatprep.subr.mxu0 0.0
    %1087 = vmatpush1.msra.mxu0 0.0
    %1088 = vmatprep.subr.mxu0 0.0
    %1089 = vmatpush1.msra.mxu0 0.0
    %1090 = vmatprep.subr.mxu0 0.0
    %1091 = vmatpush1.msra.mxu0 0.0
    %1092 = vmatprep.subr.mxu0 0.0
    %1093 = vmatpush1.msra.mxu0 0.0
    %1094 = vmatprep.subr.mxu0 0.0
    %1095 = vmatpush1.msra.mxu0 0.0
    %1096 = vmatprep.subr.mxu0 0.0
    %1097 = vmatpush1.msra.mxu0 0.0
    %1098 = vmatprep.subr.mxu0 0.0
    %1099 = vmatpush1.msra.mxu0 0.0
    %1100 = vmatprep.subr.mxu0 0.0
    %1101 = vmatpush1.msra.mxu0 0.0
    %1102 = vmatprep.subr.mxu0 0.0
    %1103 = vmatpush1.msra.mxu0 0.0
    %1104 = vmatprep.subr.mxu0 0.0
    %1105 = vmatpush1.msra.mxu0 0.0
    %1106 = vmatprep.subr.mxu0 0.0
    %1107 = vmatpush1.msra.mxu0 0.0
    %1108 = vmatprep.subr.mxu0 0.0
    %1109 = vmatpush1.msra.mxu0 0.0
    %1110 = vmatprep.subr.mxu0 0.0
    %1111 = vmatpush1.msra.mxu0 0.0
    %1112 = vmatprep.subr.mxu0 0.0
    %1113 = vmatpush1.msra.mxu0 0.0
    %1114 = vmatprep.subr.mxu0 0.0
    %1115 = vmatpush1.msra.mxu0 0.0
    %1116 = vmatprep.subr.mxu0 0.0
    %1117 = vmatpush1.msra.mxu0 0.0
    %1118 = vmatprep.subr.mxu0 0.0
    %1119 = vmatpush1.msra.mxu0 0.0
    %1120 = vmatprep.subr.mxu0 0.0
    %1121 = vmatpush1.msra.mxu0 0.0
    %1122 = vmatprep.subr.mxu0 0.0
    %1123 = vmatpush1.msra.mxu0 0.0
    %1124 = vmatprep.subr.mxu0 0.0
    %1125 = vmatpush1.msra.mxu0 0.0
    %1126 = vmatprep.subr.mxu0 0.0
    %1127 = vmatpush1.msra.mxu0 0.0
    %1128 = vmatprep.subr.mxu0 0.0
    %1129 = vmatpush1.msra.mxu0 0.0
    %1130 = vmatprep.subr.mxu0 0.0
    %1131 = vmatpush1.msra.mxu0 0.0
    %1132 = vmatprep.mubr.f32.mxu0 0.0
    %1133 = vmatmul.mubr.f32.gmra.mrb[0].mxu0 %v1066
    %v1134 = vpop.f32.mrb[0].mxu0
    %v1135 = vadd.f32 0.0, %v1134
    %v1136 = vpop.f32.mrb[0].mxu0
    %1137 = vdwg.mxu0
    %1139 = vrot.lane.b32.xlu0 %v555, 120
    %v1140 = vpop.permute.xlu0 %1139
    %v1143 = vsel %vm562, %v1060, 0
    %1145 = vmatprep.subr.mxu0 0.0
    %1146 = vmatpush1.msra.mxu0 %v1140
    %1147 = vmatprep.subr.mxu0 0.0
    %1148 = vmatpush1.msra.mxu0 0.0
    %1149 = vmatprep.subr.mxu0 0.0
    %1150 = vmatpush1.msra.mxu0 0.0
    %1151 = vmatprep.subr.mxu0 0.0
    %1152 = vmatpush1.msra.mxu0 0.0
    %1153 = vmatprep.subr.mxu0 0.0
    %1154 = vmatpush1.msra.mxu0 0.0
    %1155 = vmatprep.subr.mxu0 0.0
    %1156 = vmatpush1.msra.mxu0 0.0
    %1157 = vmatprep.subr.mxu0 0.0
    %1158 = vmatpush1.msra.mxu0 0.0
    %1159 = vmatprep.subr.mxu0 0.0
    %1160 = vmatpush1.msra.mxu0 0.0
    %1161 = vmatprep.subr.mxu0 0.0
    %1162 = vmatpush1.msra.mxu0 0.0
    %1163 = vmatprep.subr.mxu0 0.0
    %1164 = vmatpush1.msra.mxu0 0.0
    %1165 = vmatprep.subr.mxu0 0.0
    %1166 = vmatpush1.msra.mxu0 0.0
    %1167 = vmatprep.subr.mxu0 0.0
    %1168 = vmatpush1.msra.mxu0 0.0
    %1169 = vmatprep.subr.mxu0 0.0
    %1170 = vmatpush1.msra.mxu0 0.0
    %1171 = vmatprep.subr.mxu0 0.0
    %1172 = vmatpush1.msra.mxu0 0.0
    %1173 = vmatprep.subr.mxu0 0.0
    %1174 = vmatpush1.msra.mxu0 0.0
    %1175 = vmatprep.subr.mxu0 0.0
    %1176 = vmatpush1.msra.mxu0 0.0
    %1177 = vmatprep.subr.mxu0 0.0
    %1178 = vmatpush1.msra.mxu0 0.0
    %1179 = vmatprep.subr.mxu0 0.0
    %1180 = vmatpush1.msra.mxu0 0.0
    %1181 = vmatprep.subr.mxu0 0.0
    %1182 = vmatpush1.msra.mxu0 0.0
    %1183 = vmatprep.subr.mxu0 0.0
    %1184 = vmatpush1.msra.mxu0 0.0
    %1185 = vmatprep.subr.mxu0 0.0
    %1186 = vmatpush1.msra.mxu0 0.0
    %1187 = vmatprep.subr.mxu0 0.0
    %1188 = vmatpush1.msra.mxu0 0.0
    %1189 = vmatprep.subr.mxu0 0.0
    %1190 = vmatpush1.msra.mxu0 0.0
    %1191 = vmatprep.subr.mxu0 0.0
    %1192 = vmatpush1.msra.mxu0 0.0
    %1193 = vmatprep.subr.mxu0 0.0
    %1194 = vmatpush1.msra.mxu0 0.0
    %1195 = vmatprep.subr.mxu0 0.0
    %1196 = vmatpush1.msra.mxu0 0.0
    %1197 = vmatprep.subr.mxu0 0.0
    %1198 = vmatpush1.msra.mxu0 0.0
    %1199 = vmatprep.subr.mxu0 0.0
    %1200 = vmatpush1.msra.mxu0 0.0
    %1201 = vmatprep.subr.mxu0 0.0
    %1202 = vmatpush1.msra.mxu0 0.0
    %1203 = vmatprep.subr.mxu0 0.0
    %1204 = vmatpush1.msra.mxu0 0.0
    %1205 = vmatprep.subr.mxu0 0.0
    %1206 = vmatpush1.msra.mxu0 0.0
    %1207 = vmatprep.subr.mxu0 0.0
    %1208 = vmatpush1.msra.mxu0 0.0
    %1209 = vmatprep.mubr.f32.mxu0 0.0
    %1210 = vmatmul.mubr.f32.gmra.mrb[0].mxu0 %v1143
    %v1211 = vpop.f32.mrb[0].mxu0
    %v1212 = vadd.f32 0.0, %v1211
    %v1213 = vpop.f32.mrb[0].mxu0
    %1214 = vdwg.mxu0
    %v1216 = vsel %vm562, %v1135, 0
    %v1219 = vsel %vm562, %v1212, 0
    %1221 = vmatprep.subr.mxu0 0.0
    %1222 = vmatpush1.msra.mxu0 %v559
    %1223 = vmatprep.subr.mxu0 0.0
    %1224 = vmatpush1.msra.mxu0 0.0
    %1225 = vmatprep.subr.mxu0 0.0
    %1226 = vmatpush1.msra.mxu0 0.0
    %1227 = vmatprep.subr.mxu0 0.0
    %1228 = vmatpush1.msra.mxu0 0.0
    %1229 = vmatprep.subr.mxu0 0.0
    %1230 = vmatpush1.msra.mxu0 0.0
    %1231 = vmatprep.subr.mxu0 0.0
    %1232 = vmatpush1.msra.mxu0 0.0
    %1233 = vmatprep.subr.mxu0 0.0
    %1234 = vmatpush1.msra.mxu0 0.0
    %1235 = vmatprep.subr.mxu0 0.0
    %1236 = vmatpush1.msra.mxu0 0.0
    %1237 = vmatprep.subr.mxu0 0.0
    %1238 = vmatpush1.msra.mxu0 0.0
    %1239 = vmatprep.subr.mxu0 0.0
    %1240 = vmatpush1.msra.mxu0 0.0
    %1241 = vmatprep.subr.mxu0 0.0
    %1242 = vmatpush1.msra.mxu0 0.0
    %1243 = vmatprep.subr.mxu0 0.0
    %1244 = vmatpush1.msra.mxu0 0.0
    %1245 = vmatprep.subr.mxu0 0.0
    %1246 = vmatpush1.msra.mxu0 0.0
    %1247 = vmatprep.subr.mxu0 0.0
    %1248 = vmatpush1.msra.mxu0 0.0
    %1249 = vmatprep.subr.mxu0 0.0
    %1250 = vmatpush1.msra.mxu0 0.0
    %1251 = vmatprep.subr.mxu0 0.0
    %1252 = vmatpush1.msra.mxu0 0.0
    %1253 = vmatprep.subr.mxu0 0.0
    %1254 = vmatpush1.msra.mxu0 0.0
    %1255 = vmatprep.subr.mxu0 0.0
    %1256 = vmatpush1.msra.mxu0 0.0
    %1257 = vmatprep.subr.mxu0 0.0
    %1258 = vmatpush1.msra.mxu0 0.0
    %1259 = vmatprep.subr.mxu0 0.0
    %1260 = vmatpush1.msra.mxu0 0.0
    %1261 = vmatprep.subr.mxu0 0.0
    %1262 = vmatpush1.msra.mxu0 0.0
    %1263 = vmatprep.subr.mxu0 0.0
    %1264 = vmatpush1.msra.mxu0 0.0
    %1265 = vmatprep.subr.mxu0 0.0
    %1266 = vmatpush1.msra.mxu0 0.0
    %1267 = vmatprep.subr.mxu0 0.0
    %1268 = vmatpush1.msra.mxu0 0.0
    %1269 = vmatprep.subr.mxu0 0.0
    %1270 = vmatpush1.msra.mxu0 0.0
    %1271 = vmatprep.subr.mxu0 0.0
    %1272 = vmatpush1.msra.mxu0 0.0
    %1273 = vmatprep.subr.mxu0 0.0
    %1274 = vmatpush1.msra.mxu0 0.0
    %1275 = vmatprep.subr.mxu0 0.0
    %1276 = vmatpush1.msra.mxu0 0.0
    %1277 = vmatprep.subr.mxu0 0.0
    %1278 = vmatpush1.msra.mxu0 0.0
    %1279 = vmatprep.subr.mxu0 0.0
    %1280 = vmatpush1.msra.mxu0 0.0
    %1281 = vmatprep.subr.mxu0 0.0
    %1282 = vmatpush1.msra.mxu0 0.0
    %1283 = vmatprep.subr.mxu0 0.0
    %1284 = vmatpush1.msra.mxu0 0.0
    %1285 = vmatprep.mubr.f32.mxu0 0.0
    %1286 = vmatmul.mubr.f32.gmra.mrb[0].mxu0 %v1216
    %v1287 = vpop.f32.mrb[0].mxu0
    %v1288 = vadd.f32 0.0, %v1287
    %v1289 = vpop.f32.mrb[0].mxu0
    %1290 = vmatprep.mubr.f32.mxu0 0.0
    %1291 = vmatmul.mubr.f32.gmra.mrb[0].mxu0 %v1219
    %v1292 = vpop.f32.mrb[0].mxu0
    %v1293 = vadd.f32 0.0, %v1292
    %v1294 = vpop.f32.mrb[0].mxu0
    %1295 = vdwg.mxu0
    %v1297 = vsel %vm562, %v807, 0
    %v1300 = vsel %vm562, %v880, 0
    %1302 = vmatprep.subr.mxu0 0.0
    %1303 = vmatpush1.msra.mxu0 %v558
    %1304 = vmatprep.subr.mxu0 0.0
    %1305 = vmatpush1.msra.mxu0 0.0
    %1306 = vmatprep.subr.mxu0 0.0
    %1307 = vmatpush1.msra.mxu0 0.0
    %1308 = vmatprep.subr.mxu0 0.0
    %1309 = vmatpush1.msra.mxu0 0.0
    %1310 = vmatprep.subr.mxu0 0.0
    %1311 = vmatpush1.msra.mxu0 0.0
    %1312 = vmatprep.subr.mxu0 0.0
    %1313 = vmatpush1.msra.mxu0 0.0
    %1314 = vmatprep.subr.mxu0 0.0
    %1315 = vmatpush1.msra.mxu0 0.0
    %1316 = vmatprep.subr.mxu0 0.0
    %1317 = vmatpush1.msra.mxu0 0.0
    %1318 = vmatprep.subr.mxu0 0.0
    %1319 = vmatpush1.msra.mxu0 0.0
    %1320 = vmatprep.subr.mxu0 0.0
    %1321 = vmatpush1.msra.mxu0 0.0
    %1322 = vmatprep.subr.mxu0 0.0
    %1323 = vmatpush1.msra.mxu0 0.0
    %1324 = vmatprep.subr.mxu0 0.0
    %1325 = vmatpush1.msra.mxu0 0.0
    %1326 = vmatprep.subr.mxu0 0.0
    %1327 = vmatpush1.msra.mxu0 0.0
    %1328 = vmatprep.subr.mxu0 0.0
    %1329 = vmatpush1.msra.mxu0 0.0
    %1330 = vmatprep.subr.mxu0 0.0
    %1331 = vmatpush1.msra.mxu0 0.0
    %1332 = vmatprep.subr.mxu0 0.0
    %1333 = vmatpush1.msra.mxu0 0.0
    %1334 = vmatprep.subr.mxu0 0.0
    %1335 = vmatpush1.msra.mxu0 0.0
    %1336 = vmatprep.subr.mxu0 0.0
    %1337 = vmatpush1.msra.mxu0 0.0
    %1338 = vmatprep.subr.mxu0 0.0
    %1339 = vmatpush1.msra.mxu0 0.0
    %1340 = vmatprep.subr.mxu0 0.0
    %1341 = vmatpush1.msra.mxu0 0.0
    %1342 = vmatprep.subr.mxu0 0.0
    %1343 = vmatpush1.msra.mxu0 0.0
    %1344 = vmatprep.subr.mxu0 0.0
    %1345 = vmatpush1.msra.mxu0 0.0
    %1346 = vmatprep.subr.mxu0 0.0
    %1347 = vmatpush1.msra.mxu0 0.0
    %1348 = vmatprep.subr.mxu0 0.0
    %1349 = vmatpush1.msra.mxu0 0.0
    %1350 = vmatprep.subr.mxu0 0.0
    %1351 = vmatpush1.msra.mxu0 0.0
    %1352 = vmatprep.subr.mxu0 0.0
    %1353 = vmatpush1.msra.mxu0 0.0
    %1354 = vmatprep.subr.mxu0 0.0
    %1355 = vmatpush1.msra.mxu0 0.0
    %1356 = vmatprep.subr.mxu0 0.0
    %1357 = vmatpush1.msra.mxu0 0.0
    %1358 = vmatprep.subr.mxu0 0.0
    %1359 = vmatpush1.msra.mxu0 0.0
    %1360 = vmatprep.subr.mxu0 0.0
    %1361 = vmatpush1.msra.mxu0 0.0
    %1362 = vmatprep.subr.mxu0 0.0
    %1363 = vmatpush1.msra.mxu0 0.0
    %1364 = vmatprep.subr.mxu0 0.0
    %1365 = vmatpush1.msra.mxu0 0.0
    %1366 = vmatprep.mubr.f32.mxu0 0.0
    %1367 = vmatmul.mubr.f32.gmra.mrb[0].mxu0 %v1297
    %v1368 = vpop.f32.mrb[0].mxu0
    %v1369 = vadd.f32 %v1288, %v1368
    %v1370 = vpop.f32.mrb[0].mxu0
    %1371 = vmatprep.mubr.f32.mxu0 0.0
    %1372 = vmatmul.mubr.f32.gmra.mrb[0].mxu0 %v1300
    %v1373 = vpop.f32.mrb[0].mxu0
    %v1374 = vadd.f32 %v1293, %v1373
    %v1375 = vpop.f32.mrb[0].mxu0
    %1376 = vdwg.mxu0
    %1377 = vrot.lane.b32.xlu0 %v392, 112
    %v1378 = vpop.permute.xlu0 %1377
    %1379 = vrot.lane.b32.xlu0 %v471, 112
    %v1380 = vpop.permute.xlu0 %1379
    %v1381 = vsel %vm562, %v1378, 0
    %v1383 = vsel %vm562, %v1380, 0
    %1385 = vmatprep.subr.mxu0 0.0
    %1386 = vmatpush1.xpose.msra.mxu0 %v1383
    %1387 = vmatprep.subr.mxu0 0.0
    %1388 = vmatpush1.xpose.msra.mxu0 0.0
    %1389 = vmatprep.subr.mxu0 0.0
    %1390 = vmatpush1.xpose.msra.mxu0 0.0
    %1391 = vmatprep.subr.mxu0 0.0
    %1392 = vmatpush1.xpose.msra.mxu0 0.0
    %1393 = vmatprep.subr.mxu0 0.0
    %1394 = vmatpush1.xpose.msra.mxu0 0.0
    %1395 = vmatprep.subr.mxu0 0.0
    %1396 = vmatpush1.xpose.msra.mxu0 0.0
    %1397 = vmatprep.subr.mxu0 0.0
    %1398 = vmatpush1.xpose.msra.mxu0 0.0
    %1399 = vmatprep.subr.mxu0 0.0
    %1400 = vmatpush1.xpose.msra.mxu0 0.0
    %1401 = vmatprep.subr.mxu0 0.0
    %1402 = vmatpush1.xpose.msra.mxu0 0.0
    %1403 = vmatprep.subr.mxu0 0.0
    %1404 = vmatpush1.xpose.msra.mxu0 0.0
    %1405 = vmatprep.subr.mxu0 0.0
    %1406 = vmatpush1.xpose.msra.mxu0 0.0
    %1407 = vmatprep.subr.mxu0 0.0
    %1408 = vmatpush1.xpose.msra.mxu0 0.0
    %1409 = vmatprep.subr.mxu0 0.0
    %1410 = vmatpush1.xpose.msra.mxu0 0.0
    %1411 = vmatprep.subr.mxu0 0.0
    %1412 = vmatpush1.xpose.msra.mxu0 0.0
    %1413 = vmatprep.subr.mxu0 0.0
    %1414 = vmatpush1.xpose.msra.mxu0 0.0
    %1415 = vmatprep.subr.mxu0 0.0
    %1416 = vmatpush1.xpose.msra.mxu0 0.0
    %1417 = vmatprep.subr.mxu0 0.0
    %1418 = vmatpush1.xpose.msra.mxu0 0.0
    %1419 = vmatprep.subr.mxu0 0.0
    %1420 = vmatpush1.xpose.msra.mxu0 0.0
    %1421 = vmatprep.subr.mxu0 0.0
    %1422 = vmatpush1.xpose.msra.mxu0 0.0
    %1423 = vmatprep.subr.mxu0 0.0
    %1424 = vmatpush1.xpose.msra.mxu0 0.0
    %1425 = vmatprep.subr.mxu0 0.0
    %1426 = vmatpush1.xpose.msra.mxu0 0.0
    %1427 = vmatprep.subr.mxu0 0.0
    %1428 = vmatpush1.xpose.msra.mxu0 0.0
    %1429 = vmatprep.subr.mxu0 0.0
    %1430 = vmatpush1.xpose.msra.mxu0 0.0
    %1431 = vmatprep.subr.mxu0 0.0
    %1432 = vmatpush1.xpose.msra.mxu0 0.0
    %1433 = vmatprep.subr.mxu0 0.0
    %1434 = vmatpush1.xpose.msra.mxu0 0.0
    %1435 = vmatprep.subr.mxu0 0.0
    %1436 = vmatpush1.xpose.msra.mxu0 0.0
    %1437 = vmatprep.subr.mxu0 0.0
    %1438 = vmatpush1.xpose.msra.mxu0 0.0
    %1439 = vmatprep.subr.mxu0 0.0
    %1440 = vmatpush1.xpose.msra.mxu0 0.0
    %1441 = vmatprep.subr.mxu0 0.0
    %1442 = vmatpush1.xpose.msra.mxu0 0.0
    %1443 = vmatprep.subr.mxu0 0.0
    %1444 = vmatpush1.xpose.msra.mxu0 0.0
    %1445 = vmatprep.subr.mxu0 0.0
    %1446 = vmatpush1.xpose.msra.mxu0 0.0
    %1447 = vmatprep.subr.mxu0 0.0
    %1448 = vmatpush1.xpose.msra.mxu0 0.0
    %1449 = vmatprep.mubr.f32.mxu0 0.0
    %1450 = vmatmul.mubr.f32.gmra.mrb[0].mxu0 %v1381
    %v1451 = vpop.f32.mrb[0].mxu0
    %v1452 = vadd.f32 %v270, %v1451
    %v1453 = vpop.f32.mrb[0].mxu0
    %1454 = vdwg.mxu0
    %1455 = vrot.lane.b32.xlu0 %v397, 112
    %v1456 = vpop.permute.xlu0 %1455
    %1457 = vrot.lane.b32.xlu0 %v476, 112
    %v1458 = vpop.permute.xlu0 %1457
    %v1459 = vsel %vm562, %v1456, 0
    %v1461 = vsel %vm562, %v1458, 0
    %1463 = vmatprep.subr.mxu0 0.0
    %1464 = vmatpush1.xpose.msra.mxu0 %v1461
    %1465 = vmatprep.subr.mxu0 0.0
    %1466 = vmatpush1.xpose.msra.mxu0 0.0
    %1467 = vmatprep.subr.mxu0 0.0
    %1468 = vmatpush1.xpose.msra.mxu0 0.0
    %1469 = vmatprep.subr.mxu0 0.0
    %1470 = vmatpush1.xpose.msra.mxu0 0.0
    %1471 = vmatprep.subr.mxu0 0.0
    %1472 = vmatpush1.xpose.msra.mxu0 0.0
    %1473 = vmatprep.subr.mxu0 0.0
    %1474 = vmatpush1.xpose.msra.mxu0 0.0
    %1475 = vmatprep.subr.mxu0 0.0
    %1476 = vmatpush1.xpose.msra.mxu0 0.0
    %1477 = vmatprep.subr.mxu0 0.0
    %1478 = vmatpush1.xpose.msra.mxu0 0.0
    %1479 = vmatprep.subr.mxu0 0.0
    %1480 = vmatpush1.xpose.msra.mxu0 0.0
    %1481 = vmatprep.subr.mxu0 0.0
    %1482 = vmatpush1.xpose.msra.mxu0 0.0
    %1483 = vmatprep.subr.mxu0 0.0
    %1484 = vmatpush1.xpose.msra.mxu0 0.0
    %1485 = vmatprep.subr.mxu0 0.0
    %1486 = vmatpush1.xpose.msra.mxu0 0.0
    %1487 = vmatprep.subr.mxu0 0.0
    %1488 = vmatpush1.xpose.msra.mxu0 0.0
    %1489 = vmatprep.subr.mxu0 0.0
    %1490 = vmatpush1.xpose.msra.mxu0 0.0
    %1491 = vmatprep.subr.mxu0 0.0
    %1492 = vmatpush1.xpose.msra.mxu0 0.0
    %1493 = vmatprep.subr.mxu0 0.0
    %1494 = vmatpush1.xpose.msra.mxu0 0.0
    %1495 = vmatprep.subr.mxu0 0.0
    %1496 = vmatpush1.xpose.msra.mxu0 0.0
    %1497 = vmatprep.subr.mxu0 0.0
    %1498 = vmatpush1.xpose.msra.mxu0 0.0
    %1499 = vmatprep.subr.mxu0 0.0
    %1500 = vmatpush1.xpose.msra.mxu0 0.0
    %1501 = vmatprep.subr.mxu0 0.0
    %1502 = vmatpush1.xpose.msra.mxu0 0.0
    %1503 = vmatprep.subr.mxu0 0.0
    %1504 = vmatpush1.xpose.msra.mxu0 0.0
    %1505 = vmatprep.subr.mxu0 0.0
    %1506 = vmatpush1.xpose.msra.mxu0 0.0
    %1507 = vmatprep.subr.mxu0 0.0
    %1508 = vmatpush1.xpose.msra.mxu0 0.0
    %1509 = vmatprep.subr.mxu0 0.0
    %1510 = vmatpush1.xpose.msra.mxu0 0.0
    %1511 = vmatprep.subr.mxu0 0.0
    %1512 = vmatpush1.xpose.msra.mxu0 0.0
    %1513 = vmatprep.subr.mxu0 0.0
    %1514 = vmatpush1.xpose.msra.mxu0 0.0
    %1515 = vmatprep.subr.mxu0 0.0
    %1516 = vmatpush1.xpose.msra.mxu0 0.0
    %1517 = vmatprep.subr.mxu0 0.0
    %1518 = vmatpush1.xpose.msra.mxu0 0.0
    %1519 = vmatprep.subr.mxu0 0.0
    %1520 = vmatpush1.xpose.msra.mxu0 0.0
    %1521 = vmatprep.subr.mxu0 0.0
    %1522 = vmatpush1.xpose.msra.mxu0 0.0
    %1523 = vmatprep.subr.mxu0 0.0
    %1524 = vmatpush1.xpose.msra.mxu0 0.0
    %1525 = vmatprep.subr.mxu0 0.0
    %1526 = vmatpush1.xpose.msra.mxu0 0.0
    %1527 = vmatprep.mubr.f32.mxu0 0.0
    %1528 = vmatmul.mubr.f32.gmra.mrb[0].mxu0 %v1459
    %v1529 = vpop.f32.mrb[0].mxu0
    %v1530 = vadd.f32 %v271, %v1529
    %v1531 = vpop.f32.mrb[0].mxu0
    %1532 = vdwg.mxu0
    %v1533 = vsel %vm562, %v1452, -inf
    %1534 = vmax.xlane.f32.xlu0 %v1533
    %v1535 = vpop.xlane.xlu0 %1534
    %v1536 = vsel %vm562, %v1530, -inf
    %1537 = vmax.xlane.f32.xlu0 %v1536
    %v1538 = vpop.xlane.xlu0 %1537
    %v1539 = vsub.f32 %v1452, %v1535
    %v1540 = vsub.f32 %v1530, %v1538
    %v1541 = vmul.f32 %v1539, 1.442695
    %v1542 = vpow.pop %v1541
    %v1543 = vmul.f32 %v1540, 1.442695
    %v1544 = vpow.pop %v1543
    %v1545 = vsel %vm562, %v1542, 0.0
    %1546 = vadd.xlane.f32.xlu0 %v1545
    %v1547 = vpop.xlane.xlu0 %1546
    %v1548 = vsel %vm562, %v1544, 0.0
    %1549 = vadd.xlane.f32.xlu0 %v1548
    %v1550 = vpop.xlane.xlu0 %1549
    %v1551 = vrcp.pop %v1547
    %v1552 = vrcp.pop %v1550
    %v1553 = vmul.f32 %v1542, %v1551
    %v1554 = vmul.f32 %v1544, %v1552
    %1555 = vrot.lane.b32.xlu0 %v550, 112
    %v1556 = vpop.permute.xlu0 %1555
    %v1559 = vsel %vm562, %v1553, 0
    %1561 = vmatprep.subr.mxu0 0.0
    %1562 = vmatpush1.msra.mxu0 %v1556
    %1563 = vmatprep.subr.mxu0 0.0
    %1564 = vmatpush1.msra.mxu0 0.0
    %1565 = vmatprep.subr.mxu0 0.0
    %1566 = vmatpush1.msra.mxu0 0.0
    %1567 = vmatprep.subr.mxu0 0.0
    %1568 = vmatpush1.msra.mxu0 0.0
    %1569 = vmatprep.subr.mxu0 0.0
    %1570 = vmatpush1.msra.mxu0 0.0
    %1571 = vmatprep.subr.mxu0 0.0
    %1572 = vmatpush1.msra.mxu0 0.0
    %1573 = vmatprep.subr.mxu0 0.0
    %1574 = vmatpush1.msra.mxu0 0.0
    %1575 = vmatprep.subr.mxu0 0.0
    %1576 = vmatpush1.msra.mxu0 0.0
    %1577 = vmatprep.subr.mxu0 0.0
    %1578 = vmatpush1.msra.mxu0 0.0
    %1579 = vmatprep.subr.mxu0 0.0
    %1580 = vmatpush1.msra.mxu0 0.0
    %1581 = vmatprep.subr.mxu0 0.0
    %1582 = vmatpush1.msra.mxu0 0.0
    %1583 = vmatprep.subr.mxu0 0.0
    %1584 = vmatpush1.msra.mxu0 0.0
    %1585 = vmatprep.subr.mxu0 0.0
    %1586 = vmatpush1.msra.mxu0 0.0
    %1587 = vmatprep.subr.mxu0 0.0
    %1588 = vmatpush1.msra.mxu0 0.0
    %1589 = vmatprep.subr.mxu0 0.0
    %1590 = vmatpush1.msra.mxu0 0.0
    %1591 = vmatprep.subr.mxu0 0.0
    %1592 = vmatpush1.msra.mxu0 0.0
    %1593 = vmatprep.subr.mxu0 0.0
    %1594 = vmatpush1.msra.mxu0 0.0
    %1595 = vmatprep.subr.mxu0 0.0
    %1596 = vmatpush1.msra.mxu0 0.0
    %1597 = vmatprep.subr.mxu0 0.0
    %1598 = vmatpush1.msra.mxu0 0.0
    %1599 = vmatprep.subr.mxu0 0.0
    %1600 = vmatpush1.msra.mxu0 0.0
    %1601 = vmatprep.subr.mxu0 0.0
    %1602 = vmatpush1.msra.mxu0 0.0
    %1603 = vmatprep.subr.mxu0 0.0
    %1604 = vmatpush1.msra.mxu0 0.0
    %1605 = vmatprep.subr.mxu0 0.0
    %1606 = vmatpush1.msra.mxu0 0.0
    %1607 = vmatprep.subr.mxu0 0.0
    %1608 = vmatpush1.msra.mxu0 0.0
    %1609 = vmatprep.subr.mxu0 0.0
    %1610 = vmatpush1.msra.mxu0 0.0
    %1611 = vmatprep.subr.mxu0 0.0
    %1612 = vmatpush1.msra.mxu0 0.0
    %1613 = vmatprep.subr.mxu0 0.0
    %1614 = vmatpush1.msra.mxu0 0.0
    %1615 = vmatprep.subr.mxu0 0.0
    %1616 = vmatpush1.msra.mxu0 0.0
    %1617 = vmatprep.subr.mxu0 0.0
    %1618 = vmatpush1.msra.mxu0 0.0
    %1619 = vmatprep.subr.mxu0 0.0
    %1620 = vmatpush1.msra.mxu0 0.0
    %1621 = vmatprep.subr.mxu0 0.0
    %1622 = vmatpush1.msra.mxu0 0.0
    %1623 = vmatprep.subr.mxu0 0.0
    %1624 = vmatpush1.msra.mxu0 0.0
    %1625 = vmatprep.mubr.f32.mxu0 0.0
    %1626 = vmatmul.mubr.f32.gmra.mrb[0].mxu0 %v1559
    %v1627 = vpop.f32.mrb[0].mxu0
    %v1628 = vadd.f32 0.0, %v1627
    %v1629 = vpop.f32.mrb[0].mxu0
    %1630 = vdwg.mxu0
    %1631 = vrot.lane.b32.xlu0 %v555, 112
    %v1632 = vpop.permute.xlu0 %1631
    %v1635 = vsel %vm562, %v1554, 0
    %1637 = vmatprep.subr.mxu0 0.0
    %1638 = vmatpush1.msra.mxu0 %v1632
    %1639 = vmatprep.subr.mxu0 0.0
    %1640 = vmatpush1.msra.mxu0 0.0
    %1641 = vmatprep.subr.mxu0 0.0
    %1642 = vmatpush1.msra.mxu0 0.0
    %1643 = vmatprep.subr.mxu0 0.0
    %1644 = vmatpush1.msra.mxu0 0.0
    %1645 = vmatprep.subr.mxu0 0.0
    %1646 = vmatpush1.msra.mxu0 0.0
    %1647 = vmatprep.subr.mxu0 0.0
    %1648 = vmatpush1.msra.mxu0 0.0
    %1649 = vmatprep.subr.mxu0 0.0
    %1650 = vmatpush1.msra.mxu0 0.0
    %1651 = vmatprep.subr.mxu0 0.0
    %1652 = vmatpush1.msra.mxu0 0.0
    %1653 = vmatprep.subr.mxu0 0.0
    %1654 = vmatpush1.msra.mxu0 0.0
    %1655 = vmatprep.subr.mxu0 0.0
    %1656 = vmatpush1.msra.mxu0 0.0
    %1657 = vmatprep.subr.mxu0 0.0
    %1658 = vmatpush1.msra.mxu0 0.0
    %1659 = vmatprep.subr.mxu0 0.0
    %1660 = vmatpush1.msra.mxu0 0.0
    %1661 = vmatprep.subr.mxu0 0.0
    %1662 = vmatpush1.msra.mxu0 0.0
    %1663 = vmatprep.subr.mxu0 0.0
    %1664 = vmatpush1.msra.mxu0 0.0
    %1665 = vmatprep.subr.mxu0 0.0
    %1666 = vmatpush1.msra.mxu0 0.0
    %1667 = vmatprep.subr.mxu0 0.0
    %1668 = vmatpush1.msra.mxu0 0.0
    %1669 = vmatprep.subr.mxu0 0.0
    %1670 = vmatpush1.msra.mxu0 0.0
    %1671 = vmatprep.subr.mxu0 0.0
    %1672 = vmatpush1.msra.mxu0 0.0
    %1673 = vmatprep.subr.mxu0 0.0
    %1674 = vmatpush1.msra.mxu0 0.0
    %1675 = vmatprep.subr.mxu0 0.0
    %1676 = vmatpush1.msra.mxu0 0.0
    %1677 = vmatprep.subr.mxu0 0.0
    %1678 = vmatpush1.msra.mxu0 0.0
    %1679 = vmatprep.subr.mxu0 0.0
    %1680 = vmatpush1.msra.mxu0 0.0
    %1681 = vmatprep.subr.mxu0 0.0
    %1682 = vmatpush1.msra.mxu0 0.0
    %1683 = vmatprep.subr.mxu0 0.0
    %1684 = vmatpush1.msra.mxu0 0.0
    %1685 = vmatprep.subr.mxu0 0.0
    %1686 = vmatpush1.msra.mxu0 0.0
    %1687 = vmatprep.subr.mxu0 0.0
    %1688 = vmatpush1.msra.mxu0 0.0
    %1689 = vmatprep.subr.mxu0 0.0
    %1690 = vmatpush1.msra.mxu0 0.0
    %1691 = vmatprep.subr.mxu0 0.0
    %1692 = vmatpush1.msra.mxu0 0.0
    %1693 = vmatprep.subr.mxu0 0.0
    %1694 = vmatpush1.msra.mxu0 0.0
    %1695 = vmatprep.subr.mxu0 0.0
    %1696 = vmatpush1.msra.mxu0 0.0
    %1697 = vmatprep.subr.mxu0 0.0
    %1698 = vmatpush1.msra.mxu0 0.0
    %1699 = vmatprep.subr.mxu0 0.0
    %1700 = vmatpush1.msra.mxu0 0.0
    %1701 = vmatprep.mubr.f32.mxu0 0.0
    %1702 = vmatmul.mubr.f32.gmra.mrb[0].mxu0 %v1635
    %v1703 = vpop.f32.mrb[0].mxu0
    %v1704 = vadd.f32 0.0, %v1703
    %v1705 = vpop.f32.mrb[0].mxu0
    %1706 = vdwg.mxu0
    %v1708 = vsel %vm562, %v1628, 0
    %v1711 = vsel %vm562, %v1704, 0
    %1713 = vmatprep.subr.mxu0 0.0
    %1714 = vmatpush1.msra.mxu0 %v560
    %1715 = vmatprep.subr.mxu0 0.0
    %1716 = vmatpush1.msra.mxu0 0.0
    %1717 = vmatprep.subr.mxu0 0.0
    %1718 = vmatpush1.msra.mxu0 0.0
    %1719 = vmatprep.subr.mxu0 0.0
    %1720 = vmatpush1.msra.mxu0 0.0
    %1721 = vmatprep.subr.mxu0 0.0
    %1722 = vmatpush1.msra.mxu0 0.0
    %1723 = vmatprep.subr.mxu0 0.0
    %1724 = vmatpush1.msra.mxu0 0.0
    %1725 = vmatprep.subr.mxu0 0.0
    %1726 = vmatpush1.msra.mxu0 0.0
    %1727 = vmatprep.subr.mxu0 0.0
    %1728 = vmatpush1.msra.mxu0 0.0
    %1729 = vmatprep.subr.mxu0 0.0
    %1730 = vmatpush1.msra.mxu0 0.0
    %1731 = vmatprep.subr.mxu0 0.0
    %1732 = vmatpush1.msra.mxu0 0.0
    %1733 = vmatprep.subr.mxu0 0.0
    %1734 = vmatpush1.msra.mxu0 0.0
    %1735 = vmatprep.subr.mxu0 0.0
    %1736 = vmatpush1.msra.mxu0 0.0
    %1737 = vmatprep.subr.mxu0 0.0
    %1738 = vmatpush1.msra.mxu0 0.0
    %1739 = vmatprep.subr.mxu0 0.0
    %1740 = vmatpush1.msra.mxu0 0.0
    %1741 = vmatprep.subr.mxu0 0.0
    %1742 = vmatpush1.msra.mxu0 0.0
    %1743 = vmatprep.subr.mxu0 0.0
    %1744 = vmatpush1.msra.mxu0 0.0
    %1745 = vmatprep.subr.mxu0 0.0
    %1746 = vmatpush1.msra.mxu0 0.0
    %1747 = vmatprep.subr.mxu0 0.0
    %1748 = vmatpush1.msra.mxu0 0.0
    %1749 = vmatprep.subr.mxu0 0.0
    %1750 = vmatpush1.msra.mxu0 0.0
    %1751 = vmatprep.subr.mxu0 0.0
    %1752 = vmatpush1.msra.mxu0 0.0
    %1753 = vmatprep.subr.mxu0 0.0
    %1754 = vmatpush1.msra.mxu0 0.0
    %1755 = vmatprep.subr.mxu0 0.0
    %1756 = vmatpush1.msra.mxu0 0.0
    %1757 = vmatprep.subr.mxu0 0.0
    %1758 = vmatpush1.msra.mxu0 0.0
    %1759 = vmatprep.subr.mxu0 0.0
    %1760 = vmatpush1.msra.mxu0 0.0
    %1761 = vmatprep.subr.mxu0 0.0
    %1762 = vmatpush1.msra.mxu0 0.0
    %1763 = vmatprep.subr.mxu0 0.0
    %1764 = vmatpush1.msra.mxu0 0.0
    %1765 = vmatprep.subr.mxu0 0.0
    %1766 = vmatpush1.msra.mxu0 0.0
    %1767 = vmatprep.subr.mxu0 0.0
    %1768 = vmatpush1.msra.mxu0 0.0
    %1769 = vmatprep.subr.mxu0 0.0
    %1770 = vmatpush1.msra.mxu0 0.0
    %1771 = vmatprep.subr.mxu0 0.0
    %1772 = vmatpush1.msra.mxu0 0.0
    %1773 = vmatprep.subr.mxu0 0.0
    %1774 = vmatpush1.msra.mxu0 0.0
    %1775 = vmatprep.subr.mxu0 0.0
    %1776 = vmatpush1.msra.mxu0 0.0
    %1777 = vmatprep.mubr.f32.mxu0 0.0
    %1778 = vmatmul.mubr.f32.gmra.mrb[0].mxu0 %v1708
    %v1779 = vpop.f32.mrb[0].mxu0
    %v1780 = vadd.f32 0.0, %v1779
    %v1781 = vpop.f32.mrb[0].mxu0
    %1782 = vmatprep.mubr.f32.mxu0 0.0
    %1783 = vmatmul.mubr.f32.gmra.mrb[0].mxu0 %v1711
    %v1784 = vpop.f32.mrb[0].mxu0
    %v1785 = vadd.f32 0.0, %v1784
    %v1786 = vpop.f32.mrb[0].mxu0
    %1787 = vdwg.mxu0
    %v1788 = vadd.f32 %v1369, %v1780
    %v1789 = vadd.f32 %v1374, %v1785
    %1790 = vrot.lane.b32.xlu0 %v392, 104
    %v1791 = vpop.permute.xlu0 %1790
    %1792 = vrot.lane.b32.xlu0 %v471, 104
    %v1793 = vpop.permute.xlu0 %1792
    %v1794 = vsel %vm562, %v1791, 0
    %v1796 = vsel %vm562, %v1793, 0
    %1798 = vmatprep.subr.mxu0 0.0
    %1799 = vmatpush1.xpose.msra.mxu0 %v1796
    %1800 = vmatprep.subr.mxu0 0.0
    %1801 = vmatpush1.xpose.msra.mxu0 0.0
    %1802 = vmatprep.subr.mxu0 0.0
    %1803 = vmatpush1.xpose.msra.mxu0 0.0
    %1804 = vmatprep.subr.mxu0 0.0
    %1805 = vmatpush1.xpose.msra.mxu0 0.0
    %1806 = vmatprep.subr.mxu0 0.0
    %1807 = vmatpush1.xpose.msra.mxu0 0.0
    %1808 = vmatprep.subr.mxu0 0.0
    %1809 = vmatpush1.xpose.msra.mxu0 0.0
    %1810 = vmatprep.subr.mxu0 0.0
    %1811 = vmatpush1.xpose.msra.mxu0 0.0
    %1812 = vmatprep.subr.mxu0 0.0
    %1813 = vmatpush1.xpose.msra.mxu0 0.0
    %1814 = vmatprep.subr.mxu0 0.0
    %1815 = vmatpush1.xpose.msra.mxu0 0.0
    %1816 = vmatprep.subr.mxu0 0.0
    %1817 = vmatpush1.xpose.msra.mxu0 0.0
    %1818 = vmatprep.subr.mxu0 0.0
    %1819 = vmatpush1.xpose.msra.mxu0 0.0
    %1820 = vmatprep.subr.mxu0 0.0
    %1821 = vmatpush1.xpose.msra.mxu0 0.0
    %1822 = vmatprep.subr.mxu0 0.0
    %1823 = vmatpush1.xpose.msra.mxu0 0.0
    %1824 = vmatprep.subr.mxu0 0.0
    %1825 = vmatpush1.xpose.msra.mxu0 0.0
    %1826 = vmatprep.subr.mxu0 0.0
    %1827 = vmatpush1.xpose.msra.mxu0 0.0
    %1828 = vmatprep.subr.mxu0 0.0
    %1829 = vmatpush1.xpose.msra.mxu0 0.0
    %1830 = vmatprep.subr.mxu0 0.0
    %1831 = vmatpush1.xpose.msra.mxu0 0.0
    %1832 = vmatprep.subr.mxu0 0.0
    %1833 = vmatpush1.xpose.msra.mxu0 0.0
    %1834 = vmatprep.subr.mxu0 0.0
    %1835 = vmatpush1.xpose.msra.mxu0 0.0
    %1836 = vmatprep.subr.mxu0 0.0
    %1837 = vmatpush1.xpose.msra.mxu0 0.0
    %1838 = vmatprep.subr.mxu0 0.0
    %1839 = vmatpush1.xpose.msra.mxu0 0.0
    %1840 = vmatprep.subr.mxu0 0.0
    %1841 = vmatpush1.xpose.msra.mxu0 0.0
    %1842 = vmatprep.subr.mxu0 0.0
    %1843 = vmatpush1.xpose.msra.mxu0 0.0
    %1844 = vmatprep.subr.mxu0 0.0
    %1845 = vmatpush1.xpose.msra.mxu0 0.0
    %1846 = vmatprep.subr.mxu0 0.0
    %1847 = vmatpush1.xpose.msra.mxu0 0.0
    %1848 = vmatprep.subr.mxu0 0.0
    %1849 = vmatpush1.xpose.msra.mxu0 0.0
    %1850 = vmatprep.subr.mxu0 0.0
    %1851 = vmatpush1.xpose.msra.mxu0 0.0
    %1852 = vmatprep.subr.mxu0 0.0
    %1853 = vmatpush1.xpose.msra.mxu0 0.0
    %1854 = vmatprep.subr.mxu0 0.0
    %1855 = vmatpush1.xpose.msra.mxu0 0.0
    %1856 = vmatprep.subr.mxu0 0.0
    %1857 = vmatpush1.xpose.msra.mxu0 0.0
    %1858 = vmatprep.subr.mxu0 0.0
    %1859 = vmatpush1.xpose.msra.mxu0 0.0
    %1860 = vmatprep.subr.mxu0 0.0
    %1861 = vmatpush1.xpose.msra.mxu0 0.0
    %1862 = vmatprep.mubr.f32.mxu0 0.0
    %1863 = vmatmul.mubr.f32.gmra.mrb[0].mxu0 %v1794
    %v1864 = vpop.f32.mrb[0].mxu0
    %v1865 = vadd.f32 %v272, %v1864
    %v1866 = vpop.f32.mrb[0].mxu0
    %1867 = vdwg.mxu0
    %1868 = vrot.lane.b32.xlu0 %v397, 104
    %v1869 = vpop.permute.xlu0 %1868
    %1870 = vrot.lane.b32.xlu0 %v476, 104
    %v1871 = vpop.permute.xlu0 %1870
    %v1872 = vsel %vm562, %v1869, 0
    %v1874 = vsel %vm562, %v1871, 0
    %1876 = vmatprep.subr.mxu0 0.0
    %1877 = vmatpush1.xpose.msra.mxu0 %v1874
    %1878 = vmatprep.subr.mxu0 0.0
    %1879 = vmatpush1.xpose.msra.mxu0 0.0
    %1880 = vmatprep.subr.mxu0 0.0
    %1881 = vmatpush1.xpose.msra.mxu0 0.0
    %1882 = vmatprep.subr.mxu0 0.0
    %1883 = vmatpush1.xpose.msra.mxu0 0.0
    %1884 = vmatprep.subr.mxu0 0.0
    %1885 = vmatpush1.xpose.msra.mxu0 0.0
    %1886 = vmatprep.subr.mxu0 0.0
    %1887 = vmatpush1.xpose.msra.mxu0 0.0
    %1888 = vmatprep.subr.mxu0 0.0
    %1889 = vmatpush1.xpose.msra.mxu0 0.0
    %1890 = vmatprep.subr.mxu0 0.0
    %1891 = vmatpush1.xpose.msra.mxu0 0.0
    %1892 = vmatprep.subr.mxu0 0.0
    %1893 = vmatpush1.xpose.msra.mxu0 0.0
    %1894 = vmatprep.subr.mxu0 0.0
    %1895 = vmatpush1.xpose.msra.mxu0 0.0
    %1896 = vmatprep.subr.mxu0 0.0
    %1897 = vmatpush1.xpose.msra.mxu0 0.0
    %1898 = vmatprep.subr.mxu0 0.0
    %1899 = vmatpush1.xpose.msra.mxu0 0.0
    %1900 = vmatprep.subr.mxu0 0.0
    %1901 = vmatpush1.xpose.msra.mxu0 0.0
    %1902 = vmatprep.subr.mxu0 0.0
    %1903 = vmatpush1.xpose.msra.mxu0 0.0
    %1904 = vmatprep.subr.mxu0 0.0
    %1905 = vmatpush1.xpose.msra.mxu0 0.0
    %1906 = vmatprep.subr.mxu0 0.0
    %1907 = vmatpush1.xpose.msra.mxu0 0.0
    %1908 = vmatprep.subr.mxu0 0.0
    %1909 = vmatpush1.xpose.msra.mxu0 0.0
    %1910 = vmatprep.subr.mxu0 0.0
    %1911 = vmatpush1.xpose.msra.mxu0 0.0
    %1912 = vmatprep.subr.mxu0 0.0
    %1913 = vmatpush1.xpose.msra.mxu0 0.0
    %1914 = vmatprep.subr.mxu0 0.0
    %1915 = vmatpush1.xpose.msra.mxu0 0.0
    %1916 = vmatprep.subr.mxu0 0.0
    %1917 = vmatpush1.xpose.msra.mxu0 0.0
    %1918 = vmatprep.subr.mxu0 0.0
    %1919 = vmatpush1.xpose.msra.mxu0 0.0
    %1920 = vmatprep.subr.mxu0 0.0
    %1921 = vmatpush1.xpose.msra.mxu0 0.0
    %1922 = vmatprep.subr.mxu0 0.0
    %1923 = vmatpush1.xpose.msra.mxu0 0.0
    %1924 = vmatprep.subr.mxu0 0.0
    %1925 = vmatpush1.xpose.msra.mxu0 0.0
    %1926 = vmatprep.subr.mxu0 0.0
    %1927 = vmatpush1.xpose.msra.mxu0 0.0
    %1928 = vmatprep.subr.mxu0 0.0
    %1929 = vmatpush1.xpose.msra.mxu0 0.0
    %1930 = vmatprep.subr.mxu0 0.0
    %1931 = vmatpush1.xpose.msra.mxu0 0.0
    %1932 = vmatprep.subr.mxu0 0.0
    %1933 = vmatpush1.xpose.msra.mxu0 0.0
    %1934 = vmatprep.subr.mxu0 0.0
    %1935 = vmatpush1.xpose.msra.mxu0 0.0
    %1936 = vmatprep.subr.mxu0 0.0
    %1937 = vmatpush1.xpose.msra.mxu0 0.0
    %1938 = vmatprep.subr.mxu0 0.0
    %1939 = vmatpush1.xpose.msra.mxu0 0.0
    %1940 = vmatprep.mubr.f32.mxu0 0.0
    %1941 = vmatmul.mubr.f32.gmra.mrb[0].mxu0 %v1872
    %v1942 = vpop.f32.mrb[0].mxu0
    %v1943 = vadd.f32 %v273, %v1942
    %v1944 = vpop.f32.mrb[0].mxu0
    %1945 = vdwg.mxu0
    %v1946 = vsel %vm562, %v1865, -inf
    %1947 = vmax.xlane.f32.xlu0 %v1946
    %v1948 = vpop.xlane.xlu0 %1947
    %v1949 = vsel %vm562, %v1943, -inf
    %1950 = vmax.xlane.f32.xlu0 %v1949
    %v1951 = vpop.xlane.xlu0 %1950
    %v1952 = vsub.f32 %v1865, %v1948
    %v1953 = vsub.f32 %v1943, %v1951
    %v1954 = vmul.f32 %v1952, 1.442695
    %v1955 = vpow.pop %v1954
    %v1956 = vmul.f32 %v1953, 1.442695
    %v1957 = vpow.pop %v1956
    %v1958 = vsel %vm562, %v1955, 0.0
    %1959 = vadd.xlane.f32.xlu0 %v1958
    %v1960 = vpop.xlane.xlu0 %1959
    %v1961 = vsel %vm562, %v1957, 0.0
    %1962 = vadd.xlane.f32.xlu0 %v1961
    %v1963 = vpop.xlane.xlu0 %1962
    %v1964 = vrcp.pop %v1960
    %v1965 = vrcp.pop %v1963
    %v1966 = vmul.f32 %v1955, %v1964
    %v1967 = vmul.f32 %v1957, %v1965
    %1968 = vrot.lane.b32.xlu0 %v550, 104
    %v1969 = vpop.permute.xlu0 %1968
    %v1972 = vsel %vm562, %v1966, 0
    %1974 = vmatprep.subr.mxu0 0.0
    %1975 = vmatpush1.msra.mxu0 %v1969
    %1976 = vmatprep.subr.mxu0 0.0
    %1977 = vmatpush1.msra.mxu0 0.0
    %1978 = vmatprep.subr.mxu0 0.0
    %1979 = vmatpush1.msra.mxu0 0.0
    %1980 = vmatprep.subr.mxu0 0.0
    %1981 = vmatpush1.msra.mxu0 0.0
    %1982 = vmatprep.subr.mxu0 0.0
    %1983 = vmatpush1.msra.mxu0 0.0
    %1984 = vmatprep.subr.mxu0 0.0
    %1985 = vmatpush1.msra.mxu0 0.0
    %1986 = vmatprep.subr.mxu0 0.0
    %1987 = vmatpush1.msra.mxu0 0.0
    %1988 = vmatprep.subr.mxu0 0.0
    %1989 = vmatpush1.msra.mxu0 0.0
    %1990 = vmatprep.subr.mxu0 0.0
    %1991 = vmatpush1.msra.mxu0 0.0
    %1992 = vmatprep.subr.mxu0 0.0
    %1993 = vmatpush1.msra.mxu0 0.0
    %1994 = vmatprep.subr.mxu0 0.0
    %1995 = vmatpush1.msra.mxu0 0.0
    %1996 = vmatprep.subr.mxu0 0.0
    %1997 = vmatpush1.msra.mxu0 0.0
    %1998 = vmatprep.subr.mxu0 0.0
    %1999 = vmatpush1.msra.mxu0 0.0
    %2000 = vmatprep.subr.mxu0 0.0
    %2001 = vmatpush1.msra.mxu0 0.0
    %2002 = vmatprep.subr.mxu0 0.0
    %2003 = vmatpush1.msra.mxu0 0.0
    %2004 = vmatprep.subr.mxu0 0.0
    %2005 = vmatpush1.msra.mxu0 0.0
    %2006 = vmatprep.subr.mxu0 0.0
    %2007 = vmatpush1.msra.mxu0 0.0
    %2008 = vmatprep.subr.mxu0 0.0
    %2009 = vmatpush1.msra.mxu0 0.0
    %2010 = vmatprep.subr.mxu0 0.0
    %2011 = vmatpush1.msra.mxu0 0.0
    %2012 = vmatprep.subr.mxu0 0.0
    %2013 = vmatpush1.msra.mxu0 0.0
    %2014 = vmatprep.subr.mxu0 0.0
    %2015 = vmatpush1.msra.mxu0 0.0
    %2016 = vmatprep.subr.mxu0 0.0
    %2017 = vmatpush1.msra.mxu0 0.0
    %2018 = vmatprep.subr.mxu0 0.0
    %2019 = vmatpush1.msra.mxu0 0.0
    %2020 = vmatprep.subr.mxu0 0.0
    %2021 = vmatpush1.msra.mxu0 0.0
    %2022 = vmatprep.subr.mxu0 0.0
    %2023 = vmatpush1.msra.mxu0 0.0
    %2024 = vmatprep.subr.mxu0 0.0
    %2025 = vmatpush1.msra.mxu0 0.0
    %2026 = vmatprep.subr.mxu0 0.0
    %2027 = vmatpush1.msra.mxu0 0.0
    %2028 = vmatprep.subr.mxu0 0.0
    %2029 = vmatpush1.msra.mxu0 0.0
    %2030 = vmatprep.subr.mxu0 0.0
    %2031 = vmatpush1.msra.mxu0 0.0
    %2032 = vmatprep.subr.mxu0 0.0
    %2033 = vmatpush1.msra.mxu0 0.0
    %2034 = vmatprep.subr.mxu0 0.0
    %2035 = vmatpush1.msra.mxu0 0.0
    %2036 = vmatprep.subr.mxu0 0.0
    %2037 = vmatpush1.msra.mxu0 0.0
    %2038 = vmatprep.mubr.f32.mxu0 0.0
    %2039 = vmatmul.mubr.f32.gmra.mrb[0].mxu0 %v1972
    %v2040 = vpop.f32.mrb[0].mxu0
    %v2041 = vadd.f32 0.0, %v2040
    %v2042 = vpop.f32.mrb[0].mxu0
    %2043 = vdwg.mxu0
    %2044 = vrot.lane.b32.xlu0 %v555, 104
    %v2045 = vpop.permute.xlu0 %2044
    %v2048 = vsel %vm562, %v1967, 0
    %2050 = vmatprep.subr.mxu0 0.0
    %2051 = vmatpush1.msra.mxu0 %v2045
    %2052 = vmatprep.subr.mxu0 0.0
    %2053 = vmatpush1.msra.mxu0 0.0
    %2054 = vmatprep.subr.mxu0 0.0
    %2055 = vmatpush1.msra.mxu0 0.0
    %2056 = vmatprep.subr.mxu0 0.0
    %2057 = vmatpush1.msra.mxu0 0.0
    %2058 = vmatprep.subr.mxu0 0.0
    %2059 = vmatpush1.msra.mxu0 0.0
    %2060 = vmatprep.subr.mxu0 0.0
    %2061 = vmatpush1.msra.mxu0 0.0
    %2062 = vmatprep.subr.mxu0 0.0
    %2063 = vmatpush1.msra.mxu0 0.0
    %2064 = vmatprep.subr.mxu0 0.0
    %2065 = vmatpush1.msra.mxu0 0.0
    %2066 = vmatprep.subr.mxu0 0.0
    %2067 = vmatpush1.msra.mxu0 0.0
    %2068 = vmatprep.subr.mxu0 0.0
    %2069 = vmatpush1.msra.mxu0 0.0
    %2070 = vmatprep.subr.mxu0 0.0
    %2071 = vmatpush1.msra.mxu0 0.0
    %2072 = vmatprep.subr.mxu0 0.0
    %2073 = vmatpush1.msra.mxu0 0.0
    %2074 = vmatprep.subr.mxu0 0.0
    %2075 = vmatpush1.msra.mxu0 0.0
    %2076 = vmatprep.subr.mxu0 0.0
    %2077 = vmatpush1.msra.mxu0 0.0
    %2078 = vmatprep.subr.mxu0 0.0
    %2079 = vmatpush1.msra.mxu0 0.0
    %2080 = vmatprep.subr.mxu0 0.0
    %2081 = vmatpush1.msra.mxu0 0.0
    %2082 = vmatprep.subr.mxu0 0.0
    %2083 = vmatpush1.msra.mxu0 0.0
    %2084 = vmatprep.subr.mxu0 0.0
    %2085 = vmatpush1.msra.mxu0 0.0
    %2086 = vmatprep.subr.mxu0 0.0
    %2087 = vmatpush1.msra.mxu0 0.0
    %2088 = vmatprep.subr.mxu0 0.0
    %2089 = vmatpush1.msra.mxu0 0.0
    %2090 = vmatprep.subr.mxu0 0.0
    %2091 = vmatpush1.msra.mxu0 0.0
    %2092 = vmatprep.subr.mxu0 0.0
    %2093 = vmatpush1.msra.mxu0 0.0
    %2094 = vmatprep.subr.mxu0 0.0
    %2095 = vmatpush1.msra.mxu0 0.0
    %2096 = vmatprep.subr.mxu0 0.0
    %2097 = vmatpush1.msra.mxu0 0.0
    %2098 = vmatprep.subr.mxu0 0.0
    %2099 = vmatpush1.msra.mxu0 0.0
    %2100 = vmatprep.subr.mxu0 0.0
    %2101 = vmatpush1.msra.mxu0 0.0
    %2102 = vmatprep.subr.mxu0 0.0
    %2103 = vmatpush1.msra.mxu0 0.0
    %2104 = vmatprep.subr.mxu0 0.0
    %2105 = vmatpush1.msra.mxu0 0.0
    %2106 = vmatprep.subr.mxu0 0.0
    %2107 = vmatpush1.msra.mxu0 0.0
    %2108 = vmatprep.subr.mxu0 0.0
    %2109 = vmatpush1.msra.mxu0 0.0
    %2110 = vmatprep.subr.mxu0 0.0
    %2111 = vmatpush1.msra.mxu0 0.0
    %2112 = vmatprep.subr.mxu0 0.0
    %2113 = vmatpush1.msra.mxu0 0.0
    %2114 = vmatprep.mubr.f32.mxu0 0.0
    %2115 = vmatmul.mubr.f32.gmra.mrb[0].mxu0 %v2048
    %v2116 = vpop.f32.mrb[0].mxu0
    %v2117 = vadd.f32 0.0, %v2116
    %v2118 = vpop.f32.mrb[0].mxu0
    %2119 = vdwg.mxu0
    %v2121 = vsel %vm562, %v2041, 0
    %v2124 = vsel %vm562, %v2117, 0
    %2126 = vmatprep.subr.mxu0 0.0
    %2127 = vmatpush1.msra.mxu0 %v561
    %2128 = vmatprep.subr.mxu0 0.0
    %2129 = vmatpush1.msra.mxu0 0.0
    %2130 = vmatprep.subr.mxu0 0.0
    %2131 = vmatpush1.msra.mxu0 0.0
    %2132 = vmatprep.subr.mxu0 0.0
    %2133 = vmatpush1.msra.mxu0 0.0
    %2134 = vmatprep.subr.mxu0 0.0
    %2135 = vmatpush1.msra.mxu0 0.0
    %2136 = vmatprep.subr.mxu0 0.0
    %2137 = vmatpush1.msra.mxu0 0.0
    %2138 = vmatprep.subr.mxu0 0.0
    %2139 = vmatpush1.msra.mxu0 0.0
    %2140 = vmatprep.subr.mxu0 0.0
    %2141 = vmatpush1.msra.mxu0 0.0
    %2142 = vmatprep.subr.mxu0 0.0
    %2143 = vmatpush1.msra.mxu0 0.0
    %2144 = vmatprep.subr.mxu0 0.0
    %2145 = vmatpush1.msra.mxu0 0.0
    %2146 = vmatprep.subr.mxu0 0.0
    %2147 = vmatpush1.msra.mxu0 0.0
    %2148 = vmatprep.subr.mxu0 0.0
    %2149 = vmatpush1.msra.mxu0 0.0
    %2150 = vmatprep.subr.mxu0 0.0
    %2151 = vmatpush1.msra.mxu0 0.0
    %2152 = vmatprep.subr.mxu0 0.0
    %2153 = vmatpush1.msra.mxu0 0.0
    %2154 = vmatprep.subr.mxu0 0.0
    %2155 = vmatpush1.msra.mxu0 0.0
    %2156 = vmatprep.subr.mxu0 0.0
    %2157 = vmatpush1.msra.mxu0 0.0
    %2158 = vmatprep.subr.mxu0 0.0
    %2159 = vmatpush1.msra.mxu0 0.0
    %2160 = vmatprep.subr.mxu0 0.0
    %2161 = vmatpush1.msra.mxu0 0.0
    %2162 = vmatprep.subr.mxu0 0.0
    %2163 = vmatpush1.msra.mxu0 0.0
    %2164 = vmatprep.subr.mxu0 0.0
    %2165 = vmatpush1.msra.mxu0 0.0
    %2166 = vmatprep.subr.mxu0 0.0
    %2167 = vmatpush1.msra.mxu0 0.0
    %2168 = vmatprep.subr.mxu0 0.0
    %2169 = vmatpush1.msra.mxu0 0.0
    %2170 = vmatprep.subr.mxu0 0.0
    %2171 = vmatpush1.msra.mxu0 0.0
    %2172 = vmatprep.subr.mxu0 0.0
    %2173 = vmatpush1.msra.mxu0 0.0
    %2174 = vmatprep.subr.mxu0 0.0
    %2175 = vmatpush1.msra.mxu0 0.0
    %2176 = vmatprep.subr.mxu0 0.0
    %2177 = vmatpush1.msra.mxu0 0.0
    %2178 = vmatprep.subr.mxu0 0.0
    %2179 = vmatpush1.msra.mxu0 0.0
    %2180 = vmatprep.subr.mxu0 0.0
    %2181 = vmatpush1.msra.mxu0 0.0
    %2182 = vmatprep.subr.mxu0 0.0
    %2183 = vmatpush1.msra.mxu0 0.0
    %2184 = vmatprep.subr.mxu0 0.0
    %2185 = vmatpush1.msra.mxu0 0.0
    %2186 = vmatprep.subr.mxu0 0.0
    %2187 = vmatpush1.msra.mxu0 0.0
    %2188 = vmatprep.subr.mxu0 0.0
    %2189 = vmatpush1.msra.mxu0 0.0
    %2190 = vmatprep.mubr.f32.mxu0 0.0
    %2191 = vmatmul.mubr.f32.gmra.mrb[0].mxu0 %v2121
    %v2192 = vpop.f32.mrb[0].mxu0
    %v2193 = vadd.f32 0.0, %v2192
    %v2194 = vpop.f32.mrb[0].mxu0
    %2195 = vmatprep.mubr.f32.mxu0 0.0
    %2196 = vmatmul.mubr.f32.gmra.mrb[0].mxu0 %v2124
    %v2197 = vpop.f32.mrb[0].mxu0
    %v2198 = vadd.f32 0.0, %v2197
    %v2199 = vpop.f32.mrb[0].mxu0
    %2200 = vdwg.mxu0
    %v2201 = vadd.f32 %v1788, %v2193
    %v2202 = vadd.f32 %v1789, %v2198
    %v2203 = vadd.f32 %v156, %v2201
    %v2204 = vadd.f32 %v157, %v2202
    %v2205 = vld [vmem:[#allocation8] sm:$0x1]
    %v2206 = vmul.f32 %v2203, %v2203
    %v2207 = vmul.f32 %v2204, %v2204
    %v2208 = vsel %vm277, %v2206, 0.0
    %2209 = vadd.xlane.f32.xlu0 %v2208
    %v2210 = vpop.xlane.xlu0 %2209
    %v2211 = vsel %vm277, %v2207, 0.0
    %2212 = vadd.xlane.f32.xlu0 %v2211
    %v2213 = vpop.xlane.xlu0 %2212
    %v2214 = vmul.f32 %v2210, %v284
    %v2215 = vmul.f32 %v2213, %v284
    %v2216 = vadd.f32 %v2214, 1e-06
    %v2217 = vadd.f32 %v2215, 1e-06
    %v2218 = vrsqrt.pop %v2216
    %v2219 = vrsqrt.pop %v2217
    %v2220 = vmul.f32 %v2203, %v2218
    %v2221 = vmul.f32 %v2204, %v2219
    %v2223 = vlaneseq
    %v2224 = vshrl.u32 %v2223, 7
    %v2225 = vsub.s32 0, %v2224
    %v2226 = vrot.slane %v2205, %v2225
    %v2228 = vmul.f32 %v2226, %v2220
    %v2229 = vmul.f32 %v2226, %v2221
    %2232 = vrot.lane.b32.xlu0 %v301, 64
    %v2233 = vpop.permute.xlu0 %2232
    %2234 = vrot.lane.b32.xlu0 %v302, 64
    %v2235 = vpop.permute.xlu0 %2234
    %v2238 = vmul.f32 %v2228, %v2233
    %v2239 = vmul.f32 %v2229, %v2235
    %2240 = vrot.lane.b32.xlu0 %v253, 32
    %v2241 = vpop.permute.xlu0 %2240
    %2242 = vrot.lane.b32.xlu0 %v261, 32
    %v2243 = vpop.permute.xlu0 %2242
    %v2246 = vadd.f32 %v2238, %v2241
    %v2247 = vadd.f32 %v2239, %v2243
    %v2248 = vld [vmem:[#allocation10] sm:$0xff]
    %v2249 = vld [vmem:[#allocation10 + $0x8] sm:$0xff]
    %v2250 = vld [vmem:[#allocation10 + $0x10] sm:$0xff]
    %v2251 = vld [vmem:[#allocation10 + $0x18] sm:$0xff]
    %v2253 = vsel %vm277, %v2246, 0
    %v2256 = vsel %vm277, %v2247, 0
    %2258 = vmatprep.subr.mxu0 0.0
    %2259 = vmatpush1.msra.mxu0 %v2248
    %2260 = vmatprep.subr.mxu0 0.0
    %2261 = vmatpush1.msra.mxu0 %v2249
    %2262 = vmatprep.subr.mxu0 0.0
    %2263 = vmatpush1.msra.mxu0 %v2250
    %2264 = vmatprep.subr.mxu0 0.0
    %2265 = vmatpush1.msra.mxu0 %v2251
    %2266 = vmatprep.subr.mxu0 0.0
    %2267 = vmatpush1.msra.mxu0 0.0
    %2268 = vmatprep.subr.mxu0 0.0
    %2269 = vmatpush1.msra.mxu0 0.0
    %2270 = vmatprep.subr.mxu0 0.0
    %2271 = vmatpush1.msra.mxu0 0.0
    %2272 = vmatprep.subr.mxu0 0.0
    %2273 = vmatpush1.msra.mxu0 0.0
    %2274 = vmatprep.subr.mxu0 0.0
    %2275 = vmatpush1.msra.mxu0 0.0
    %2276 = vmatprep.subr.mxu0 0.0
    %2277 = vmatpush1.msra.mxu0 0.0
    %2278 = vmatprep.subr.mxu0 0.0
    %2279 = vmatpush1.msra.mxu0 0.0
    %2280 = vmatprep.subr.mxu0 0.0
    %2281 = vmatpush1.msra.mxu0 0.0
    %2282 = vmatprep.subr.mxu0 0.0
    %2283 = vmatpush1.msra.mxu0 0.0
    %2284 = vmatprep.subr.mxu0 0.0
    %2285 = vmatpush1.msra.mxu0 0.0
    %2286 = vmatprep.subr.mxu0 0.0
    %2287 = vmatpush1.msra.mxu0 0.0
    %2288 = vmatprep.subr.mxu0 0.0
    %2289 = vmatpush1.msra.mxu0 0.0
    %2290 = vmatprep.subr.mxu0 0.0
    %2291 = vmatpush1.msra.mxu0 0.0
    %2292 = vmatprep.subr.mxu0 0.0
    %2293 = vmatpush1.msra.mxu0 0.0
    %2294 = vmatprep.subr.mxu0 0.0
    %2295 = vmatpush1.msra.mxu0 0.0
    %2296 = vmatprep.subr.mxu0 0.0
    %2297 = vmatpush1.msra.mxu0 0.0
    %2298 = vmatprep.subr.mxu0 0.0
    %2299 = vmatpush1.msra.mxu0 0.0
    %2300 = vmatprep.subr.mxu0 0.0
    %2301 = vmatpush1.msra.mxu0 0.0
    %2302 = vmatprep.subr.mxu0 0.0
    %2303 = vmatpush1.msra.mxu0 0.0
    %2304 = vmatprep.subr.mxu0 0.0
    %2305 = vmatpush1.msra.mxu0 0.0
    %2306 = vmatprep.subr.mxu0 0.0
    %2307 = vmatpush1.msra.mxu0 0.0
    %2308 = vmatprep.subr.mxu0 0.0
    %2309 = vmatpush1.msra.mxu0 0.0
    %2310 = vmatprep.subr.mxu0 0.0
    %2311 = vmatpush1.msra.mxu0 0.0
    %2312 = vmatprep.subr.mxu0 0.0
    %2313 = vmatpush1.msra.mxu0 0.0
    %2314 = vmatprep.subr.mxu0 0.0
    %2315 = vmatpush1.msra.mxu0 0.0
    %2316 = vmatprep.subr.mxu0 0.0
    %2317 = vmatpush1.msra.mxu0 0.0
    %2318 = vmatprep.subr.mxu0 0.0
    %2319 = vmatpush1.msra.mxu0 0.0
    %2320 = vmatprep.subr.mxu0 0.0
    %2321 = vmatpush1.msra.mxu0 0.0
    %2322 = vmatprep.mubr.f32.mxu0 0.0
    %2323 = vmatmul.mubr.f32.gmra.mrb[0].mxu0 %v2253
    %v2324 = vpop.f32.mrb[0].mxu0
    %v2325 = vadd.f32 0.0, %v2324
    %v2326 = vpop.f32.mrb[0].mxu0
    %2327 = vmatprep.mubr.f32.mxu0 0.0
    %2328 = vmatmul.mubr.f32.gmra.mrb[0].mxu0 %v2256
    %v2329 = vpop.f32.mrb[0].mxu0
    %v2330 = vadd.f32 0.0, %v2329
    %v2331 = vpop.f32.mrb[0].mxu0
    %2332 = vdwg.mxu0
    %v2333 = vld [vmem:[#allocation11] sm:$0xff]
    %v2334 = vld [vmem:[#allocation11 + $0x8] sm:$0xff]
    %v2335 = vld [vmem:[#allocation11 + $0x10] sm:$0xff]
    %v2336 = vld [vmem:[#allocation11 + $0x18] sm:$0xff]
    %2337 = vmatprep.subr.mxu0 0.0
    %2338 = vmatpush1.msra.mxu0 %v2333
    %2339 = vmatprep.subr.mxu0 0.0
    %2340 = vmatpush1.msra.mxu0 %v2334
    %2341 = vmatprep.subr.mxu0 0.0
    %2342 = vmatpush1.msra.mxu0 %v2335
    %2343 = vmatprep.subr.mxu0 0.0
    %2344 = vmatpush1.msra.mxu0 %v2336
    %2345 = vmatprep.subr.mxu0 0.0
    %2346 = vmatpush1.msra.mxu0 0.0
    %2347 = vmatprep.subr.mxu0 0.0
    %2348 = vmatpush1.msra.mxu0 0.0
    %2349 = vmatprep.subr.mxu0 0.0
    %2350 = vmatpush1.msra.mxu0 0.0
    %2351 = vmatprep.subr.mxu0 0.0
    %2352 = vmatpush1.msra.mxu0 0.0
    %2353 = vmatprep.subr.mxu0 0.0
    %2354 = vmatpush1.msra.mxu0 0.0
    %2355 = vmatprep.subr.mxu0 0.0
    %2356 = vmatpush1.msra.mxu0 0.0
    %2357 = vmatprep.subr.mxu0 0.0
    %2358 = vmatpush1.msra.mxu0 0.0
    %2359 = vmatprep.subr.mxu0 0.0
    %2360 = vmatpush1.msra.mxu0 0.0
    %2361 = vmatprep.subr.mxu0 0.0
    %2362 = vmatpush1.msra.mxu0 0.0
    %2363 = vmatprep.subr.mxu0 0.0
    %2364 = vmatpush1.msra.mxu0 0.0
    %2365 = vmatprep.subr.mxu0 0.0
    %2366 = vmatpush1.msra.mxu0 0.0
    %2367 = vmatprep.subr.mxu0 0.0
    %2368 = vmatpush1.msra.mxu0 0.0
    %2369 = vmatprep.subr.mxu0 0.0
    %2370 = vmatpush1.msra.mxu0 0.0
    %2371 = vmatprep.subr.mxu0 0.0
    %2372 = vmatpush1.msra.mxu0 0.0
    %2373 = vmatprep.subr.mxu0 0.0
    %2374 = vmatpush1.msra.mxu0 0.0
    %2375 = vmatprep.subr.mxu0 0.0
    %2376 = vmatpush1.msra.mxu0 0.0
    %2377 = vmatprep.subr.mxu0 0.0
    %2378 = vmatpush1.msra.mxu0 0.0
    %2379 = vmatprep.subr.mxu0 0.0
    %2380 = vmatpush1.msra.mxu0 0.0
    %2381 = vmatprep.subr.mxu0 0.0
    %2382 = vmatpush1.msra.mxu0 0.0
    %2383 = vmatprep.subr.mxu0 0.0
    %2384 = vmatpush1.msra.mxu0 0.0
    %2385 = vmatprep.subr.mxu0 0.0
    %2386 = vmatpush1.msra.mxu0 0.0
    %2387 = vmatprep.subr.mxu0 0.0
    %2388 = vmatpush1.msra.mxu0 0.0
    %2389 = vmatprep.subr.mxu0 0.0
    %2390 = vmatpush1.msra.mxu0 0.0
    %2391 = vmatprep.subr.mxu0 0.0
    %2392 = vmatpush1.msra.mxu0 0.0
    %2393 = vmatprep.subr.mxu0 0.0
    %2394 = vmatpush1.msra.mxu0 0.0
    %2395 = vmatprep.subr.mxu0 0.0
    %2396 = vmatpush1.msra.mxu0 0.0
    %2397 = vmatprep.subr.mxu0 0.0
    %2398 = vmatpush1.msra.mxu0 0.0
    %2399 = vmatprep.subr.mxu0 0.0
    %2400 = vmatpush1.msra.mxu0 0.0
    %2401 = vmatprep.mubr.f32.mxu0 0.0
    %2402 = vmatmul.mubr.f32.gmra.mrb[0].mxu0 %v2253
    %v2403 = vpop.f32.mrb[0].mxu0
    %v2404 = vadd.f32 0.0, %v2403
    %v2405 = vpop.f32.mrb[0].mxu0
    %2406 = vmatprep.mubr.f32.mxu0 0.0
    %2407 = vmatmul.mubr.f32.gmra.mrb[0].mxu0 %v2256
    %v2408 = vpop.f32.mrb[0].mxu0
    %v2409 = vadd.f32 0.0, %v2408
    %v2410 = vpop.f32.mrb[0].mxu0
    %2411 = vdwg.mxu0
    %v2412 = vmul.f32 %v2404, 0.5
    %v2413 = vmul.f32 %v2409, 0.5
    %v2414 = vmul.f32 %v2404, 0.044715
    %v2415 = vmul.f32 %v2409, 0.044715
    %v2416 = vmul.f32 %v2414, %v2404
    %v2417 = vmul.f32 %v2415, %v2409
    %v2418 = vmul.f32 %v2416, %v2404
    %v2419 = vmul.f32 %v2417, %v2409
    %v2420 = vadd.f32 %v2404, %v2418
    %v2421 = vadd.f32 %v2409, %v2419
    %v2422 = vmul.f32 %v2420, 0.7978846
    %v2423 = vmul.f32 %v2421, 0.7978846
    %v2424 = vtanh.pop %v2422
    %v2425 = vtanh.pop %v2423
    %v2426 = vadd.f32 %v2424, 1.0
    %v2427 = vadd.f32 %v2425, 1.0
    %v2428 = vmul.f32 %v2412, %v2426
    %v2429 = vmul.f32 %v2413, %v2427
    %v2430 = vmul.f32 %v2325, %v2428
    %v2431 = vmul.f32 %v2330, %v2429
    %v2432 = vld [vmem:[%s11] sm:$0xff]
    %v2433 = vld [vmem:[%s11 + $0x8] sm:$0xff]
    %v2434 = vld [vmem:[%s11 + $0x10] sm:$0xff]
    %v2435 = vld [vmem:[%s11 + $0x18] sm:$0xff]
    %v2436 = vld [vmem:[%s11 + $0x20] sm:$0xff]
    %v2437 = vld [vmem:[%s11 + $0x28] sm:$0xff]
    %v2438 = vld [vmem:[%s11 + $0x30] sm:$0xff]
    %v2439 = vld [vmem:[%s11 + $0x38] sm:$0xff]
    %vm2440 = vcmask 523264
    %v2442 = vsel %vm2440, %v2430, 0
    %v2445 = vsel %vm2440, %v2431, 0
    %2447 = vmatprep.subr.mxu0 0.0
    %2448 = vmatpush1.msra.mxu0 %v2432
    %2449 = vmatprep.subr.mxu0 0.0
    %2450 = vmatpush1.msra.mxu0 %v2433
    %2451 = vmatprep.subr.mxu0 0.0
    %2452 = vmatpush1.msra.mxu0 %v2434
    %2453 = vmatprep.subr.mxu0 0.0
    %2454 = vmatpush1.msra.mxu0 %v2435
    %2455 = vmatprep.subr.mxu0 0.0
    %2456 = vmatpush1.msra.mxu0 %v2436
    %2457 = vmatprep.subr.mxu0 0.0
    %2458 = vmatpush1.msra.mxu0 %v2437
    %2459 = vmatprep.subr.mxu0 0.0
    %2460 = vmatpush1.msra.mxu0 %v2438
    %2461 = vmatprep.subr.mxu0 0.0
    %2462 = vmatpush1.msra.mxu0 %v2439
    %2463 = vmatprep.subr.mxu0 0.0
    %2464 = vmatpush1.msra.mxu0 0.0
    %2465 = vmatprep.subr.mxu0 0.0
    %2466 = vmatpush1.msra.mxu0 0.0
    %2467 = vmatprep.subr.mxu0 0.0
    %2468 = vmatpush1.msra.mxu0 0.0
    %2469 = vmatprep.subr.mxu0 0.0
    %2470 = vmatpush1.msra.mxu0 0.0
    %2471 = vmatprep.subr.mxu0 0.0
    %2472 = vmatpush1.msra.mxu0 0.0
    %2473 = vmatprep.subr.mxu0 0.0
    %2474 = vmatpush1.msra.mxu0 0.0
    %2475 = vmatprep.subr.mxu0 0.0
    %2476 = vmatpush1.msra.mxu0 0.0
    %2477 = vmatprep.subr.mxu0 0.0
    %2478 = vmatpush1.msra.mxu0 0.0
    %2479 = vmatprep.subr.mxu0 0.0
    %2480 = vmatpush1.msra.mxu0 0.0
    %2481 = vmatprep.subr.mxu0 0.0
    %2482 = vmatpush1.msra.mxu0 0.0
    %2483 = vmatprep.subr.mxu0 0.0
    %2484 = vmatpush1.msra.mxu0 0.0
    %2485 = vmatprep.subr.mxu0 0.0
    %2486 = vmatpush1.msra.mxu0 0.0
    %2487 = vmatprep.subr.mxu0 0.0
    %2488 = vmatpush1.msra.mxu0 0.0
    %2489 = vmatprep.subr.mxu0 0.0
    %2490 = vmatpush1.msra.mxu0 0.0
    %2491 = vmatprep.subr.mxu0 0.0
    %2492 = vmatpush1.msra.mxu0 0.0
    %2493 = vmatprep.subr.mxu0 0.0
    %2494 = vmatpush1.msra.mxu0 0.0
    %2495 = vmatprep.subr.mxu0 0.0
    %2496 = vmatpush1.msra.mxu0 0.0
    %2497 = vmatprep.subr.mxu0 0.0
    %2498 = vmatpush1.msra.mxu0 0.0
    %2499 = vmatprep.subr.mxu0 0.0
    %2500 = vmatpush1.msra.mxu0 0.0
    %2501 = vmatprep.subr.mxu0 0.0
    %2502 = vmatpush1.msra.mxu0 0.0
    %2503 = vmatprep.subr.mxu0 0.0
    %2504 = vmatpush1.msra.mxu0 0.0
    %2505 = vmatprep.subr.mxu0 0.0
    %2506 = vmatpush1.msra.mxu0 0.0
    %2507 = vmatprep.subr.mxu0 0.0
    %2508 = vmatpush1.msra.mxu0 0.0
    %2509 = vmatprep.subr.mxu0 0.0
    %2510 = vmatpush1.msra.mxu0 0.0
    %2511 = vmatprep.mubr.f32.mxu0 0.0
    %2512 = vmatmul.mubr.f32.gmra.mrb[0].mxu0 %v2442
    %v2513 = vpop.f32.mrb[0].mxu0
    %v2514 = vadd.f32 0.0, %v2513
    %v2515 = vpop.f32.mrb[0].mxu0
    %2516 = vmatprep.mubr.f32.mxu0 0.0
    %2517 = vmatmul.mubr.f32.gmra.mrb[0].mxu0 %v2445
    %v2518 = vpop.f32.mrb[0].mxu0
    %v2519 = vadd.f32 0.0, %v2518
    %v2520 = vpop.f32.mrb[0].mxu0
    %2521 = vdwg.mxu0
    %v2522 = vadd.f32 %v2203, %v2514
    %v2523 = vadd.f32 %v2204, %v2519
    %s2524 = scalar_lea.vmem [#allocation7], 1
    %v2525 = vld [vmem:[%s2524] sm:$0x1]
    %v2526 = vmul.f32 %v2522, %v2522
    %v2527 = vmul.f32 %v2523, %v2523
    %v2528 = vsel %vm277, %v2526, 0.0
    %2529 = vadd.xlane.f32.xlu0 %v2528
    %v2530 = vpop.xlane.xlu0 %2529
    %v2531 = vsel %vm277, %v2527, 0.0
    %2532 = vadd.xlane.f32.xlu0 %v2531
    %v2533 = vpop.xlane.xlu0 %2532
    %v2534 = vmul.f32 %v2530, %v284
    %v2535 = vmul.f32 %v2533, %v284
    %v2536 = vadd.f32 %v2534, 1e-06
    %v2537 = vadd.f32 %v2535, 1e-06
    %v2538 = vrsqrt.pop %v2536
    %v2539 = vrsqrt.pop %v2537
    %v2540 = vmul.f32 %v2522, %v2538
    %v2541 = vmul.f32 %v2523, %v2539
    %v2543 = vlaneseq
    %v2544 = vshrl.u32 %v2543, 7
    %v2545 = vsub.s32 0, %v2544
    %v2546 = vrot.slane %v2525, %v2545
    %v2548 = vmul.f32 %v2546, %v2540
    %v2549 = vmul.f32 %v2546, %v2541
    %v2550 = vadd.f32 %v257, 1.0
    %v2551 = vadd.f32 %v265, 1.0
    %v2552 = vmul.f32 %v2548, %v2550
    %v2553 = vmul.f32 %v2549, %v2551
    %2556 = vrot.lane.b32.xlu0 %v257, 96
    %v2557 = vpop.permute.xlu0 %2556
    %2558 = vrot.lane.b32.xlu0 %v265, 96
    %v2559 = vpop.permute.xlu0 %2558
    %v2562 = vadd.f32 %v2552, %v2557
    %v2563 = vadd.f32 %v2553, %v2559
    %s2564 = scalar_lea.vmem %s5, 32
    %v2565 = vld [vmem:[%s2564] sm:$0xff]
    %v2566 = vld [vmem:[%s2564 + $0x8] sm:$0xff]
    %v2567 = vld [vmem:[%s2564 + $0x10] sm:$0xff]
    %v2568 = vld [vmem:[%s2564 + $0x18] sm:$0xff]
    %v2570 = vsel %vm277, %v2562, 0
    %v2573 = vsel %vm277, %v2563, 0
    %2575 = vmatprep.subr.mxu0 0.0
    %2576 = vmatpush1.msra.mxu0 %v2565
    %2577 = vmatprep.subr.mxu0 0.0
    %2578 = vmatpush1.msra.mxu0 %v2566
    %2579 = vmatprep.subr.mxu0 0.0
    %2580 = vmatpush1.msra.mxu0 %v2567
    %2581 = vmatprep.subr.mxu0 0.0
    %2582 = vmatpush1.msra.mxu0 %v2568
    %2583 = vmatprep.subr.mxu0 0.0
    %2584 = vmatpush1.msra.mxu0 0.0
    %2585 = vmatprep.subr.mxu0 0.0
    %2586 = vmatpush1.msra.mxu0 0.0
    %2587 = vmatprep.subr.mxu0 0.0
    %2588 = vmatpush1.msra.mxu0 0.0
    %2589 = vmatprep.subr.mxu0 0.0
    %2590 = vmatpush1.msra.mxu0 0.0
    %2591 = vmatprep.subr.mxu0 0.0
    %2592 = vmatpush1.msra.mxu0 0.0
    %2593 = vmatprep.subr.mxu0 0.0
    %2594 = vmatpush1.msra.mxu0 0.0
    %2595 = vmatprep.subr.mxu0 0.0
    %2596 = vmatpush1.msra.mxu0 0.0
    %2597 = vmatprep.subr.mxu0 0.0
    %2598 = vmatpush1.msra.mxu0 0.0
    %2599 = vmatprep.subr.mxu0 0.0
    %2600 = vmatpush1.msra.mxu0 0.0
    %2601 = vmatprep.subr.mxu0 0.0
    %2602 = vmatpush1.msra.mxu0 0.0
    %2603 = vmatprep.subr.mxu0 0.0
    %2604 = vmatpush1.msra.mxu0 0.0
    %2605 = vmatprep.subr.mxu0 0.0
    %2606 = vmatpush1.msra.mxu0 0.0
    %2607 = vmatprep.subr.mxu0 0.0
    %2608 = vmatpush1.msra.mxu0 0.0
    %2609 = vmatprep.subr.mxu0 0.0
    %2610 = vmatpush1.msra.mxu0 0.0
    %2611 = vmatprep.subr.mxu0 0.0
    %2612 = vmatpush1.msra.mxu0 0.0
    %2613 = vmatprep.subr.mxu0 0.0
    %2614 = vmatpush1.msra.mxu0 0.0
    %2615 = vmatprep.subr.mxu0 0.0
    %2616 = vmatpush1.msra.mxu0 0.0
    %2617 = vmatprep.subr.mxu0 0.0
    %2618 = vmatpush1.msra.mxu0 0.0
    %2619 = vmatprep.subr.mxu0 0.0
    %2620 = vmatpush1.msra.mxu0 0.0
    %2621 = vmatprep.subr.mxu0 0.0
    %2622 = vmatpush1.msra.mxu0 0.0
    %2623 = vmatprep.subr.mxu0 0.0
    %2624 = vmatpush1.msra.mxu0 0.0
    %2625 = vmatprep.subr.mxu0 0.0
    %2626 = vmatpush1.msra.mxu0 0.0
    %2627 = vmatprep.subr.mxu0 0.0
    %2628 = vmatpush1.msra.mxu0 0.0
    %2629 = vmatprep.subr.mxu0 0.0
    %2630 = vmatpush1.msra.mxu0 0.0
    %2631 = vmatprep.subr.mxu0 0.0
    %2632 = vmatpush1.msra.mxu0 0.0
    %2633 = vmatprep.subr.mxu0 0.0
    %2634 = vmatpush1.msra.mxu0 0.0
    %2635 = vmatprep.subr.mxu0 0.0
    %2636 = vmatpush1.msra.mxu0 0.0
    %2637 = vmatprep.subr.mxu0 0.0
    %2638 = vmatpush1.msra.mxu0 0.0
    %2639 = vmatprep.mubr.f32.mxu0 0.0
    %2640 = vmatmul.mubr.f32.gmra.mrb[0].mxu0 %v2570
    %v2641 = vpop.f32.mrb[0].mxu0
    %v2642 = vadd.f32 0.0, %v2641
    %v2643 = vpop.f32.mrb[0].mxu0
    %2644 = vmatprep.mubr.f32.mxu0 0.0
    %2645 = vmatmul.mubr.f32.gmra.mrb[0].mxu0 %v2573
    %v2646 = vpop.f32.mrb[0].mxu0
    %v2647 = vadd.f32 0.0, %v2646
    %v2648 = vpop.f32.mrb[0].mxu0
    %2649 = vdwg.mxu0
    %s2650 = scalar_lea.vmem %s6, 32
    %v2651 = vld [vmem:[%s2650] sm:$0xff]
    %v2652 = vld [vmem:[%s2650 + $0x8] sm:$0xff]
    %v2653 = vld [vmem:[%s2650 + $0x10] sm:$0xff]
    %v2654 = vld [vmem:[%s2650 + $0x18] sm:$0xff]
    %2655 = vmatprep.subr.mxu0 0.0
    %2656 = vmatpush1.msra.mxu0 %v2651
    %2657 = vmatprep.subr.mxu0 0.0
    %2658 = vmatpush1.msra.mxu0 %v2652
    %2659 = vmatprep.subr.mxu0 0.0
    %2660 = vmatpush1.msra.mxu0 %v2653
    %2661 = vmatprep.subr.mxu0 0.0
    %2662 = vmatpush1.msra.mxu0 %v2654
    %2663 = vmatprep.subr.mxu0 0.0
    %2664 = vmatpush1.msra.mxu0 0.0
    %2665 = vmatprep.subr.mxu0 0.0
    %2666 = vmatpush1.msra.mxu0 0.0
    %2667 = vmatprep.subr.mxu0 0.0
    %2668 = vmatpush1.msra.mxu0 0.0
    %2669 = vmatprep.subr.mxu0 0.0
    %2670 = vmatpush1.msra.mxu0 0.0
    %2671 = vmatprep.subr.mxu0 0.0
    %2672 = vmatpush1.msra.mxu0 0.0
    %2673 = vmatprep.subr.mxu0 0.0
    %2674 = vmatpush1.msra.mxu0 0.0
    %2675 = vmatprep.subr.mxu0 0.0
    %2676 = vmatpush1.msra.mxu0 0.0
    %2677 = vmatprep.subr.mxu0 0.0
    %2678 = vmatpush1.msra.mxu0 0.0
    %2679 = vmatprep.subr.mxu0 0.0
    %2680 = vmatpush1.msra.mxu0 0.0
    %2681 = vmatprep.subr.mxu0 0.0
    %2682 = vmatpush1.msra.mxu0 0.0
    %2683 = vmatprep.subr.mxu0 0.0
    %2684 = vmatpush1.msra.mxu0 0.0
    %2685 = vmatprep.subr.mxu0 0.0
    %2686 = vmatpush1.msra.mxu0 0.0
    %2687 = vmatprep.subr.mxu0 0.0
    %2688 = vmatpush1.msra.mxu0 0.0
    %2689 = vmatprep.subr.mxu0 0.0
    %2690 = vmatpush1.msra.mxu0 0.0
    %2691 = vmatprep.subr.mxu0 0.0
    %2692 = vmatpush1.msra.mxu0 0.0
    %2693 = vmatprep.subr.mxu0 0.0
    %2694 = vmatpush1.msra.mxu0 0.0
    %2695 = vmatprep.subr.mxu0 0.0
    %2696 = vmatpush1.msra.mxu0 0.0
    %2697 = vmatprep.subr.mxu0 0.0
    %2698 = vmatpush1.msra.mxu0 0.0
    %2699 = vmatprep.subr.mxu0 0.0
    %2700 = vmatpush1.msra.mxu0 0.0
    %2701 = vmatprep.subr.mxu0 0.0
    %2702 = vmatpush1.msra.mxu0 0.0
    %2703 = vmatprep.subr.mxu0 0.0
    %2704 = vmatpush1.msra.mxu0 0.0
    %2705 = vmatprep.subr.mxu0 0.0
    %2706 = vmatpush1.msra.mxu0 0.0
    %2707 = vmatprep.subr.mxu0 0.0
    %2708 = vmatpush1.msra.mxu0 0.0
    %2709 = vmatprep.subr.mxu0 0.0
    %2710 = vmatpush1.msra.mxu0 0.0
    %2711 = vmatprep.subr.mxu0 0.0
    %2712 = vmatpush1.msra.mxu0 0.0
    %2713 = vmatprep.subr.mxu0 0.0
    %2714 = vmatpush1.msra.mxu0 0.0
    %2715 = vmatprep.subr.mxu0 0.0
    %2716 = vmatpush1.msra.mxu0 0.0
    %2717 = vmatprep.subr.mxu0 0.0
    %2718 = vmatpush1.msra.mxu0 0.0
    %2719 = vmatprep.mubr.f32.mxu0 0.0
    %2720 = vmatmul.mubr.f32.gmra.mrb[0].mxu0 %v2570
    %v2721 = vpop.f32.mrb[0].mxu0
    %v2722 = vadd.f32 0.0, %v2721
    %v2723 = vpop.f32.mrb[0].mxu0
    %2724 = vmatprep.mubr.f32.mxu0 0.0
    %2725 = vmatmul.mubr.f32.gmra.mrb[0].mxu0 %v2573
    %v2726 = vpop.f32.mrb[0].mxu0
    %v2727 = vadd.f32 0.0, %v2726
    %v2728 = vpop.f32.mrb[0].mxu0
    %2729 = vdwg.mxu0
    %s2730 = scalar_lea.vmem %s7, 32
    %v2731 = vld [vmem:[%s2730] sm:$0xff]
    %v2732 = vld [vmem:[%s2730 + $0x8] sm:$0xff]
    %v2733 = vld [vmem:[%s2730 + $0x10] sm:$0xff]
    %v2734 = vld [vmem:[%s2730 + $0x18] sm:$0xff]
    %2735 = vmatprep.subr.mxu0 0.0
    %2736 = vmatpush1.msra.mxu0 %v2731
    %2737 = vmatprep.subr.mxu0 0.0
    %2738 = vmatpush1.msra.mxu0 %v2732
    %2739 = vmatprep.subr.mxu0 0.0
    %2740 = vmatpush1.msra.mxu0 %v2733
    %2741 = vmatprep.subr.mxu0 0.0
    %2742 = vmatpush1.msra.mxu0 %v2734
    %2743 = vmatprep.subr.mxu0 0.0
    %2744 = vmatpush1.msra.mxu0 0.0
    %2745 = vmatprep.subr.mxu0 0.0
    %2746 = vmatpush1.msra.mxu0 0.0
    %2747 = vmatprep.subr.mxu0 0.0
    %2748 = vmatpush1.msra.mxu0 0.0
    %2749 = vmatprep.subr.mxu0 0.0
    %2750 = vmatpush1.msra.mxu0 0.0
    %2751 = vmatprep.subr.mxu0 0.0
    %2752 = vmatpush1.msra.mxu0 0.0
    %2753 = vmatprep.subr.mxu0 0.0
    %2754 = vmatpush1.msra.mxu0 0.0
    %2755 = vmatprep.subr.mxu0 0.0
    %2756 = vmatpush1.msra.mxu0 0.0
    %2757 = vmatprep.subr.mxu0 0.0
    %2758 = vmatpush1.msra.mxu0 0.0
    %2759 = vmatprep.subr.mxu0 0.0
    %2760 = vmatpush1.msra.mxu0 0.0
    %2761 = vmatprep.subr.mxu0 0.0
    %2762 = vmatpush1.msra.mxu0 0.0
    %2763 = vmatprep.subr.mxu0 0.0
    %2764 = vmatpush1.msra.mxu0 0.0
    %2765 = vmatprep.subr.mxu0 0.0
    %2766 = vmatpush1.msra.mxu0 0.0
    %2767 = vmatprep.subr.mxu0 0.0
    %2768 = vmatpush1.msra.mxu0 0.0
    %2769 = vmatprep.subr.mxu0 0.0
    %2770 = vmatpush1.msra.mxu0 0.0
    %2771 = vmatprep.subr.mxu0 0.0
    %2772 = vmatpush1.msra.mxu0 0.0
    %2773 = vmatprep.subr.mxu0 0.0
    %2774 = vmatpush1.msra.mxu0 0.0
    %2775 = vmatprep.subr.mxu0 0.0
    %2776 = vmatpush1.msra.mxu0 0.0
    %2777 = vmatprep.subr.mxu0 0.0
    %2778 = vmatpush1.msra.mxu0 0.0
    %2779 = vmatprep.subr.mxu0 0.0
    %2780 = vmatpush1.msra.mxu0 0.0
    %2781 = vmatprep.subr.mxu0 0.0
    %2782 = vmatpush1.msra.mxu0 0.0
    %2783 = vmatprep.subr.mxu0 0.0
    %2784 = vmatpush1.msra.mxu0 0.0
    %2785 = vmatprep.subr.mxu0 0.0
    %2786 = vmatpush1.msra.mxu0 0.0
    %2787 = vmatprep.subr.mxu0 0.0
    %2788 = vmatpush1.msra.mxu0 0.0
    %2789 = vmatprep.subr.mxu0 0.0
    %2790 = vmatpush1.msra.mxu0 0.0
    %2791 = vmatprep.subr.mxu0 0.0
    %2792 = vmatpush1.msra.mxu0 0.0
    %2793 = vmatprep.subr.mxu0 0.0
    %2794 = vmatpush1.msra.mxu0 0.0
    %2795 = vmatprep.subr.mxu0 0.0
    %2796 = vmatpush1.msra.mxu0 0.0
    %2797 = vmatprep.subr.mxu0 0.0
    %2798 = vmatpush1.msra.mxu0 0.0
    %2799 = vmatprep.mubr.f32.mxu0 0.0
    %2800 = vmatmul.mubr.f32.gmra.mrb[0].mxu0 %v2570
    %v2801 = vpop.f32.mrb[0].mxu0
    %v2802 = vadd.f32 0.0, %v2801
    %v2803 = vpop.f32.mrb[0].mxu0
    %2804 = vmatprep.mubr.f32.mxu0 0.0
    %2805 = vmatmul.mubr.f32.gmra.mrb[0].mxu0 %v2573
    %v2806 = vpop.f32.mrb[0].mxu0
    %v2807 = vadd.f32 0.0, %v2806
    %v2808 = vpop.f32.mrb[0].mxu0
    %2809 = vdwg.mxu0
    %s2810 = scalar_lea.vmem %s8, 32
    %v2811 = vld [vmem:[%s2810] sm:$0xff]
    %v2812 = vld [vmem:[%s2810 + $0x8] sm:$0xff]
    %v2813 = vld [vmem:[%s2810 + $0x10] sm:$0xff]
    %v2814 = vld [vmem:[%s2810 + $0x18] sm:$0xff]
    %v2816 = vsel %vm562, %v2642, 0
    %v2819 = vsel %vm562, %v2722, 0
    %2821 = vmatprep.subr.mxu0 0.0
    %2822 = vmatpush1.xpose.msra.mxu0 %v2819
    %2823 = vmatprep.subr.mxu0 0.0
    %2824 = vmatpush1.xpose.msra.mxu0 0.0
    %2825 = vmatprep.subr.mxu0 0.0
    %2826 = vmatpush1.xpose.msra.mxu0 0.0
    %2827 = vmatprep.subr.mxu0 0.0
    %2828 = vmatpush1.xpose.msra.mxu0 0.0
    %2829 = vmatprep.subr.mxu0 0.0
    %2830 = vmatpush1.xpose.msra.mxu0 0.0
    %2831 = vmatprep.subr.mxu0 0.0
    %2832 = vmatpush1.xpose.msra.mxu0 0.0
    %2833 = vmatprep.subr.mxu0 0.0
    %2834 = vmatpush1.xpose.msra.mxu0 0.0
    %2835 = vmatprep.subr.mxu0 0.0
    %2836 = vmatpush1.xpose.msra.mxu0 0.0
    %2837 = vmatprep.subr.mxu0 0.0
    %2838 = vmatpush1.xpose.msra.mxu0 0.0
    %2839 = vmatprep.subr.mxu0 0.0
    %2840 = vmatpush1.xpose.msra.mxu0 0.0
    %2841 = vmatprep.subr.mxu0 0.0
    %2842 = vmatpush1.xpose.msra.mxu0 0.0
    %2843 = vmatprep.subr.mxu0 0.0
    %2844 = vmatpush1.xpose.msra.mxu0 0.0
    %2845 = vmatprep.subr.mxu0 0.0
    %2846 = vmatpush1.xpose.msra.mxu0 0.0
    %2847 = vmatprep.subr.mxu0 0.0
    %2848 = vmatpush1.xpose.msra.mxu0 0.0
    %2849 = vmatprep.subr.mxu0 0.0
    %2850 = vmatpush1.xpose.msra.mxu0 0.0
    %2851 = vmatprep.subr.mxu0 0.0
    %2852 = vmatpush1.xpose.msra.mxu0 0.0
    %2853 = vmatprep.subr.mxu0 0.0
    %2854 = vmatpush1.xpose.msra.mxu0 0.0
    %2855 = vmatprep.subr.mxu0 0.0
    %2856 = vmatpush1.xpose.msra.mxu0 0.0
    %2857 = vmatprep.subr.mxu0 0.0
    %2858 = vmatpush1.xpose.msra.mxu0 0.0
    %2859 = vmatprep.subr.mxu0 0.0
    %2860 = vmatpush1.xpose.msra.mxu0 0.0
    %2861 = vmatprep.subr.mxu0 0.0
    %2862 = vmatpush1.xpose.msra.mxu0 0.0
    %2863 = vmatprep.subr.mxu0 0.0
    %2864 = vmatpush1.xpose.msra.mxu0 0.0
    %2865 = vmatprep.subr.mxu0 0.0
    %2866 = vmatpush1.xpose.msra.mxu0 0.0
    %2867 = vmatprep.subr.mxu0 0.0
    %2868 = vmatpush1.xpose.msra.mxu0 0.0
    %2869 = vmatprep.subr.mxu0 0.0
    %2870 = vmatpush1.xpose.msra.mxu0 0.0
    %2871 = vmatprep.subr.mxu0 0.0
    %2872 = vmatpush1.xpose.msra.mxu0 0.0
    %2873 = vmatprep.subr.mxu0 0.0
    %2874 = vmatpush1.xpose.msra.mxu0 0.0
    %2875 = vmatprep.subr.mxu0 0.0
    %2876 = vmatpush1.xpose.msra.mxu0 0.0
    %2877 = vmatprep.subr.mxu0 0.0
    %2878 = vmatpush1.xpose.msra.mxu0 0.0
    %2879 = vmatprep.subr.mxu0 0.0
    %2880 = vmatpush1.xpose.msra.mxu0 0.0
    %2881 = vmatprep.subr.mxu0 0.0
    %2882 = vmatpush1.xpose.msra.mxu0 0.0
    %2883 = vmatprep.subr.mxu0 0.0
    %2884 = vmatpush1.xpose.msra.mxu0 0.0
    %2885 = vmatprep.mubr.f32.mxu0 0.0
    %2886 = vmatmul.mubr.f32.gmra.mrb[0].mxu0 %v2816
    %v2887 = vpop.f32.mrb[0].mxu0
    %v2888 = vadd.f32 %v266, %v2887
    %v2889 = vpop.f32.mrb[0].mxu0
    %2890 = vdwg.mxu0
    %v2892 = vsel %vm562, %v2647, 0
    %v2895 = vsel %vm562, %v2727, 0
    %2897 = vmatprep.subr.mxu0 0.0
    %2898 = vmatpush1.xpose.msra.mxu0 %v2895
    %2899 = vmatprep.subr.mxu0 0.0
    %2900 = vmatpush1.xpose.msra.mxu0 0.0
    %2901 = vmatprep.subr.mxu0 0.0
    %2902 = vmatpush1.xpose.msra.mxu0 0.0
    %2903 = vmatprep.subr.mxu0 0.0
    %2904 = vmatpush1.xpose.msra.mxu0 0.0
    %2905 = vmatprep.subr.mxu0 0.0
    %2906 = vmatpush1.xpose.msra.mxu0 0.0
    %2907 = vmatprep.subr.mxu0 0.0
    %2908 = vmatpush1.xpose.msra.mxu0 0.0
    %2909 = vmatprep.subr.mxu0 0.0
    %2910 = vmatpush1.xpose.msra.mxu0 0.0
    %2911 = vmatprep.subr.mxu0 0.0
    %2912 = vmatpush1.xpose.msra.mxu0 0.0
    %2913 = vmatprep.subr.mxu0 0.0
    %2914 = vmatpush1.xpose.msra.mxu0 0.0
    %2915 = vmatprep.subr.mxu0 0.0
    %2916 = vmatpush1.xpose.msra.mxu0 0.0
    %2917 = vmatprep.subr.mxu0 0.0
    %2918 = vmatpush1.xpose.msra.mxu0 0.0
    %2919 = vmatprep.subr.mxu0 0.0
    %2920 = vmatpush1.xpose.msra.mxu0 0.0
    %2921 = vmatprep.subr.mxu0 0.0
    %2922 = vmatpush1.xpose.msra.mxu0 0.0
    %2923 = vmatprep.subr.mxu0 0.0
    %2924 = vmatpush1.xpose.msra.mxu0 0.0
    %2925 = vmatprep.subr.mxu0 0.0
    %2926 = vmatpush1.xpose.msra.mxu0 0.0
    %2927 = vmatprep.subr.mxu0 0.0
    %2928 = vmatpush1.xpose.msra.mxu0 0.0
    %2929 = vmatprep.subr.mxu0 0.0
    %2930 = vmatpush1.xpose.msra.mxu0 0.0
    %2931 = vmatprep.subr.mxu0 0.0
    %2932 = vmatpush1.xpose.msra.mxu0 0.0
    %2933 = vmatprep.subr.mxu0 0.0
    %2934 = vmatpush1.xpose.msra.mxu0 0.0
    %2935 = vmatprep.subr.mxu0 0.0
    %2936 = vmatpush1.xpose.msra.mxu0 0.0
    %2937 = vmatprep.subr.mxu0 0.0
    %2938 = vmatpush1.xpose.msra.mxu0 0.0
    %2939 = vmatprep.subr.mxu0 0.0
    %2940 = vmatpush1.xpose.msra.mxu0 0.0
    %2941 = vmatprep.subr.mxu0 0.0
    %2942 = vmatpush1.xpose.msra.mxu0 0.0
    %2943 = vmatprep.subr.mxu0 0.0
    %2944 = vmatpush1.xpose.msra.mxu0 0.0
    %2945 = vmatprep.subr.mxu0 0.0
    %2946 = vmatpush1.xpose.msra.mxu0 0.0
    %2947 = vmatprep.subr.mxu0 0.0
    %2948 = vmatpush1.xpose.msra.mxu0 0.0
    %2949 = vmatprep.subr.mxu0 0.0
    %2950 = vmatpush1.xpose.msra.mxu0 0.0
    %2951 = vmatprep.subr.mxu0 0.0
    %2952 = vmatpush1.xpose.msra.mxu0 0.0
    %2953 = vmatprep.subr.mxu0 0.0
    %2954 = vmatpush1.xpose.msra.mxu0 0.0
    %2955 = vmatprep.subr.mxu0 0.0
    %2956 = vmatpush1.xpose.msra.mxu0 0.0
    %2957 = vmatprep.subr.mxu0 0.0
    %2958 = vmatpush1.xpose.msra.mxu0 0.0
    %2959 = vmatprep.subr.mxu0 0.0
    %2960 = vmatpush1.xpose.msra.mxu0 0.0
    %2961 = vmatprep.mubr.f32.mxu0 0.0
    %2962 = vmatmul.mubr.f32.gmra.mrb[0].mxu0 %v2892
    %v2963 = vpop.f32.mrb[0].mxu0
    %v2964 = vadd.f32 %v267, %v2963
    %v2965 = vpop.f32.mrb[0].mxu0
    %2966 = vdwg.mxu0
    %v2967 = vsel %vm562, %v2888, -inf
    %2968 = vmax.xlane.f32.xlu0 %v2967
    %v2969 = vpop.xlane.xlu0 %2968
    %v2970 = vsel %vm562, %v2964, -inf
    %2971 = vmax.xlane.f32.xlu0 %v2970
    %v2972 = vpop.xlane.xlu0 %2971
    %v2973 = vsub.f32 %v2888, %v2969
    %v2974 = vsub.f32 %v2964, %v2972
    %v2975 = vmul.f32 %v2973, 1.442695
    %v2976 = vpow.pop %v2975
    %v2977 = vmul.f32 %v2974, 1.442695
    %v2978 = vpow.pop %v2977
    %v2979 = vsel %vm562, %v2976, 0.0
    %2980 = vadd.xlane.f32.xlu0 %v2979
    %v2981 = vpop.xlane.xlu0 %2980
    %v2982 = vsel %vm562, %v2978, 0.0
    %2983 = vadd.xlane.f32.xlu0 %v2982
    %v2984 = vpop.xlane.xlu0 %2983
    %v2985 = vrcp.pop %v2981
    %v2986 = vrcp.pop %v2984
    %v2987 = vmul.f32 %v2976, %v2985
    %v2988 = vmul.f32 %v2978, %v2986
    %v2990 = vsel %vm562, %v2987, 0
    %2992 = vmatprep.subr.mxu0 0.0
    %2993 = vmatpush1.msra.mxu0 %v2802
    %2994 = vmatprep.subr.mxu0 0.0
    %2995 = vmatpush1.msra.mxu0 0.0
    %2996 = vmatprep.subr.mxu0 0.0
    %2997 = vmatpush1.msra.mxu0 0.0
    %2998 = vmatprep.subr.mxu0 0.0
    %2999 = vmatpush1.msra.mxu0 0.0
    %3000 = vmatprep.subr.mxu0 0.0
    %3001 = vmatpush1.msra.mxu0 0.0
    %3002 = vmatprep.subr.mxu0 0.0
    %3003 = vmatpush1.msra.mxu0 0.0
    %3004 = vmatprep.subr.mxu0 0.0
    %3005 = vmatpush1.msra.mxu0 0.0
    %3006 = vmatprep.subr.mxu0 0.0
    %3007 = vmatpush1.msra.mxu0 0.0
    %3008 = vmatprep.subr.mxu0 0.0
    %3009 = vmatpush1.msra.mxu0 0.0
    %3010 = vmatprep.subr.mxu0 0.0
    %3011 = vmatpush1.msra.mxu0 0.0
    %3012 = vmatprep.subr.mxu0 0.0
    %3013 = vmatpush1.msra.mxu0 0.0
    %3014 = vmatprep.subr.mxu0 0.0
    %3015 = vmatpush1.msra.mxu0 0.0
    %3016 = vmatprep.subr.mxu0 0.0
    %3017 = vmatpush1.msra.mxu0 0.0
    %3018 = vmatprep.subr.mxu0 0.0
    %3019 = vmatpush1.msra.mxu0 0.0
    %3020 = vmatprep.subr.mxu0 0.0
    %3021 = vmatpush1.msra.mxu0 0.0
    %3022 = vmatprep.subr.mxu0 0.0
    %3023 = vmatpush1.msra.mxu0 0.0
    %3024 = vmatprep.subr.mxu0 0.0
    %3025 = vmatpush1.msra.mxu0 0.0
    %3026 = vmatprep.subr.mxu0 0.0
    %3027 = vmatpush1.msra.mxu0 0.0
    %3028 = vmatprep.subr.mxu0 0.0
    %3029 = vmatpush1.msra.mxu0 0.0
    %3030 = vmatprep.subr.mxu0 0.0
    %3031 = vmatpush1.msra.mxu0 0.0
    %3032 = vmatprep.subr.mxu0 0.0
    %3033 = vmatpush1.msra.mxu0 0.0
    %3034 = vmatprep.subr.mxu0 0.0
    %3035 = vmatpush1.msra.mxu0 0.0
    %3036 = vmatprep.subr.mxu0 0.0
    %3037 = vmatpush1.msra.mxu0 0.0
    %3038 = vmatprep.subr.mxu0 0.0
    %3039 = vmatpush1.msra.mxu0 0.0
    %3040 = vmatprep.subr.mxu0 0.0
    %3041 = vmatpush1.msra.mxu0 0.0
    %3042 = vmatprep.subr.mxu0 0.0
    %3043 = vmatpush1.msra.mxu0 0.0
    %3044 = vmatprep.subr.mxu0 0.0
    %3045 = vmatpush1.msra.mxu0 0.0
    %3046 = vmatprep.subr.mxu0 0.0
    %3047 = vmatpush1.msra.mxu0 0.0
    %3048 = vmatprep.subr.mxu0 0.0
    %3049 = vmatpush1.msra.mxu0 0.0
    %3050 = vmatprep.subr.mxu0 0.0
    %3051 = vmatpush1.msra.mxu0 0.0
    %3052 = vmatprep.subr.mxu0 0.0
    %3053 = vmatpush1.msra.mxu0 0.0
    %3054 = vmatprep.subr.mxu0 0.0
    %3055 = vmatpush1.msra.mxu0 0.0
    %3056 = vmatprep.mubr.f32.mxu0 0.0
    %3057 = vmatmul.mubr.f32.gmra.mrb[0].mxu0 %v2990
    %v3058 = vpop.f32.mrb[0].mxu0
    %v3059 = vadd.f32 0.0, %v3058
    %v3060 = vpop.f32.mrb[0].mxu0
    %3061 = vdwg.mxu0
    %v3063 = vsel %vm562, %v2988, 0
    %3065 = vmatprep.subr.mxu0 0.0
    %3066 = vmatpush1.msra.mxu0 %v2807
    %3067 = vmatprep.subr.mxu0 0.0
    %3068 = vmatpush1.msra.mxu0 0.0
    %3069 = vmatprep.subr.mxu0 0.0
    %3070 = vmatpush1.msra.mxu0 0.0
    %3071 = vmatprep.subr.mxu0 0.0
    %3072 = vmatpush1.msra.mxu0 0.0
    %3073 = vmatprep.subr.mxu0 0.0
    %3074 = vmatpush1.msra.mxu0 0.0
    %3075 = vmatprep.subr.mxu0 0.0
    %3076 = vmatpush1.msra.mxu0 0.0
    %3077 = vmatprep.subr.mxu0 0.0
    %3078 = vmatpush1.msra.mxu0 0.0
    %3079 = vmatprep.subr.mxu0 0.0
    %3080 = vmatpush1.msra.mxu0 0.0
    %3081 = vmatprep.subr.mxu0 0.0
    %3082 = vmatpush1.msra.mxu0 0.0
    %3083 = vmatprep.subr.mxu0 0.0
    %3084 = vmatpush1.msra.mxu0 0.0
    %3085 = vmatprep.subr.mxu0 0.0
    %3086 = vmatpush1.msra.mxu0 0.0
    %3087 = vmatprep.subr.mxu0 0.0
    %3088 = vmatpush1.msra.mxu0 0.0
    %3089 = vmatprep.subr.mxu0 0.0
    %3090 = vmatpush1.msra.mxu0 0.0
    %3091 = vmatprep.subr.mxu0 0.0
    %3092 = vmatpush1.msra.mxu0 0.0
    %3093 = vmatprep.subr.mxu0 0.0
    %3094 = vmatpush1.msra.mxu0 0.0
    %3095 = vmatprep.subr.mxu0 0.0
    %3096 = vmatpush1.msra.mxu0 0.0
    %3097 = vmatprep.subr.mxu0 0.0
    %3098 = vmatpush1.msra.mxu0 0.0
    %3099 = vmatprep.subr.mxu0 0.0
    %3100 = vmatpush1.msra.mxu0 0.0
    %3101 = vmatprep.subr.mxu0 0.0
    %3102 = vmatpush1.msra.mxu0 0.0
    %3103 = vmatprep.subr.mxu0 0.0
    %3104 = vmatpush1.msra.mxu0 0.0
    %3105 = vmatprep.subr.mxu0 0.0
    %3106 = vmatpush1.msra.mxu0 0.0
    %3107 = vmatprep.subr.mxu0 0.0
    %3108 = vmatpush1.msra.mxu0 0.0
    %3109 = vmatprep.subr.mxu0 0.0
    %3110 = vmatpush1.msra.mxu0 0.0
    %3111 = vmatprep.subr.mxu0 0.0
    %3112 = vmatpush1.msra.mxu0 0.0
    %3113 = vmatprep.subr.mxu0 0.0
    %3114 = vmatpush1.msra.mxu0 0.0
    %3115 = vmatprep.subr.mxu0 0.0
    %3116 = vmatpush1.msra.mxu0 0.0
    %3117 = vmatprep.subr.mxu0 0.0
    %3118 = vmatpush1.msra.mxu0 0.0
    %3119 = vmatprep.subr.mxu0 0.0
    %3120 = vmatpush1.msra.mxu0 0.0
    %3121 = vmatprep.subr.mxu0 0.0
    %3122 = vmatpush1.msra.mxu0 0.0
    %3123 = vmatprep.subr.mxu0 0.0
    %3124 = vmatpush1.msra.mxu0 0.0
    %3125 = vmatprep.subr.mxu0 0.0
    %3126 = vmatpush1.msra.mxu0 0.0
    %3127 = vmatprep.subr.mxu0 0.0
    %3128 = vmatpush1.msra.mxu0 0.0
    %3129 = vmatprep.mubr.f32.mxu0 0.0
    %3130 = vmatmul.mubr.f32.gmra.mrb[0].mxu0 %v3063
    %v3131 = vpop.f32.mrb[0].mxu0
    %v3132 = vadd.f32 0.0, %v3131
    %v3133 = vpop.f32.mrb[0].mxu0
    %3134 = vdwg.mxu0
    %3135 = vrot.lane.b32.xlu0 %v2642, 120
    %v3136 = vpop.permute.xlu0 %3135
    %3137 = vrot.lane.b32.xlu0 %v2722, 120
    %v3138 = vpop.permute.xlu0 %3137
    %v3139 = vsel %vm562, %v3136, 0
    %v3141 = vsel %vm562, %v3138, 0
    %3143 = vmatprep.subr.mxu0 0.0
    %3144 = vmatpush1.xpose.msra.mxu0 %v3141
    %3145 = vmatprep.subr.mxu0 0.0
    %3146 = vmatpush1.xpose.msra.mxu0 0.0
    %3147 = vmatprep.subr.mxu0 0.0
    %3148 = vmatpush1.xpose.msra.mxu0 0.0
    %3149 = vmatprep.subr.mxu0 0.0
    %3150 = vmatpush1.xpose.msra.mxu0 0.0
    %3151 = vmatprep.subr.mxu0 0.0
    %3152 = vmatpush1.xpose.msra.mxu0 0.0
    %3153 = vmatprep.subr.mxu0 0.0
    %3154 = vmatpush1.xpose.msra.mxu0 0.0
    %3155 = vmatprep.subr.mxu0 0.0
    %3156 = vmatpush1.xpose.msra.mxu0 0.0
    %3157 = vmatprep.subr.mxu0 0.0
    %3158 = vmatpush1.xpose.msra.mxu0 0.0
    %3159 = vmatprep.subr.mxu0 0.0
    %3160 = vmatpush1.xpose.msra.mxu0 0.0
    %3161 = vmatprep.subr.mxu0 0.0
    %3162 = vmatpush1.xpose.msra.mxu0 0.0
    %3163 = vmatprep.subr.mxu0 0.0
    %3164 = vmatpush1.xpose.msra.mxu0 0.0
    %3165 = vmatprep.subr.mxu0 0.0
    %3166 = vmatpush1.xpose.msra.mxu0 0.0
    %3167 = vmatprep.subr.mxu0 0.0
    %3168 = vmatpush1.xpose.msra.mxu0 0.0
    %3169 = vmatprep.subr.mxu0 0.0
    %3170 = vmatpush1.xpose.msra.mxu0 0.0
    %3171 = vmatprep.subr.mxu0 0.0
    %3172 = vmatpush1.xpose.msra.mxu0 0.0
    %3173 = vmatprep.subr.mxu0 0.0
    %3174 = vmatpush1.xpose.msra.mxu0 0.0
    %3175 = vmatprep.subr.mxu0 0.0
    %3176 = vmatpush1.xpose.msra.mxu0 0.0
    %3177 = vmatprep.subr.mxu0 0.0
    %3178 = vmatpush1.xpose.msra.mxu0 0.0
    %3179 = vmatprep.subr.mxu0 0.0
    %3180 = vmatpush1.xpose.msra.mxu0 0.0
    %3181 = vmatprep.subr.mxu0 0.0
    %3182 = vmatpush1.xpose.msra.mxu0 0.0
    %3183 = vmatprep.subr.mxu0 0.0
    %3184 = vmatpush1.xpose.msra.mxu0 0.0
    %3185 = vmatprep.subr.mxu0 0.0
    %3186 = vmatpush1.xpose.msra.mxu0 0.0
    %3187 = vmatprep.subr.mxu0 0.0
    %3188 = vmatpush1.xpose.msra.mxu0 0.0
    %3189 = vmatprep.subr.mxu0 0.0
    %3190 = vmatpush1.xpose.msra.mxu0 0.0
    %3191 = vmatprep.subr.mxu0 0.0
    %3192 = vmatpush1.xpose.msra.mxu0 0.0
    %3193 = vmatprep.subr.mxu0 0.0
    %3194 = vmatpush1.xpose.msra.mxu0 0.0
    %3195 = vmatprep.subr.mxu0 0.0
    %3196 = vmatpush1.xpose.msra.mxu0 0.0
    %3197 = vmatprep.subr.mxu0 0.0
    %3198 = vmatpush1.xpose.msra.mxu0 0.0
    %3199 = vmatprep.subr.mxu0 0.0
    %3200 = vmatpush1.xpose.msra.mxu0 0.0
    %3201 = vmatprep.subr.mxu0 0.0
    %3202 = vmatpush1.xpose.msra.mxu0 0.0
    %3203 = vmatprep.subr.mxu0 0.0
    %3204 = vmatpush1.xpose.msra.mxu0 0.0
    %3205 = vmatprep.subr.mxu0 0.0
    %3206 = vmatpush1.xpose.msra.mxu0 0.0
    %3207 = vmatprep.mubr.f32.mxu0 0.0
    %3208 = vmatmul.mubr.f32.gmra.mrb[0].mxu0 %v3139
    %v3209 = vpop.f32.mrb[0].mxu0
    %v3210 = vadd.f32 %v268, %v3209
    %v3211 = vpop.f32.mrb[0].mxu0
    %3212 = vdwg.mxu0
    %3213 = vrot.lane.b32.xlu0 %v2647, 120
    %v3214 = vpop.permute.xlu0 %3213
    %3215 = vrot.lane.b32.xlu0 %v2727, 120
    %v3216 = vpop.permute.xlu0 %3215
    %v3217 = vsel %vm562, %v3214, 0
    %v3219 = vsel %vm562, %v3216, 0
    %3221 = vmatprep.subr.mxu0 0.0
    %3222 = vmatpush1.xpose.msra.mxu0 %v3219
    %3223 = vmatprep.subr.mxu0 0.0
    %3224 = vmatpush1.xpose.msra.mxu0 0.0
    %3225 = vmatprep.subr.mxu0 0.0
    %3226 = vmatpush1.xpose.msra.mxu0 0.0
    %3227 = vmatprep.subr.mxu0 0.0
    %3228 = vmatpush1.xpose.msra.mxu0 0.0
    %3229 = vmatprep.subr.mxu0 0.0
    %3230 = vmatpush1.xpose.msra.mxu0 0.0
    %3231 = vmatprep.subr.mxu0 0.0
    %3232 = vmatpush1.xpose.msra.mxu0 0.0
    %3233 = vmatprep.subr.mxu0 0.0
    %3234 = vmatpush1.xpose.msra.mxu0 0.0
    %3235 = vmatprep.subr.mxu0 0.0
    %3236 = vmatpush1.xpose.msra.mxu0 0.0
    %3237 = vmatprep.subr.mxu0 0.0
    %3238 = vmatpush1.xpose.msra.mxu0 0.0
    %3239 = vmatprep.subr.mxu0 0.0
    %3240 = vmatpush1.xpose.msra.mxu0 0.0
    %3241 = vmatprep.subr.mxu0 0.0
    %3242 = vmatpush1.xpose.msra.mxu0 0.0
    %3243 = vmatprep.subr.mxu0 0.0
    %3244 = vmatpush1.xpose.msra.mxu0 0.0
    %3245 = vmatprep.subr.mxu0 0.0
    %3246 = vmatpush1.xpose.msra.mxu0 0.0
    %3247 = vmatprep.subr.mxu0 0.0
    %3248 = vmatpush1.xpose.msra.mxu0 0.0
    %3249 = vmatprep.subr.mxu0 0.0
    %3250 = vmatpush1.xpose.msra.mxu0 0.0
    %3251 = vmatprep.subr.mxu0 0.0
    %3252 = vmatpush1.xpose.msra.mxu0 0.0
    %3253 = vmatprep.subr.mxu0 0.0
    %3254 = vmatpush1.xpose.msra.mxu0 0.0
    %3255 = vmatprep.subr.mxu0 0.0
    %3256 = vmatpush1.xpose.msra.mxu0 0.0
    %3257 = vmatprep.subr.mxu0 0.0
    %3258 = vmatpush1.xpose.msra.mxu0 0.0
    %3259 = vmatprep.subr.mxu0 0.0
    %3260 = vmatpush1.xpose.msra.mxu0 0.0
    %3261 = vmatprep.subr.mxu0 0.0
    %3262 = vmatpush1.xpose.msra.mxu0 0.0
    %3263 = vmatprep.subr.mxu0 0.0
    %3264 = vmatpush1.xpose.msra.mxu0 0.0
    %3265 = vmatprep.subr.mxu0 0.0
    %3266 = vmatpush1.xpose.msra.mxu0 0.0
    %3267 = vmatprep.subr.mxu0 0.0
    %3268 = vmatpush1.xpose.msra.mxu0 0.0
    %3269 = vmatprep.subr.mxu0 0.0
    %3270 = vmatpush1.xpose.msra.mxu0 0.0
    %3271 = vmatprep.subr.mxu0 0.0
    %3272 = vmatpush1.xpose.msra.mxu0 0.0
    %3273 = vmatprep.subr.mxu0 0.0
    %3274 = vmatpush1.xpose.msra.mxu0 0.0
    %3275 = vmatprep.subr.mxu0 0.0
    %3276 = vmatpush1.xpose.msra.mxu0 0.0
    %3277 = vmatprep.subr.mxu0 0.0
    %3278 = vmatpush1.xpose.msra.mxu0 0.0
    %3279 = vmatprep.subr.mxu0 0.0
    %3280 = vmatpush1.xpose.msra.mxu0 0.0
    %3281 = vmatprep.subr.mxu0 0.0
    %3282 = vmatpush1.xpose.msra.mxu0 0.0
    %3283 = vmatprep.subr.mxu0 0.0
    %3284 = vmatpush1.xpose.msra.mxu0 0.0
    %3285 = vmatprep.mubr.f32.mxu0 0.0
    %3286 = vmatmul.mubr.f32.gmra.mrb[0].mxu0 %v3217
    %v3287 = vpop.f32.mrb[0].mxu0
    %v3288 = vadd.f32 %v269, %v3287
    %v3289 = vpop.f32.mrb[0].mxu0
    %3290 = vdwg.mxu0
    %v3291 = vsel %vm562, %v3210, -inf
    %3292 = vmax.xlane.f32.xlu0 %v3291
    %v3293 = vpop.xlane.xlu0 %3292
    %v3294 = vsel %vm562, %v3288, -inf
    %3295 = vmax.xlane.f32.xlu0 %v3294
    %v3296 = vpop.xlane.xlu0 %3295
    %v3297 = vsub.f32 %v3210, %v3293
    %v3298 = vsub.f32 %v3288, %v3296
    %v3299 = vmul.f32 %v3297, 1.442695
    %v3300 = vpow.pop %v3299
    %v3301 = vmul.f32 %v3298, 1.442695
    %v3302 = vpow.pop %v3301
    %v3303 = vsel %vm562, %v3300, 0.0
    %3304 = vadd.xlane.f32.xlu0 %v3303
    %v3305 = vpop.xlane.xlu0 %3304
    %v3306 = vsel %vm562, %v3302, 0.0
    %3307 = vadd.xlane.f32.xlu0 %v3306
    %v3308 = vpop.xlane.xlu0 %3307
    %v3309 = vrcp.pop %v3305
    %v3310 = vrcp.pop %v3308
    %v3311 = vmul.f32 %v3300, %v3309
    %v3312 = vmul.f32 %v3302, %v3310
    %3314 = vrot.lane.b32.xlu0 %v2802, 120
    %v3315 = vpop.permute.xlu0 %3314
    %v3318 = vsel %vm562, %v3311, 0
    %3320 = vmatprep.subr.mxu0 0.0
    %3321 = vmatpush1.msra.mxu0 %v3315
    %3322 = vmatprep.subr.mxu0 0.0
    %3323 = vmatpush1.msra.mxu0 0.0
    %3324 = vmatprep.subr.mxu0 0.0
    %3325 = vmatpush1.msra.mxu0 0.0
    %3326 = vmatprep.subr.mxu0 0.0
    %3327 = vmatpush1.msra.mxu0 0.0
    %3328 = vmatprep.subr.mxu0 0.0
    %3329 = vmatpush1.msra.mxu0 0.0
    %3330 = vmatprep.subr.mxu0 0.0
    %3331 = vmatpush1.msra.mxu0 0.0
    %3332 = vmatprep.subr.mxu0 0.0
    %3333 = vmatpush1.msra.mxu0 0.0
    %3334 = vmatprep.subr.mxu0 0.0
    %3335 = vmatpush1.msra.mxu0 0.0
    %3336 = vmatprep.subr.mxu0 0.0
    %3337 = vmatpush1.msra.mxu0 0.0
    %3338 = vmatprep.subr.mxu0 0.0
    %3339 = vmatpush1.msra.mxu0 0.0
    %3340 = vmatprep.subr.mxu0 0.0
    %3341 = vmatpush1.msra.mxu0 0.0
    %3342 = vmatprep.subr.mxu0 0.0
    %3343 = vmatpush1.msra.mxu0 0.0
    %3344 = vmatprep.subr.mxu0 0.0
    %3345 = vmatpush1.msra.mxu0 0.0
    %3346 = vmatprep.subr.mxu0 0.0
    %3347 = vmatpush1.msra.mxu0 0.0
    %3348 = vmatprep.subr.mxu0 0.0
    %3349 = vmatpush1.msra.mxu0 0.0
    %3350 = vmatprep.subr.mxu0 0.0
    %3351 = vmatpush1.msra.mxu0 0.0
    %3352 = vmatprep.subr.mxu0 0.0
    %3353 = vmatpush1.msra.mxu0 0.0
    %3354 = vmatprep.subr.mxu0 0.0
    %3355 = vmatpush1.msra.mxu0 0.0
    %3356 = vmatprep.subr.mxu0 0.0
    %3357 = vmatpush1.msra.mxu0 0.0
    %3358 = vmatprep.subr.mxu0 0.0
    %3359 = vmatpush1.msra.mxu0 0.0
    %3360 = vmatprep.subr.mxu0 0.0
    %3361 = vmatpush1.msra.mxu0 0.0
    %3362 = vmatprep.subr.mxu0 0.0
    %3363 = vmatpush1.msra.mxu0 0.0
    %3364 = vmatprep.subr.mxu0 0.0
    %3365 = vmatpush1.msra.mxu0 0.0
    %3366 = vmatprep.subr.mxu0 0.0
    %3367 = vmatpush1.msra.mxu0 0.0
    %3368 = vmatprep.subr.mxu0 0.0
    %3369 = vmatpush1.msra.mxu0 0.0
    %3370 = vmatprep.subr.mxu0 0.0
    %3371 = vmatpush1.msra.mxu0 0.0
    %3372 = vmatprep.subr.mxu0 0.0
    %3373 = vmatpush1.msra.mxu0 0.0
    %3374 = vmatprep.subr.mxu0 0.0
    %3375 = vmatpush1.msra.mxu0 0.0
    %3376 = vmatprep.subr.mxu0 0.0
    %3377 = vmatpush1.msra.mxu0 0.0
    %3378 = vmatprep.subr.mxu0 0.0
    %3379 = vmatpush1.msra.mxu0 0.0
    %3380 = vmatprep.subr.mxu0 0.0
    %3381 = vmatpush1.msra.mxu0 0.0
    %3382 = vmatprep.subr.mxu0 0.0
    %3383 = vmatpush1.msra.mxu0 0.0
    %3384 = vmatprep.mubr.f32.mxu0 0.0
    %3385 = vmatmul.mubr.f32.gmra.mrb[0].mxu0 %v3318
    %v3386 = vpop.f32.mrb[0].mxu0
    %v3387 = vadd.f32 0.0, %v3386
    %v3388 = vpop.f32.mrb[0].mxu0
    %3389 = vdwg.mxu0
    %3391 = vrot.lane.b32.xlu0 %v2807, 120
    %v3392 = vpop.permute.xlu0 %3391
    %v3395 = vsel %vm562, %v3312, 0
    %3397 = vmatprep.subr.mxu0 0.0
    %3398 = vmatpush1.msra.mxu0 %v3392
    %3399 = vmatprep.subr.mxu0 0.0
    %3400 = vmatpush1.msra.mxu0 0.0
    %3401 = vmatprep.subr.mxu0 0.0
    %3402 = vmatpush1.msra.mxu0 0.0
    %3403 = vmatprep.subr.mxu0 0.0
    %3404 = vmatpush1.msra.mxu0 0.0
    %3405 = vmatprep.subr.mxu0 0.0
    %3406 = vmatpush1.msra.mxu0 0.0
    %3407 = vmatprep.subr.mxu0 0.0
    %3408 = vmatpush1.msra.mxu0 0.0
    %3409 = vmatprep.subr.mxu0 0.0
    %3410 = vmatpush1.msra.mxu0 0.0
    %3411 = vmatprep.subr.mxu0 0.0
    %3412 = vmatpush1.msra.mxu0 0.0
    %3413 = vmatprep.subr.mxu0 0.0
    %3414 = vmatpush1.msra.mxu0 0.0
    %3415 = vmatprep.subr.mxu0 0.0
    %3416 = vmatpush1.msra.mxu0 0.0
    %3417 = vmatprep.subr.mxu0 0.0
    %3418 = vmatpush1.msra.mxu0 0.0
    %3419 = vmatprep.subr.mxu0 0.0
    %3420 = vmatpush1.msra.mxu0 0.0
    %3421 = vmatprep.subr.mxu0 0.0
    %3422 = vmatpush1.msra.mxu0 0.0
    %3423 = vmatprep.subr.mxu0 0.0
    %3424 = vmatpush1.msra.mxu0 0.0
    %3425 = vmatprep.subr.mxu0 0.0
    %3426 = vmatpush1.msra.mxu0 0.0
    %3427 = vmatprep.subr.mxu0 0.0
    %3428 = vmatpush1.msra.mxu0 0.0
    %3429 = vmatprep.subr.mxu0 0.0
    %3430 = vmatpush1.msra.mxu0 0.0
    %3431 = vmatprep.subr.mxu0 0.0
    %3432 = vmatpush1.msra.mxu0 0.0
    %3433 = vmatprep.subr.mxu0 0.0
    %3434 = vmatpush1.msra.mxu0 0.0
    %3435 = vmatprep.subr.mxu0 0.0
    %3436 = vmatpush1.msra.mxu0 0.0
    %3437 = vmatprep.subr.mxu0 0.0
    %3438 = vmatpush1.msra.mxu0 0.0
    %3439 = vmatprep.subr.mxu0 0.0
    %3440 = vmatpush1.msra.mxu0 0.0
    %3441 = vmatprep.subr.mxu0 0.0
    %3442 = vmatpush1.msra.mxu0 0.0
    %3443 = vmatprep.subr.mxu0 0.0
    %3444 = vmatpush1.msra.mxu0 0.0
    %3445 = vmatprep.subr.mxu0 0.0
    %3446 = vmatpush1.msra.mxu0 0.0
    %3447 = vmatprep.subr.mxu0 0.0
    %3448 = vmatpush1.msra.mxu0 0.0
    %3449 = vmatprep.subr.mxu0 0.0
    %3450 = vmatpush1.msra.mxu0 0.0
    %3451 = vmatprep.subr.mxu0 0.0
    %3452 = vmatpush1.msra.mxu0 0.0
    %3453 = vmatprep.subr.mxu0 0.0
    %3454 = vmatpush1.msra.mxu0 0.0
    %3455 = vmatprep.subr.mxu0 0.0
    %3456 = vmatpush1.msra.mxu0 0.0
    %3457 = vmatprep.subr.mxu0 0.0
    %3458 = vmatpush1.msra.mxu0 0.0
    %3459 = vmatprep.subr.mxu0 0.0
    %3460 = vmatpush1.msra.mxu0 0.0
    %3461 = vmatprep.mubr.f32.mxu0 0.0
    %3462 = vmatmul.mubr.f32.gmra.mrb[0].mxu0 %v3395
    %v3463 = vpop.f32.mrb[0].mxu0
    %v3464 = vadd.f32 0.0, %v3463
    %v3465 = vpop.f32.mrb[0].mxu0
    %3466 = vdwg.mxu0
    %v3468 = vsel %vm562, %v3387, 0
    %v3471 = vsel %vm562, %v3464, 0
    %3473 = vmatprep.subr.mxu0 0.0
    %3474 = vmatpush1.msra.mxu0 %v2812
    %3475 = vmatprep.subr.mxu0 0.0
    %3476 = vmatpush1.msra.mxu0 0.0
    %3477 = vmatprep.subr.mxu0 0.0
    %3478 = vmatpush1.msra.mxu0 0.0
    %3479 = vmatprep.subr.mxu0 0.0
    %3480 = vmatpush1.msra.mxu0 0.0
    %3481 = vmatprep.subr.mxu0 0.0
    %3482 = vmatpush1.msra.mxu0 0.0
    %3483 = vmatprep.subr.mxu0 0.0
    %3484 = vmatpush1.msra.mxu0 0.0
    %3485 = vmatprep.subr.mxu0 0.0
    %3486 = vmatpush1.msra.mxu0 0.0
    %3487 = vmatprep.subr.mxu0 0.0
    %3488 = vmatpush1.msra.mxu0 0.0
    %3489 = vmatprep.subr.mxu0 0.0
    %3490 = vmatpush1.msra.mxu0 0.0
    %3491 = vmatprep.subr.mxu0 0.0
    %3492 = vmatpush1.msra.mxu0 0.0
    %3493 = vmatprep.subr.mxu0 0.0
    %3494 = vmatpush1.msra.mxu0 0.0
    %3495 = vmatprep.subr.mxu0 0.0
    %3496 = vmatpush1.msra.mxu0 0.0
    %3497 = vmatprep.subr.mxu0 0.0
    %3498 = vmatpush1.msra.mxu0 0.0
    %3499 = vmatprep.subr.mxu0 0.0
    %3500 = vmatpush1.msra.mxu0 0.0
    %3501 = vmatprep.subr.mxu0 0.0
    %3502 = vmatpush1.msra.mxu0 0.0
    %3503 = vmatprep.subr.mxu0 0.0
    %3504 = vmatpush1.msra.mxu0 0.0
    %3505 = vmatprep.subr.mxu0 0.0
    %3506 = vmatpush1.msra.mxu0 0.0
    %3507 = vmatprep.subr.mxu0 0.0
    %3508 = vmatpush1.msra.mxu0 0.0
    %3509 = vmatprep.subr.mxu0 0.0
    %3510 = vmatpush1.msra.mxu0 0.0
    %3511 = vmatprep.subr.mxu0 0.0
    %3512 = vmatpush1.msra.mxu0 0.0
    %3513 = vmatprep.subr.mxu0 0.0
    %3514 = vmatpush1.msra.mxu0 0.0
    %3515 = vmatprep.subr.mxu0 0.0
    %3516 = vmatpush1.msra.mxu0 0.0
    %3517 = vmatprep.subr.mxu0 0.0
    %3518 = vmatpush1.msra.mxu0 0.0
    %3519 = vmatprep.subr.mxu0 0.0
    %3520 = vmatpush1.msra.mxu0 0.0
    %3521 = vmatprep.subr.mxu0 0.0
    %3522 = vmatpush1.msra.mxu0 0.0
    %3523 = vmatprep.subr.mxu0 0.0
    %3524 = vmatpush1.msra.mxu0 0.0
    %3525 = vmatprep.subr.mxu0 0.0
    %3526 = vmatpush1.msra.mxu0 0.0
    %3527 = vmatprep.subr.mxu0 0.0
    %3528 = vmatpush1.msra.mxu0 0.0
    %3529 = vmatprep.subr.mxu0 0.0
    %3530 = vmatpush1.msra.mxu0 0.0
    %3531 = vmatprep.subr.mxu0 0.0
    %3532 = vmatpush1.msra.mxu0 0.0
    %3533 = vmatprep.subr.mxu0 0.0
    %3534 = vmatpush1.msra.mxu0 0.0
    %3535 = vmatprep.subr.mxu0 0.0
    %3536 = vmatpush1.msra.mxu0 0.0
    %3537 = vmatprep.mubr.f32.mxu0 0.0
    %3538 = vmatmul.mubr.f32.gmra.mrb[0].mxu0 %v3468
    %v3539 = vpop.f32.mrb[0].mxu0
    %v3540 = vadd.f32 0.0, %v3539
    %v3541 = vpop.f32.mrb[0].mxu0
    %3542 = vmatprep.mubr.f32.mxu0 0.0
    %3543 = vmatmul.mubr.f32.gmra.mrb[0].mxu0 %v3471
    %v3544 = vpop.f32.mrb[0].mxu0
    %v3545 = vadd.f32 0.0, %v3544
    %v3546 = vpop.f32.mrb[0].mxu0
    %3547 = vdwg.mxu0
    %v3549 = vsel %vm562, %v3059, 0
    %v3552 = vsel %vm562, %v3132, 0
    %3554 = vmatprep.subr.mxu0 0.0
    %3555 = vmatpush1.msra.mxu0 %v2811
    %3556 = vmatprep.subr.mxu0 0.0
    %3557 = vmatpush1.msra.mxu0 0.0
    %3558 = vmatprep.subr.mxu0 0.0
    %3559 = vmatpush1.msra.mxu0 0.0
    %3560 = vmatprep.subr.mxu0 0.0
    %3561 = vmatpush1.msra.mxu0 0.0
    %3562 = vmatprep.subr.mxu0 0.0
    %3563 = vmatpush1.msra.mxu0 0.0
    %3564 = vmatprep.subr.mxu0 0.0
    %3565 = vmatpush1.msra.mxu0 0.0
    %3566 = vmatprep.subr.mxu0 0.0
    %3567 = vmatpush1.msra.mxu0 0.0
    %3568 = vmatprep.subr.mxu0 0.0
    %3569 = vmatpush1.msra.mxu0 0.0
    %3570 = vmatprep.subr.mxu0 0.0
    %3571 = vmatpush1.msra.mxu0 0.0
    %3572 = vmatprep.subr.mxu0 0.0
    %3573 = vmatpush1.msra.mxu0 0.0
    %3574 = vmatprep.subr.mxu0 0.0
    %3575 = vmatpush1.msra.mxu0 0.0
    %3576 = vmatprep.subr.mxu0 0.0
    %3577 = vmatpush1.msra.mxu0 0.0
    %3578 = vmatprep.subr.mxu0 0.0
    %3579 = vmatpush1.msra.mxu0 0.0
    %3580 = vmatprep.subr.mxu0 0.0
    %3581 = vmatpush1.msra.mxu0 0.0
    %3582 = vmatprep.subr.mxu0 0.0
    %3583 = vmatpush1.msra.mxu0 0.0
    %3584 = vmatprep.subr.mxu0 0.0
    %3585 = vmatpush1.msra.mxu0 0.0
    %3586 = vmatprep.subr.mxu0 0.0
    %3587 = vmatpush1.msra.mxu0 0.0
    %3588 = vmatprep.subr.mxu0 0.0
    %3589 = vmatpush1.msra.mxu0 0.0
    %3590 = vmatprep.subr.mxu0 0.0
    %3591 = vmatpush1.msra.mxu0 0.0
    %3592 = vmatprep.subr.mxu0 0.0
    %3593 = vmatpush1.msra.mxu0 0.0
    %3594 = vmatprep.subr.mxu0 0.0
    %3595 = vmatpush1.msra.mxu0 0.0
    %3596 = vmatprep.subr.mxu0 0.0
    %3597 = vmatpush1.msra.mxu0 0.0
    %3598 = vmatprep.subr.mxu0 0.0
    %3599 = vmatpush1.msra.mxu0 0.0
    %3600 = vmatprep.subr.mxu0 0.0
    %3601 = vmatpush1.msra.mxu0 0.0
    %3602 = vmatprep.subr.mxu0 0.0
    %3603 = vmatpush1.msra.mxu0 0.0
    %3604 = vmatprep.subr.mxu0 0.0
    %3605 = vmatpush1.msra.mxu0 0.0
    %3606 = vmatprep.subr.mxu0 0.0
    %3607 = vmatpush1.msra.mxu0 0.0
    %3608 = vmatprep.subr.mxu0 0.0
    %3609 = vmatpush1.msra.mxu0 0.0
    %3610 = vmatprep.subr.mxu0 0.0
    %3611 = vmatpush1.msra.mxu0 0.0
    %3612 = vmatprep.subr.mxu0 0.0
    %3613 = vmatpush1.msra.mxu0 0.0
    %3614 = vmatprep.subr.mxu0 0.0
    %3615 = vmatpush1.msra.mxu0 0.0
    %3616 = vmatprep.subr.mxu0 0.0
    %3617 = vmatpush1.msra.mxu0 0.0
    %3618 = vmatprep.mubr.f32.mxu0 0.0
    %3619 = vmatmul.mubr.f32.gmra.mrb[0].mxu0 %v3549
    %v3620 = vpop.f32.mrb[0].mxu0
    %v3621 = vadd.f32 %v3540, %v3620
    %v3622 = vpop.f32.mrb[0].mxu0
    %3623 = vmatprep.mubr.f32.mxu0 0.0
    %3624 = vmatmul.mubr.f32.gmra.mrb[0].mxu0 %v3552
    %v3625 = vpop.f32.mrb[0].mxu0
    %v3626 = vadd.f32 %v3545, %v3625
    %v3627 = vpop.f32.mrb[0].mxu0
    %3628 = vdwg.mxu0
    %3629 = vrot.lane.b32.xlu0 %v2642, 112
    %v3630 = vpop.permute.xlu0 %3629
    %3631 = vrot.lane.b32.xlu0 %v2722, 112
    %v3632 = vpop.permute.xlu0 %3631
    %v3633 = vsel %vm562, %v3630, 0
    %v3635 = vsel %vm562, %v3632, 0
    %3637 = vmatprep.subr.mxu0 0.0
    %3638 = vmatpush1.xpose.msra.mxu0 %v3635
    %3639 = vmatprep.subr.mxu0 0.0
    %3640 = vmatpush1.xpose.msra.mxu0 0.0
    %3641 = vmatprep.subr.mxu0 0.0
    %3642 = vmatpush1.xpose.msra.mxu0 0.0
    %3643 = vmatprep.subr.mxu0 0.0
    %3644 = vmatpush1.xpose.msra.mxu0 0.0
    %3645 = vmatprep.subr.mxu0 0.0
    %3646 = vmatpush1.xpose.msra.mxu0 0.0
    %3647 = vmatprep.subr.mxu0 0.0
    %3648 = vmatpush1.xpose.msra.mxu0 0.0
    %3649 = vmatprep.subr.mxu0 0.0
    %3650 = vmatpush1.xpose.msra.mxu0 0.0
    %3651 = vmatprep.subr.mxu0 0.0
    %3652 = vmatpush1.xpose.msra.mxu0 0.0
    %3653 = vmatprep.subr.mxu0 0.0
    %3654 = vmatpush1.xpose.msra.mxu0 0.0
    %3655 = vmatprep.subr.mxu0 0.0
    %3656 = vmatpush1.xpose.msra.mxu0 0.0
    %3657 = vmatprep.subr.mxu0 0.0
    %3658 = vmatpush1.xpose.msra.mxu0 0.0
    %3659 = vmatprep.subr.mxu0 0.0
    %3660 = vmatpush1.xpose.msra.mxu0 0.0
    %3661 = vmatprep.subr.mxu0 0.0
    %3662 = vmatpush1.xpose.msra.mxu0 0.0
    %3663 = vmatprep.subr.mxu0 0.0
    %3664 = vmatpush1.xpose.msra.mxu0 0.0
    %3665 = vmatprep.subr.mxu0 0.0
    %3666 = vmatpush1.xpose.msra.mxu0 0.0
    %3667 = vmatprep.subr.mxu0 0.0
    %3668 = vmatpush1.xpose.msra.mxu0 0.0
    %3669 = vmatprep.subr.mxu0 0.0
    %3670 = vmatpush1.xpose.msra.mxu0 0.0
    %3671 = vmatprep.subr.mxu0 0.0
    %3672 = vmatpush1.xpose.msra.mxu0 0.0
    %3673 = vmatprep.subr.mxu0 0.0
    %3674 = vmatpush1.xpose.msra.mxu0 0.0
    %3675 = vmatprep.subr.mxu0 0.0
    %3676 = vmatpush1.xpose.msra.mxu0 0.0
    %3677 = vmatprep.subr.mxu0 0.0
    %3678 = vmatpush1.xpose.msra.mxu0 0.0
    %3679 = vmatprep.subr.mxu0 0.0
    %3680 = vmatpush1.xpose.msra.mxu0 0.0
    %3681 = vmatprep.subr.mxu0 0.0
    %3682 = vmatpush1.xpose.msra.mxu0 0.0
    %3683 = vmatprep.subr.mxu0 0.0
    %3684 = vmatpush1.xpose.msra.mxu0 0.0
    %3685 = vmatprep.subr.mxu0 0.0
    %3686 = vmatpush1.xpose.msra.mxu0 0.0
    %3687 = vmatprep.subr.mxu0 0.0
    %3688 = vmatpush1.xpose.msra.mxu0 0.0
    %3689 = vmatprep.subr.mxu0 0.0
    %3690 = vmatpush1.xpose.msra.mxu0 0.0
    %3691 = vmatprep.subr.mxu0 0.0
    %3692 = vmatpush1.xpose.msra.mxu0 0.0
    %3693 = vmatprep.subr.mxu0 0.0
    %3694 = vmatpush1.xpose.msra.mxu0 0.0
    %3695 = vmatprep.subr.mxu0 0.0
    %3696 = vmatpush1.xpose.msra.mxu0 0.0
    %3697 = vmatprep.subr.mxu0 0.0
    %3698 = vmatpush1.xpose.msra.mxu0 0.0
    %3699 = vmatprep.subr.mxu0 0.0
    %3700 = vmatpush1.xpose.msra.mxu0 0.0
    %3701 = vmatprep.mubr.f32.mxu0 0.0
    %3702 = vmatmul.mubr.f32.gmra.mrb[0].mxu0 %v3633
    %v3703 = vpop.f32.mrb[0].mxu0
    %v3704 = vadd.f32 %v270, %v3703
    %v3705 = vpop.f32.mrb[0].mxu0
    %3706 = vdwg.mxu0
    %3707 = vrot.lane.b32.xlu0 %v2647, 112
    %v3708 = vpop.permute.xlu0 %3707
    %3709 = vrot.lane.b32.xlu0 %v2727, 112
    %v3710 = vpop.permute.xlu0 %3709
    %v3711 = vsel %vm562, %v3708, 0
    %v3713 = vsel %vm562, %v3710, 0
    %3715 = vmatprep.subr.mxu0 0.0
    %3716 = vmatpush1.xpose.msra.mxu0 %v3713
    %3717 = vmatprep.subr.mxu0 0.0
    %3718 = vmatpush1.xpose.msra.mxu0 0.0
    %3719 = vmatprep.subr.mxu0 0.0
    %3720 = vmatpush1.xpose.msra.mxu0 0.0
    %3721 = vmatprep.subr.mxu0 0.0
    %3722 = vmatpush1.xpose.msra.mxu0 0.0
    %3723 = vmatprep.subr.mxu0 0.0
    %3724 = vmatpush1.xpose.msra.mxu0 0.0
    %3725 = vmatprep.subr.mxu0 0.0
    %3726 = vmatpush1.xpose.msra.mxu0 0.0
    %3727 = vmatprep.subr.mxu0 0.0
    %3728 = vmatpush1.xpose.msra.mxu0 0.0
    %3729 = vmatprep.subr.mxu0 0.0
    %3730 = vmatpush1.xpose.msra.mxu0 0.0
    %3731 = vmatprep.subr.mxu0 0.0
    %3732 = vmatpush1.xpose.msra.mxu0 0.0
    %3733 = vmatprep.subr.mxu0 0.0
    %3734 = vmatpush1.xpose.msra.mxu0 0.0
    %3735 = vmatprep.subr.mxu0 0.0
    %3736 = vmatpush1.xpose.msra.mxu0 0.0
    %3737 = vmatprep.subr.mxu0 0.0
    %3738 = vmatpush1.xpose.msra.mxu0 0.0
    %3739 = vmatprep.subr.mxu0 0.0
    %3740 = vmatpush1.xpose.msra.mxu0 0.0
    %3741 = vmatprep.subr.mxu0 0.0
    %3742 = vmatpush1.xpose.msra.mxu0 0.0
    %3743 = vmatprep.subr.mxu0 0.0
    %3744 = vmatpush1.xpose.msra.mxu0 0.0
    %3745 = vmatprep.subr.mxu0 0.0
    %3746 = vmatpush1.xpose.msra.mxu0 0.0
    %3747 = vmatprep.subr.mxu0 0.0
    %3748 = vmatpush1.xpose.msra.mxu0 0.0
    %3749 = vmatprep.subr.mxu0 0.0
    %3750 = vmatpush1.xpose.msra.mxu0 0.0
    %3751 = vmatprep.subr.mxu0 0.0
    %3752 = vmatpush1.xpose.msra.mxu0 0.0
    %3753 = vmatprep.subr.mxu0 0.0
    %3754 = vmatpush1.xpose.msra.mxu0 0.0
    %3755 = vmatprep.subr.mxu0 0.0
    %3756 = vmatpush1.xpose.msra.mxu0 0.0
    %3757 = vmatprep.subr.mxu0 0.0
    %3758 = vmatpush1.xpose.msra.mxu0 0.0
    %3759 = vmatprep.subr.mxu0 0.0
    %3760 = vmatpush1.xpose.msra.mxu0 0.0
    %3761 = vmatprep.subr.mxu0 0.0
    %3762 = vmatpush1.xpose.msra.mxu0 0.0
    %3763 = vmatprep.subr.mxu0 0.0
    %3764 = vmatpush1.xpose.msra.mxu0 0.0
    %3765 = vmatprep.subr.mxu0 0.0
    %3766 = vmatpush1.xpose.msra.mxu0 0.0
    %3767 = vmatprep.subr.mxu0 0.0
    %3768 = vmatpush1.xpose.msra.mxu0 0.0
    %3769 = vmatprep.subr.mxu0 0.0
    %3770 = vmatpush1.xpose.msra.mxu0 0.0
    %3771 = vmatprep.subr.mxu0 0.0
    %3772 = vmatpush1.xpose.msra.mxu0 0.0
    %3773 = vmatprep.subr.mxu0 0.0
    %3774 = vmatpush1.xpose.msra.mxu0 0.0
    %3775 = vmatprep.subr.mxu0 0.0
    %3776 = vmatpush1.xpose.msra.mxu0 0.0
    %3777 = vmatprep.subr.mxu0 0.0
    %3778 = vmatpush1.xpose.msra.mxu0 0.0
    %3779 = vmatprep.mubr.f32.mxu0 0.0
    %3780 = vmatmul.mubr.f32.gmra.mrb[0].mxu0 %v3711
    %v3781 = vpop.f32.mrb[0].mxu0
    %v3782 = vadd.f32 %v271, %v3781
    %v3783 = vpop.f32.mrb[0].mxu0
    %3784 = vdwg.mxu0
    %v3785 = vsel %vm562, %v3704, -inf
    %3786 = vmax.xlane.f32.xlu0 %v3785
    %v3787 = vpop.xlane.xlu0 %3786
    %v3788 = vsel %vm562, %v3782, -inf
    %3789 = vmax.xlane.f32.xlu0 %v3788
    %v3790 = vpop.xlane.xlu0 %3789
    %v3791 = vsub.f32 %v3704, %v3787
    %v3792 = vsub.f32 %v3782, %v3790
    %v3793 = vmul.f32 %v3791, 1.442695
    %v3794 = vpow.pop %v3793
    %v3795 = vmul.f32 %v3792, 1.442695
    %v3796 = vpow.pop %v3795
    %v3797 = vsel %vm562, %v3794, 0.0
    %3798 = vadd.xlane.f32.xlu0 %v3797
    %v3799 = vpop.xlane.xlu0 %3798
    %v3800 = vsel %vm562, %v3796, 0.0
    %3801 = vadd.xlane.f32.xlu0 %v3800
    %v3802 = vpop.xlane.xlu0 %3801
    %v3803 = vrcp.pop %v3799
    %v3804 = vrcp.pop %v3802
    %v3805 = vmul.f32 %v3794, %v3803
    %v3806 = vmul.f32 %v3796, %v3804
    %3807 = vrot.lane.b32.xlu0 %v2802, 112
    %v3808 = vpop.permute.xlu0 %3807
    %v3811 = vsel %vm562, %v3805, 0
    %3813 = vmatprep.subr.mxu0 0.0
    %3814 = vmatpush1.msra.mxu0 %v3808
    %3815 = vmatprep.subr.mxu0 0.0
    %3816 = vmatpush1.msra.mxu0 0.0
    %3817 = vmatprep.subr.mxu0 0.0
    %3818 = vmatpush1.msra.mxu0 0.0
    %3819 = vmatprep.subr.mxu0 0.0
    %3820 = vmatpush1.msra.mxu0 0.0
    %3821 = vmatprep.subr.mxu0 0.0
    %3822 = vmatpush1.msra.mxu0 0.0
    %3823 = vmatprep.subr.mxu0 0.0
    %3824 = vmatpush1.msra.mxu0 0.0
    %3825 = vmatprep.subr.mxu0 0.0
    %3826 = vmatpush1.msra.mxu0 0.0
    %3827 = vmatprep.subr.mxu0 0.0
    %3828 = vmatpush1.msra.mxu0 0.0
    %3829 = vmatprep.subr.mxu0 0.0
    %3830 = vmatpush1.msra.mxu0 0.0
    %3831 = vmatprep.subr.mxu0 0.0
    %3832 = vmatpush1.msra.mxu0 0.0
    %3833 = vmatprep.subr.mxu0 0.0
    %3834 = vmatpush1.msra.mxu0 0.0
    %3835 = vmatprep.subr.mxu0 0.0
    %3836 = vmatpush1.msra.mxu0 0.0
    %3837 = vmatprep.subr.mxu0 0.0
    %3838 = vmatpush1.msra.mxu0 0.0
    %3839 = vmatprep.subr.mxu0 0.0
    %3840 = vmatpush1.msra.mxu0 0.0
    %3841 = vmatprep.subr.mxu0 0.0
    %3842 = vmatpush1.msra.mxu0 0.0
    %3843 = vmatprep.subr.mxu0 0.0
    %3844 = vmatpush1.msra.mxu0 0.0
    %3845 = vmatprep.subr.mxu0 0.0
    %3846 = vmatpush1.msra.mxu0 0.0
    %3847 = vmatprep.subr.mxu0 0.0
    %3848 = vmatpush1.msra.mxu0 0.0
    %3849 = vmatprep.subr.mxu0 0.0
    %3850 = vmatpush1.msra.mxu0 0.0
    %3851 = vmatprep.subr.mxu0 0.0
    %3852 = vmatpush1.msra.mxu0 0.0
    %3853 = vmatprep.subr.mxu0 0.0
    %3854 = vmatpush1.msra.mxu0 0.0
    %3855 = vmatprep.subr.mxu0 0.0
    %3856 = vmatpush1.msra.mxu0 0.0
    %3857 = vmatprep.subr.mxu0 0.0
    %3858 = vmatpush1.msra.mxu0 0.0
    %3859 = vmatprep.subr.mxu0 0.0
    %3860 = vmatpush1.msra.mxu0 0.0
    %3861 = vmatprep.subr.mxu0 0.0
    %3862 = vmatpush1.msra.mxu0 0.0
    %3863 = vmatprep.subr.mxu0 0.0
    %3864 = vmatpush1.msra.mxu0 0.0
    %3865 = vmatprep.subr.mxu0 0.0
    %3866 = vmatpush1.msra.mxu0 0.0
    %3867 = vmatprep.subr.mxu0 0.0
    %3868 = vmatpush1.msra.mxu0 0.0
    %3869 = vmatprep.subr.mxu0 0.0
    %3870 = vmatpush1.msra.mxu0 0.0
    %3871 = vmatprep.subr.mxu0 0.0
    %3872 = vmatpush1.msra.mxu0 0.0
    %3873 = vmatprep.subr.mxu0 0.0
    %3874 = vmatpush1.msra.mxu0 0.0
    %3875 = vmatprep.subr.mxu0 0.0
    %3876 = vmatpush1.msra.mxu0 0.0
    %3877 = vmatprep.mubr.f32.mxu0 0.0
    %3878 = vmatmul.mubr.f32.gmra.mrb[0].mxu0 %v3811
    %v3879 = vpop.f32.mrb[0].mxu0
    %v3880 = vadd.f32 0.0, %v3879
    %v3881 = vpop.f32.mrb[0].mxu0
    %3882 = vdwg.mxu0
    %3883 = vrot.lane.b32.xlu0 %v2807, 112
    %v3884 = vpop.permute.xlu0 %3883
    %v3887 = vsel %vm562, %v3806, 0
    %3889 = vmatprep.subr.mxu0 0.0
    %3890 = vmatpush1.msra.mxu0 %v3884
    %3891 = vmatprep.subr.mxu0 0.0
    %3892 = vmatpush1.msra.mxu0 0.0
    %3893 = vmatprep.subr.mxu0 0.0
    %3894 = vmatpush1.msra.mxu0 0.0
    %3895 = vmatprep.subr.mxu0 0.0
    %3896 = vmatpush1.msra.mxu0 0.0
    %3897 = vmatprep.subr.mxu0 0.0
    %3898 = vmatpush1.msra.mxu0 0.0
    %3899 = vmatprep.subr.mxu0 0.0
    %3900 = vmatpush1.msra.mxu0 0.0
    %3901 = vmatprep.subr.mxu0 0.0
    %3902 = vmatpush1.msra.mxu0 0.0
    %3903 = vmatprep.subr.mxu0 0.0
    %3904 = vmatpush1.msra.mxu0 0.0
    %3905 = vmatprep.subr.mxu0 0.0
    %3906 = vmatpush1.msra.mxu0 0.0
    %3907 = vmatprep.subr.mxu0 0.0
    %3908 = vmatpush1.msra.mxu0 0.0
    %3909 = vmatprep.subr.mxu0 0.0
    %3910 = vmatpush1.msra.mxu0 0.0
    %3911 = vmatprep.subr.mxu0 0.0
    %3912 = vmatpush1.msra.mxu0 0.0
    %3913 = vmatprep.subr.mxu0 0.0
    %3914 = vmatpush1.msra.mxu0 0.0
    %3915 = vmatprep.subr.mxu0 0.0
    %3916 = vmatpush1.msra.mxu0 0.0
    %3917 = vmatprep.subr.mxu0 0.0
    %3918 = vmatpush1.msra.mxu0 0.0
    %3919 = vmatprep.subr.mxu0 0.0
    %3920 = vmatpush1.msra.mxu0 0.0
    %3921 = vmatprep.subr.mxu0 0.0
    %3922 = vmatpush1.msra.mxu0 0.0
    %3923 = vmatprep.subr.mxu0 0.0
    %3924 = vmatpush1.msra.mxu0 0.0
    %3925 = vmatprep.subr.mxu0 0.0
    %3926 = vmatpush1.msra.mxu0 0.0
    %3927 = vmatprep.subr.mxu0 0.0
    %3928 = vmatpush1.msra.mxu0 0.0
    %3929 = vmatprep.subr.mxu0 0.0
    %3930 = vmatpush1.msra.mxu0 0.0
    %3931 = vmatprep.subr.mxu0 0.0
    %3932 = vmatpush1.msra.mxu0 0.0
    %3933 = vmatprep.subr.mxu0 0.0
    %3934 = vmatpush1.msra.mxu0 0.0
    %3935 = vmatprep.subr.mxu0 0.0
    %3936 = vmatpush1.msra.mxu0 0.0
    %3937 = vmatprep.subr.mxu0 0.0
    %3938 = vmatpush1.msra.mxu0 0.0
    %3939 = vmatprep.subr.mxu0 0.0
    %3940 = vmatpush1.msra.mxu0 0.0
    %3941 = vmatprep.subr.mxu0 0.0
    %3942 = vmatpush1.msra.mxu0 0.0
    %3943 = vmatprep.subr.mxu0 0.0
    %3944 = vmatpush1.msra.mxu0 0.0
    %3945 = vmatprep.subr.mxu0 0.0
    %3946 = vmatpush1.msra.mxu0 0.0
    %3947 = vmatprep.subr.mxu0 0.0
    %3948 = vmatpush1.msra.mxu0 0.0
    %3949 = vmatprep.subr.mxu0 0.0
    %3950 = vmatpush1.msra.mxu0 0.0
    %3951 = vmatprep.subr.mxu0 0.0
    %3952 = vmatpush1.msra.mxu0 0.0
    %3953 = vmatprep.mubr.f32.mxu0 0.0
    %3954 = vmatmul.mubr.f32.gmra.mrb[0].mxu0 %v3887
    %v3955 = vpop.f32.mrb[0].mxu0
    %v3956 = vadd.f32 0.0, %v3955
    %v3957 = vpop.f32.mrb[0].mxu0
    %3958 = vdwg.mxu0
    %v3960 = vsel %vm562, %v3880, 0
    %v3963 = vsel %vm562, %v3956, 0
    %3965 = vmatprep.subr.mxu0 0.0
    %3966 = vmatpush1.msra.mxu0 %v2813
    %3967 = vmatprep.subr.mxu0 0.0
    %3968 = vmatpush1.msra.mxu0 0.0
    %3969 = vmatprep.subr.mxu0 0.0
    %3970 = vmatpush1.msra.mxu0 0.0
    %3971 = vmatprep.subr.mxu0 0.0
    %3972 = vmatpush1.msra.mxu0 0.0
    %3973 = vmatprep.subr.mxu0 0.0
    %3974 = vmatpush1.msra.mxu0 0.0
    %3975 = vmatprep.subr.mxu0 0.0
    %3976 = vmatpush1.msra.mxu0 0.0
    %3977 = vmatprep.subr.mxu0 0.0
    %3978 = vmatpush1.msra.mxu0 0.0
    %3979 = vmatprep.subr.mxu0 0.0
    %3980 = vmatpush1.msra.mxu0 0.0
    %3981 = vmatprep.subr.mxu0 0.0
    %3982 = vmatpush1.msra.mxu0 0.0
    %3983 = vmatprep.subr.mxu0 0.0
    %3984 = vmatpush1.msra.mxu0 0.0
    %3985 = vmatprep.subr.mxu0 0.0
    %3986 = vmatpush1.msra.mxu0 0.0
    %3987 = vmatprep.subr.mxu0 0.0
    %3988 = vmatpush1.msra.mxu0 0.0
    %3989 = vmatprep.subr.mxu0 0.0
    %3990 = vmatpush1.msra.mxu0 0.0
    %3991 = vmatprep.subr.mxu0 0.0
    %3992 = vmatpush1.msra.mxu0 0.0
    %3993 = vmatprep.subr.mxu0 0.0
    %3994 = vmatpush1.msra.mxu0 0.0
    %3995 = vmatprep.subr.mxu0 0.0
    %3996 = vmatpush1.msra.mxu0 0.0
    %3997 = vmatprep.subr.mxu0 0.0
    %3998 = vmatpush1.msra.mxu0 0.0
    %3999 = vmatprep.subr.mxu0 0.0
    %4000 = vmatpush1.msra.mxu0 0.0
    %4001 = vmatprep.subr.mxu0 0.0
    %4002 = vmatpush1.msra.mxu0 0.0
    %4003 = vmatprep.subr.mxu0 0.0
    %4004 = vmatpush1.msra.mxu0 0.0
    %4005 = vmatprep.subr.mxu0 0.0
    %4006 = vmatpush1.msra.mxu0 0.0
    %4007 = vmatprep.subr.mxu0 0.0
    %4008 = vmatpush1.msra.mxu0 0.0
    %4009 = vmatprep.subr.mxu0 0.0
    %4010 = vmatpush1.msra.mxu0 0.0
    %4011 = vmatprep.subr.mxu0 0.0
    %4012 = vmatpush1.msra.mxu0 0.0
    %4013 = vmatprep.subr.mxu0 0.0
    %4014 = vmatpush1.msra.mxu0 0.0
    %4015 = vmatprep.subr.mxu0 0.0
    %4016 = vmatpush1.msra.mxu0 0.0
    %4017 = vmatprep.subr.mxu0 0.0
    %4018 = vmatpush1.msra.mxu0 0.0
    %4019 = vmatprep.subr.mxu0 0.0
    %4020 = vmatpush1.msra.mxu0 0.0
    %4021 = vmatprep.subr.mxu0 0.0
    %4022 = vmatpush1.msra.mxu0 0.0
    %4023 = vmatprep.subr.mxu0 0.0
    %4024 = vmatpush1.msra.mxu0 0.0
    %4025 = vmatprep.subr.mxu0 0.0
    %4026 = vmatpush1.msra.mxu0 0.0
    %4027 = vmatprep.subr.mxu0 0.0
    %4028 = vmatpush1.msra.mxu0 0.0
    %4029 = vmatprep.mubr.f32.mxu0 0.0
    %4030 = vmatmul.mubr.f32.gmra.mrb[0].mxu0 %v3960
    %v4031 = vpop.f32.mrb[0].mxu0
    %v4032 = vadd.f32 0.0, %v4031
    %v4033 = vpop.f32.mrb[0].mxu0
    %4034 = vmatprep.mubr.f32.mxu0 0.0
    %4035 = vmatmul.mubr.f32.gmra.mrb[0].mxu0 %v3963
    %v4036 = vpop.f32.mrb[0].mxu0
    %v4037 = vadd.f32 0.0, %v4036
    %v4038 = vpop.f32.mrb[0].mxu0
    %4039 = vdwg.mxu0
    %v4040 = vadd.f32 %v3621, %v4032
    %v4041 = vadd.f32 %v3626, %v4037
    %4042 = vrot.lane.b32.xlu0 %v2642, 104
    %v4043 = vpop.permute.xlu0 %4042
    %4044 = vrot.lane.b32.xlu0 %v2722, 104
    %v4045 = vpop.permute.xlu0 %4044
    %v4046 = vsel %vm562, %v4043, 0
    %v4048 = vsel %vm562, %v4045, 0
    %4050 = vmatprep.subr.mxu0 0.0
    %4051 = vmatpush1.xpose.msra.mxu0 %v4048
    %4052 = vmatprep.subr.mxu0 0.0
    %4053 = vmatpush1.xpose.msra.mxu0 0.0
    %4054 = vmatprep.subr.mxu0 0.0
    %4055 = vmatpush1.xpose.msra.mxu0 0.0
    %4056 = vmatprep.subr.mxu0 0.0
    %4057 = vmatpush1.xpose.msra.mxu0 0.0
    %4058 = vmatprep.subr.mxu0 0.0
    %4059 = vmatpush1.xpose.msra.mxu0 0.0
    %4060 = vmatprep.subr.mxu0 0.0
    %4061 = vmatpush1.xpose.msra.mxu0 0.0
    %4062 = vmatprep.subr.mxu0 0.0
    %4063 = vmatpush1.xpose.msra.mxu0 0.0
    %4064 = vmatprep.subr.mxu0 0.0
    %4065 = vmatpush1.xpose.msra.mxu0 0.0
    %4066 = vmatprep.subr.mxu0 0.0
    %4067 = vmatpush1.xpose.msra.mxu0 0.0
    %4068 = vmatprep.subr.mxu0 0.0
    %4069 = vmatpush1.xpose.msra.mxu0 0.0
    %4070 = vmatprep.subr.mxu0 0.0
    %4071 = vmatpush1.xpose.msra.mxu0 0.0
    %4072 = vmatprep.subr.mxu0 0.0
    %4073 = vmatpush1.xpose.msra.mxu0 0.0
    %4074 = vmatprep.subr.mxu0 0.0
    %4075 = vmatpush1.xpose.msra.mxu0 0.0
    %4076 = vmatprep.subr.mxu0 0.0
    %4077 = vmatpush1.xpose.msra.mxu0 0.0
    %4078 = vmatprep.subr.mxu0 0.0
    %4079 = vmatpush1.xpose.msra.mxu0 0.0
    %4080 = vmatprep.subr.mxu0 0.0
    %4081 = vmatpush1.xpose.msra.mxu0 0.0
    %4082 = vmatprep.subr.mxu0 0.0
    %4083 = vmatpush1.xpose.msra.mxu0 0.0
    %4084 = vmatprep.subr.mxu0 0.0
    %4085 = vmatpush1.xpose.msra.mxu0 0.0
    %4086 = vmatprep.subr.mxu0 0.0
    %4087 = vmatpush1.xpose.msra.mxu0 0.0
    %4088 = vmatprep.subr.mxu0 0.0
    %4089 = vmatpush1.xpose.msra.mxu0 0.0
    %4090 = vmatprep.subr.mxu0 0.0
    %4091 = vmatpush1.xpose.msra.mxu0 0.0
    %4092 = vmatprep.subr.mxu0 0.0
    %4093 = vmatpush1.xpose.msra.mxu0 0.0
    %4094 = vmatprep.subr.mxu0 0.0
    %4095 = vmatpush1.xpose.msra.mxu0 0.0
    %4096 = vmatprep.subr.mxu0 0.0
    %4097 = vmatpush1.xpose.msra.mxu0 0.0
    %4098 = vmatprep.subr.mxu0 0.0
    %4099 = vmatpush1.xpose.msra.mxu0 0.0
    %4100 = vmatprep.subr.mxu0 0.0
    %4101 = vmatpush1.xpose.msra.mxu0 0.0
    %4102 = vmatprep.subr.mxu0 0.0
    %4103 = vmatpush1.xpose.msra.mxu0 0.0
    %4104 = vmatprep.subr.mxu0 0.0
    %4105 = vmatpush1.xpose.msra.mxu0 0.0
    %4106 = vmatprep.subr.mxu0 0.0
    %4107 = vmatpush1.xpose.msra.mxu0 0.0
    %4108 = vmatprep.subr.mxu0 0.0
    %4109 = vmatpush1.xpose.msra.mxu0 0.0
    %4110 = vmatprep.subr.mxu0 0.0
    %4111 = vmatpush1.xpose.msra.mxu0 0.0
    %4112 = vmatprep.subr.mxu0 0.0
    %4113 = vmatpush1.xpose.msra.mxu0 0.0
    %4114 = vmatprep.mubr.f32.mxu0 0.0
    %4115 = vmatmul.mubr.f32.gmra.mrb[0].mxu0 %v4046
    %v4116 = vpop.f32.mrb[0].mxu0
    %v4117 = vadd.f32 %v272, %v4116
    %v4118 = vpop.f32.mrb[0].mxu0
    %4119 = vdwg.mxu0
    %4120 = vrot.lane.b32.xlu0 %v2647, 104
    %v4121 = vpop.permute.xlu0 %4120
    %4122 = vrot.lane.b32.xlu0 %v2727, 104
    %v4123 = vpop.permute.xlu0 %4122
    %v4124 = vsel %vm562, %v4121, 0
    %v4126 = vsel %vm562, %v4123, 0
    %4128 = vmatprep.subr.mxu0 0.0
    %4129 = vmatpush1.xpose.msra.mxu0 %v4126
    %4130 = vmatprep.subr.mxu0 0.0
    %4131 = vmatpush1.xpose.msra.mxu0 0.0
    %4132 = vmatprep.subr.mxu0 0.0
    %4133 = vmatpush1.xpose.msra.mxu0 0.0
    %4134 = vmatprep.subr.mxu0 0.0
    %4135 = vmatpush1.xpose.msra.mxu0 0.0
    %4136 = vmatprep.subr.mxu0 0.0
    %4137 = vmatpush1.xpose.msra.mxu0 0.0
    %4138 = vmatprep.subr.mxu0 0.0
    %4139 = vmatpush1.xpose.msra.mxu0 0.0
    %4140 = vmatprep.subr.mxu0 0.0
    %4141 = vmatpush1.xpose.msra.mxu0 0.0
    %4142 = vmatprep.subr.mxu0 0.0
    %4143 = vmatpush1.xpose.msra.mxu0 0.0
    %4144 = vmatprep.subr.mxu0 0.0
    %4145 = vmatpush1.xpose.msra.mxu0 0.0
    %4146 = vmatprep.subr.mxu0 0.0
    %4147 = vmatpush1.xpose.msra.mxu0 0.0
    %4148 = vmatprep.subr.mxu0 0.0
    %4149 = vmatpush1.xpose.msra.mxu0 0.0
    %4150 = vmatprep.subr.mxu0 0.0
    %4151 = vmatpush1.xpose.msra.mxu0 0.0
    %4152 = vmatprep.subr.mxu0 0.0
    %4153 = vmatpush1.xpose.msra.mxu0 0.0
    %4154 = vmatprep.subr.mxu0 0.0
    %4155 = vmatpush1.xpose.msra.mxu0 0.0
    %4156 = vmatprep.subr.mxu0 0.0
    %4157 = vmatpush1.xpose.msra.mxu0 0.0
    %4158 = vmatprep.subr.mxu0 0.0
    %4159 = vmatpush1.xpose.msra.mxu0 0.0
    %4160 = vmatprep.subr.mxu0 0.0
    %4161 = vmatpush1.xpose.msra.mxu0 0.0
    %4162 = vmatprep.subr.mxu0 0.0
    %4163 = vmatpush1.xpose.msra.mxu0 0.0
    %4164 = vmatprep.subr.mxu0 0.0
    %4165 = vmatpush1.xpose.msra.mxu0 0.0
    %4166 = vmatprep.subr.mxu0 0.0
    %4167 = vmatpush1.xpose.msra.mxu0 0.0
    %4168 = vmatprep.subr.mxu0 0.0
    %4169 = vmatpush1.xpose.msra.mxu0 0.0
    %4170 = vmatprep.subr.mxu0 0.0
    %4171 = vmatpush1.xpose.msra.mxu0 0.0
    %4172 = vmatprep.subr.mxu0 0.0
    %4173 = vmatpush1.xpose.msra.mxu0 0.0
    %4174 = vmatprep.subr.mxu0 0.0
    %4175 = vmatpush1.xpose.msra.mxu0 0.0
    %4176 = vmatprep.subr.mxu0 0.0
    %4177 = vmatpush1.xpose.msra.mxu0 0.0
    %4178 = vmatprep.subr.mxu0 0.0
    %4179 = vmatpush1.xpose.msra.mxu0 0.0
    %4180 = vmatprep.subr.mxu0 0.0
    %4181 = vmatpush1.xpose.msra.mxu0 0.0
    %4182 = vmatprep.subr.mxu0 0.0
    %4183 = vmatpush1.xpose.msra.mxu0 0.0
    %4184 = vmatprep.subr.mxu0 0.0
    %4185 = vmatpush1.xpose.msra.mxu0 0.0
    %4186 = vmatprep.subr.mxu0 0.0
    %4187 = vmatpush1.xpose.msra.mxu0 0.0
    %4188 = vmatprep.subr.mxu0 0.0
    %4189 = vmatpush1.xpose.msra.mxu0 0.0
    %4190 = vmatprep.subr.mxu0 0.0
    %4191 = vmatpush1.xpose.msra.mxu0 0.0
    %4192 = vmatprep.mubr.f32.mxu0 0.0
    %4193 = vmatmul.mubr.f32.gmra.mrb[0].mxu0 %v4124
    %v4194 = vpop.f32.mrb[0].mxu0
    %v4195 = vadd.f32 %v273, %v4194
    %v4196 = vpop.f32.mrb[0].mxu0
    %4197 = vdwg.mxu0
    %v4198 = vsel %vm562, %v4117, -inf
    %4199 = vmax.xlane.f32.xlu0 %v4198
    %v4200 = vpop.xlane.xlu0 %4199
    %v4201 = vsel %vm562, %v4195, -inf
    %4202 = vmax.xlane.f32.xlu0 %v4201
    %v4203 = vpop.xlane.xlu0 %4202
    %v4204 = vsub.f32 %v4117, %v4200
    %v4205 = vsub.f32 %v4195, %v4203
    %v4206 = vmul.f32 %v4204, 1.442695
    %v4207 = vpow.pop %v4206
    %v4208 = vmul.f32 %v4205, 1.442695
    %v4209 = vpow.pop %v4208
    %v4210 = vsel %vm562, %v4207, 0.0
    %4211 = vadd.xlane.f32.xlu0 %v4210
    %v4212 = vpop.xlane.xlu0 %4211
    %v4213 = vsel %vm562, %v4209, 0.0
    %4214 = vadd.xlane.f32.xlu0 %v4213
    %v4215 = vpop.xlane.xlu0 %4214
    %v4216 = vrcp.pop %v4212
    %v4217 = vrcp.pop %v4215
    %v4218 = vmul.f32 %v4207, %v4216
    %v4219 = vmul.f32 %v4209, %v4217
    %4220 = vrot.lane.b32.xlu0 %v2802, 104
    %v4221 = vpop.permute.xlu0 %4220
    %v4224 = vsel %vm562, %v4218, 0
    %4226 = vmatprep.subr.mxu0 0.0
    %4227 = vmatpush1.msra.mxu0 %v4221
    %4228 = vmatprep.subr.mxu0 0.0
    %4229 = vmatpush1.msra.mxu0 0.0
    %4230 = vmatprep.subr.mxu0 0.0
    %4231 = vmatpush1.msra.mxu0 0.0
    %4232 = vmatprep.subr.mxu0 0.0
    %4233 = vmatpush1.msra.mxu0 0.0
    %4234 = vmatprep.subr.mxu0 0.0
    %4235 = vmatpush1.msra.mxu0 0.0
    %4236 = vmatprep.subr.mxu0 0.0
    %4237 = vmatpush1.msra.mxu0 0.0
    %4238 = vmatprep.subr.mxu0 0.0
    %4239 = vmatpush1.msra.mxu0 0.0
    %4240 = vmatprep.subr.mxu0 0.0
    %4241 = vmatpush1.msra.mxu0 0.0
    %4242 = vmatprep.subr.mxu0 0.0
    %4243 = vmatpush1.msra.mxu0 0.0
    %4244 = vmatprep.subr.mxu0 0.0
    %4245 = vmatpush1.msra.mxu0 0.0
    %4246 = vmatprep.subr.mxu0 0.0
    %4247 = vmatpush1.msra.mxu0 0.0
    %4248 = vmatprep.subr.mxu0 0.0
    %4249 = vmatpush1.msra.mxu0 0.0
    %4250 = vmatprep.subr.mxu0 0.0
    %4251 = vmatpush1.msra.mxu0 0.0
    %4252 = vmatprep.subr.mxu0 0.0
    %4253 = vmatpush1.msra.mxu0 0.0
    %4254 = vmatprep.subr.mxu0 0.0
    %4255 = vmatpush1.msra.mxu0 0.0
    %4256 = vmatprep.subr.mxu0 0.0
    %4257 = vmatpush1.msra.mxu0 0.0
    %4258 = vmatprep.subr.mxu0 0.0
    %4259 = vmatpush1.msra.mxu0 0.0
    %4260 = vmatprep.subr.mxu0 0.0
    %4261 = vmatpush1.msra.mxu0 0.0
    %4262 = vmatprep.subr.mxu0 0.0
    %4263 = vmatpush1.msra.mxu0 0.0
    %4264 = vmatprep.subr.mxu0 0.0
    %4265 = vmatpush1.msra.mxu0 0.0
    %4266 = vmatprep.subr.mxu0 0.0
    %4267 = vmatpush1.msra.mxu0 0.0
    %4268 = vmatprep.subr.mxu0 0.0
    %4269 = vmatpush1.msra.mxu0 0.0
    %4270 = vmatprep.subr.mxu0 0.0
    %4271 = vmatpush1.msra.mxu0 0.0
    %4272 = vmatprep.subr.mxu0 0.0
    %4273 = vmatpush1.msra.mxu0 0.0
    %4274 = vmatprep.subr.mxu0 0.0
    %4275 = vmatpush1.msra.mxu0 0.0
    %4276 = vmatprep.subr.mxu0 0.0
    %4277 = vmatpush1.msra.mxu0 0.0
    %4278 = vmatprep.subr.mxu0 0.0
    %4279 = vmatpush1.msra.mxu0 0.0
    %4280 = vmatprep.subr.mxu0 0.0
    %4281 = vmatpush1.msra.mxu0 0.0
    %4282 = vmatprep.subr.mxu0 0.0
    %4283 = vmatpush1.msra.mxu0 0.0
    %4284 = vmatprep.subr.mxu0 0.0
    %4285 = vmatpush1.msra.mxu0 0.0
    %4286 = vmatprep.subr.mxu0 0.0
    %4287 = vmatpush1.msra.mxu0 0.0
    %4288 = vmatprep.subr.mxu0 0.0
    %4289 = vmatpush1.msra.mxu0 0.0
    %4290 = vmatprep.mubr.f32.mxu0 0.0
    %4291 = vmatmul.mubr.f32.gmra.mrb[0].mxu0 %v4224
    %v4292 = vpop.f32.mrb[0].mxu0
    %v4293 = vadd.f32 0.0, %v4292
    %v4294 = vpop.f32.mrb[0].mxu0
    %4295 = vdwg.mxu0
    %4296 = vrot.lane.b32.xlu0 %v2807, 104
    %v4297 = vpop.permute.xlu0 %4296
    %v4300 = vsel %vm562, %v4219, 0
    %4302 = vmatprep.subr.mxu0 0.0
    %4303 = vmatpush1.msra.mxu0 %v4297
    %4304 = vmatprep.subr.mxu0 0.0
    %4305 = vmatpush1.msra.mxu0 0.0
    %4306 = vmatprep.subr.mxu0 0.0
    %4307 = vmatpush1.msra.mxu0 0.0
    %4308 = vmatprep.subr.mxu0 0.0
    %4309 = vmatpush1.msra.mxu0 0.0
    %4310 = vmatprep.subr.mxu0 0.0
    %4311 = vmatpush1.msra.mxu0 0.0
    %4312 = vmatprep.subr.mxu0 0.0
    %4313 = vmatpush1.msra.mxu0 0.0
    %4314 = vmatprep.subr.mxu0 0.0
    %4315 = vmatpush1.msra.mxu0 0.0
    %4316 = vmatprep.subr.mxu0 0.0
    %4317 = vmatpush1.msra.mxu0 0.0
    %4318 = vmatprep.subr.mxu0 0.0
    %4319 = vmatpush1.msra.mxu0 0.0
    %4320 = vmatprep.subr.mxu0 0.0
    %4321 = vmatpush1.msra.mxu0 0.0
    %4322 = vmatprep.subr.mxu0 0.0
    %4323 = vmatpush1.msra.mxu0 0.0
    %4324 = vmatprep.subr.mxu0 0.0
    %4325 = vmatpush1.msra.mxu0 0.0
    %4326 = vmatprep.subr.mxu0 0.0
    %4327 = vmatpush1.msra.mxu0 0.0
    %4328 = vmatprep.subr.mxu0 0.0
    %4329 = vmatpush1.msra.mxu0 0.0
    %4330 = vmatprep.subr.mxu0 0.0
    %4331 = vmatpush1.msra.mxu0 0.0
    %4332 = vmatprep.subr.mxu0 0.0
    %4333 = vmatpush1.msra.mxu0 0.0
    %4334 = vmatprep.subr.mxu0 0.0
    %4335 = vmatpush1.msra.mxu0 0.0
    %4336 = vmatprep.subr.mxu0 0.0
    %4337 = vmatpush1.msra.mxu0 0.0
    %4338 = vmatprep.subr.mxu0 0.0
    %4339 = vmatpush1.msra.mxu0 0.0
    %4340 = vmatprep.subr.mxu0 0.0
    %4341 = vmatpush1.msra.mxu0 0.0
    %4342 = vmatprep.subr.mxu0 0.0
    %4343 = vmatpush1.msra.mxu0 0.0
    %4344 = vmatprep.subr.mxu0 0.0
    %4345 = vmatpush1.msra.mxu0 0.0
    %4346 = vmatprep.subr.mxu0 0.0
    %4347 = vmatpush1.msra.mxu0 0.0
    %4348 = vmatprep.subr.mxu0 0.0
    %4349 = vmatpush1.msra.mxu0 0.0
    %4350 = vmatprep.subr.mxu0 0.0
    %4351 = vmatpush1.msra.mxu0 0.0
    %4352 = vmatprep.subr.mxu0 0.0
    %4353 = vmatpush1.msra.mxu0 0.0
    %4354 = vmatprep.subr.mxu0 0.0
    %4355 = vmatpush1.msra.mxu0 0.0
    %4356 = vmatprep.subr.mxu0 0.0
    %4357 = vmatpush1.msra.mxu0 0.0
    %4358 = vmatprep.subr.mxu0 0.0
    %4359 = vmatpush1.msra.mxu0 0.0
    %4360 = vmatprep.subr.mxu0 0.0
    %4361 = vmatpush1.msra.mxu0 0.0
    %4362 = vmatprep.subr.mxu0 0.0
    %4363 = vmatpush1.msra.mxu0 0.0
    %4364 = vmatprep.subr.mxu0 0.0
    %4365 = vmatpush1.msra.mxu0 0.0
    %4366 = vmatprep.mubr.f32.mxu0 0.0
    %4367 = vmatmul.mubr.f32.gmra.mrb[0].mxu0 %v4300
    %v4368 = vpop.f32.mrb[0].mxu0
    %v4369 = vadd.f32 0.0, %v4368
    %v4370 = vpop.f32.mrb[0].mxu0
    %4371 = vdwg.mxu0
    %v4373 = vsel %vm562, %v4293, 0
    %v4376 = vsel %vm562, %v4369, 0
    %4378 = vmatprep.subr.mxu0 0.0
    %4379 = vmatpush1.msra.mxu0 %v2814
    %4380 = vmatprep.subr.mxu0 0.0
    %4381 = vmatpush1.msra.mxu0 0.0
    %4382 = vmatprep.subr.mxu0 0.0
    %4383 = vmatpush1.msra.mxu0 0.0
    %4384 = vmatprep.subr.mxu0 0.0
    %4385 = vmatpush1.msra.mxu0 0.0
    %4386 = vmatprep.subr.mxu0 0.0
    %4387 = vmatpush1.msra.mxu0 0.0
    %4388 = vmatprep.subr.mxu0 0.0
    %4389 = vmatpush1.msra.mxu0 0.0
    %4390 = vmatprep.subr.mxu0 0.0
    %4391 = vmatpush1.msra.mxu0 0.0
    %4392 = vmatprep.subr.mxu0 0.0
    %4393 = vmatpush1.msra.mxu0 0.0
    %4394 = vmatprep.subr.mxu0 0.0
    %4395 = vmatpush1.msra.mxu0 0.0
    %4396 = vmatprep.subr.mxu0 0.0
    %4397 = vmatpush1.msra.mxu0 0.0
    %4398 = vmatprep.subr.mxu0 0.0
    %4399 = vmatpush1.msra.mxu0 0.0
    %4400 = vmatprep.subr.mxu0 0.0
    %4401 = vmatpush1.msra.mxu0 0.0
    %4402 = vmatprep.subr.mxu0 0.0
    %4403 = vmatpush1.msra.mxu0 0.0
    %4404 = vmatprep.subr.mxu0 0.0
    %4405 = vmatpush1.msra.mxu0 0.0
    %4406 = vmatprep.subr.mxu0 0.0
    %4407 = vmatpush1.msra.mxu0 0.0
    %4408 = vmatprep.subr.mxu0 0.0
    %4409 = vmatpush1.msra.mxu0 0.0
    %4410 = vmatprep.subr.mxu0 0.0
    %4411 = vmatpush1.msra.mxu0 0.0
    %4412 = vmatprep.subr.mxu0 0.0
    %4413 = vmatpush1.msra.mxu0 0.0
    %4414 = vmatprep.subr.mxu0 0.0
    %4415 = vmatpush1.msra.mxu0 0.0
    %4416 = vmatprep.subr.mxu0 0.0
    %4417 = vmatpush1.msra.mxu0 0.0
    %4418 = vmatprep.subr.mxu0 0.0
    %4419 = vmatpush1.msra.mxu0 0.0
    %4420 = vmatprep.subr.mxu0 0.0
    %4421 = vmatpush1.msra.mxu0 0.0
    %4422 = vmatprep.subr.mxu0 0.0
    %4423 = vmatpush1.msra.mxu0 0.0
    %4424 = vmatprep.subr.mxu0 0.0
    %4425 = vmatpush1.msra.mxu0 0.0
    %4426 = vmatprep.subr.mxu0 0.0
    %4427 = vmatpush1.msra.mxu0 0.0
    %4428 = vmatprep.subr.mxu0 0.0
    %4429 = vmatpush1.msra.mxu0 0.0
    %4430 = vmatprep.subr.mxu0 0.0
    %4431 = vmatpush1.msra.mxu0 0.0
    %4432 = vmatprep.subr.mxu0 0.0
    %4433 = vmatpush1.msra.mxu0 0.0
    %4434 = vmatprep.subr.mxu0 0.0
    %4435 = vmatpush1.msra.mxu0 0.0
    %4436 = vmatprep.subr.mxu0 0.0
    %4437 = vmatpush1.msra.mxu0 0.0
    %4438 = vmatprep.subr.mxu0 0.0
    %4439 = vmatpush1.msra.mxu0 0.0
    %4440 = vmatprep.subr.mxu0 0.0
    %4441 = vmatpush1.msra.mxu0 0.0
    %4442 = vmatprep.mubr.f32.mxu0 0.0
    %4443 = vmatmul.mubr.f32.gmra.mrb[0].mxu0 %v4373
    %v4444 = vpop.f32.mrb[0].mxu0
    %v4445 = vadd.f32 0.0, %v4444
    %v4446 = vpop.f32.mrb[0].mxu0
    %4447 = vmatprep.mubr.f32.mxu0 0.0
    %4448 = vmatmul.mubr.f32.gmra.mrb[0].mxu0 %v4376
    %v4449 = vpop.f32.mrb[0].mxu0
    %v4450 = vadd.f32 0.0, %v4449
    %v4451 = vpop.f32.mrb[0].mxu0
    %4452 = vdwg.mxu0
    %v4453 = vadd.f32 %v4040, %v4445
    %v4454 = vadd.f32 %v4041, %v4450
    %v4455 = vadd.f32 %v2522, %v4453
    %v4456 = vadd.f32 %v2523, %v4454
    %s4457 = scalar_lea.vmem [#allocation8], 1
    %v4458 = vld [vmem:[%s4457] sm:$0x1]
    %v4459 = vmul.f32 %v4455, %v4455
    %v4460 = vmul.f32 %v4456, %v4456
    %v4461 = vsel %vm277, %v4459, 0.0
    %4462 = vadd.xlane.f32.xlu0 %v4461
    %v4463 = vpop.xlane.xlu0 %4462
    %v4464 = vsel %vm277, %v4460, 0.0
    %4465 = vadd.xlane.f32.xlu0 %v4464
    %v4466 = vpop.xlane.xlu0 %4465
    %v4467 = vmul.f32 %v4463, %v284
    %v4468 = vmul.f32 %v4466, %v284
    %v4469 = vadd.f32 %v4467, 1e-06
    %v4470 = vadd.f32 %v4468, 1e-06
    %v4471 = vrsqrt.pop %v4469
    %v4472 = vrsqrt.pop %v4470
    %v4473 = vmul.f32 %v4455, %v4471
    %v4474 = vmul.f32 %v4456, %v4472
    %v4476 = vlaneseq
    %v4477 = vshrl.u32 %v4476, 7
    %v4478 = vsub.s32 0, %v4477
    %v4479 = vrot.slane %v4458, %v4478
    %v4481 = vmul.f32 %v4479, %v4473
    %v4482 = vmul.f32 %v4479, %v4474
    %4485 = vrot.lane.b32.xlu0 %v2550, 64
    %v4486 = vpop.permute.xlu0 %4485
    %4487 = vrot.lane.b32.xlu0 %v2551, 64
    %v4488 = vpop.permute.xlu0 %4487
    %v4491 = vmul.f32 %v4481, %v4486
    %v4492 = vmul.f32 %v4482, %v4488
    %4493 = vrot.lane.b32.xlu0 %v257, 32
    %v4494 = vpop.permute.xlu0 %4493
    %4495 = vrot.lane.b32.xlu0 %v265, 32
    %v4496 = vpop.permute.xlu0 %4495
    %v4499 = vadd.f32 %v4491, %v4494
    %v4500 = vadd.f32 %v4492, %v4496
    %s4501 = scalar_lea.vmem [#allocation10], 32
    %v4502 = vld [vmem:[%s4501] sm:$0xff]
    %v4503 = vld [vmem:[%s4501 + $0x8] sm:$0xff]
    %v4504 = vld [vmem:[%s4501 + $0x10] sm:$0xff]
    %v4505 = vld [vmem:[%s4501 + $0x18] sm:$0xff]
    %v4507 = vsel %vm277, %v4499, 0
    %v4510 = vsel %vm277, %v4500, 0
    %4512 = vmatprep.subr.mxu0 0.0
    %4513 = vmatpush1.msra.mxu0 %v4502
    %4514 = vmatprep.subr.mxu0 0.0
    %4515 = vmatpush1.msra.mxu0 %v4503
    %4516 = vmatprep.subr.mxu0 0.0
    %4517 = vmatpush1.msra.mxu0 %v4504
    %4518 = vmatprep.subr.mxu0 0.0
    %4519 = vmatpush1.msra.mxu0 %v4505
    %4520 = vmatprep.subr.mxu0 0.0
    %4521 = vmatpush1.msra.mxu0 0.0
    %4522 = vmatprep.subr.mxu0 0.0
    %4523 = vmatpush1.msra.mxu0 0.0
    %4524 = vmatprep.subr.mxu0 0.0
    %4525 = vmatpush1.msra.mxu0 0.0
    %4526 = vmatprep.subr.mxu0 0.0
    %4527 = vmatpush1.msra.mxu0 0.0
    %4528 = vmatprep.subr.mxu0 0.0
    %4529 = vmatpush1.msra.mxu0 0.0
    %4530 = vmatprep.subr.mxu0 0.0
    %4531 = vmatpush1.msra.mxu0 0.0
    %4532 = vmatprep.subr.mxu0 0.0
    %4533 = vmatpush1.msra.mxu0 0.0
    %4534 = vmatprep.subr.mxu0 0.0
    %4535 = vmatpush1.msra.mxu0 0.0
    %4536 = vmatprep.subr.mxu0 0.0
    %4537 = vmatpush1.msra.mxu0 0.0
    %4538 = vmatprep.subr.mxu0 0.0
    %4539 = vmatpush1.msra.mxu0 0.0
    %4540 = vmatprep.subr.mxu0 0.0
    %4541 = vmatpush1.msra.mxu0 0.0
    %4542 = vmatprep.subr.mxu0 0.0
    %4543 = vmatpush1.msra.mxu0 0.0
    %4544 = vmatprep.subr.mxu0 0.0
    %4545 = vmatpush1.msra.mxu0 0.0
    %4546 = vmatprep.subr.mxu0 0.0
    %4547 = vmatpush1.msra.mxu0 0.0
    %4548 = vmatprep.subr.mxu0 0.0
    %4549 = vmatpush1.msra.mxu0 0.0
    %4550 = vmatprep.subr.mxu0 0.0
    %4551 = vmatpush1.msra.mxu0 0.0
    %4552 = vmatprep.subr.mxu0 0.0
    %4553 = vmatpush1.msra.mxu0 0.0
    %4554 = vmatprep.subr.mxu0 0.0
    %4555 = vmatpush1.msra.mxu0 0.0
    %4556 = vmatprep.subr.mxu0 0.0
    %4557 = vmatpush1.msra.mxu0 0.0
    %4558 = vmatprep.subr.mxu0 0.0
    %4559 = vmatpush1.msra.mxu0 0.0
    %4560 = vmatprep.subr.mxu0 0.0
    %4561 = vmatpush1.msra.mxu0 0.0
    %4562 = vmatprep.subr.mxu0 0.0
    %4563 = vmatpush1.msra.mxu0 0.0
    %4564 = vmatprep.subr.mxu0 0.0
    %4565 = vmatpush1.msra.mxu0 0.0
    %4566 = vmatprep.subr.mxu0 0.0
    %4567 = vmatpush1.msra.mxu0 0.0
    %4568 = vmatprep.subr.mxu0 0.0
    %4569 = vmatpush1.msra.mxu0 0.0
    %4570 = vmatprep.subr.mxu0 0.0
    %4571 = vmatpush1.msra.mxu0 0.0
    %4572 = vmatprep.subr.mxu0 0.0
    %4573 = vmatpush1.msra.mxu0 0.0
    %4574 = vmatprep.subr.mxu0 0.0
    %4575 = vmatpush1.msra.mxu0 0.0
    %4576 = vmatprep.mubr.f32.mxu0 0.0
    %4577 = vmatmul.mubr.f32.gmra.mrb[0].mxu0 %v4507
    %v4578 = vpop.f32.mrb[0].mxu0
    %v4579 = vadd.f32 0.0, %v4578
    %v4580 = vpop.f32.mrb[0].mxu0
    %4581 = vmatprep.mubr.f32.mxu0 0.0
    %4582 = vmatmul.mubr.f32.gmra.mrb[0].mxu0 %v4510
    %v4583 = vpop.f32.mrb[0].mxu0
    %v4584 = vadd.f32 0.0, %v4583
    %v4585 = vpop.f32.mrb[0].mxu0
    %4586 = vdwg.mxu0
    %s4587 = scalar_lea.vmem [#allocation11], 32
    %v4588 = vld [vmem:[%s4587] sm:$0xff]
    %v4589 = vld [vmem:[%s4587 + $0x8] sm:$0xff]
    %v4590 = vld [vmem:[%s4587 + $0x10] sm:$0xff]
    %v4591 = vld [vmem:[%s4587 + $0x18] sm:$0xff]
    %4592 = vmatprep.subr.mxu0 0.0
    %4593 = vmatpush1.msra.mxu0 %v4588
    %4594 = vmatprep.subr.mxu0 0.0
    %4595 = vmatpush1.msra.mxu0 %v4589
    %4596 = vmatprep.subr.mxu0 0.0
    %4597 = vmatpush1.msra.mxu0 %v4590
    %4598 = vmatprep.subr.mxu0 0.0
    %4599 = vmatpush1.msra.mxu0 %v4591
    %4600 = vmatprep.subr.mxu0 0.0
    %4601 = vmatpush1.msra.mxu0 0.0
    %4602 = vmatprep.subr.mxu0 0.0
    %4603 = vmatpush1.msra.mxu0 0.0
    %4604 = vmatprep.subr.mxu0 0.0
    %4605 = vmatpush1.msra.mxu0 0.0
    %4606 = vmatprep.subr.mxu0 0.0
    %4607 = vmatpush1.msra.mxu0 0.0
    %4608 = vmatprep.subr.mxu0 0.0
    %4609 = vmatpush1.msra.mxu0 0.0
    %4610 = vmatprep.subr.mxu0 0.0
    %4611 = vmatpush1.msra.mxu0 0.0
    %4612 = vmatprep.subr.mxu0 0.0
    %4613 = vmatpush1.msra.mxu0 0.0
    %4614 = vmatprep.subr.mxu0 0.0
    %4615 = vmatpush1.msra.mxu0 0.0
    %4616 = vmatprep.subr.mxu0 0.0
    %4617 = vmatpush1.msra.mxu0 0.0
    %4618 = vmatprep.subr.mxu0 0.0
    %4619 = vmatpush1.msra.mxu0 0.0
    %4620 = vmatprep.subr.mxu0 0.0
    %4621 = vmatpush1.msra.mxu0 0.0
    %4622 = vmatprep.subr.mxu0 0.0
    %4623 = vmatpush1.msra.mxu0 0.0
    %4624 = vmatprep.subr.mxu0 0.0
    %4625 = vmatpush1.msra.mxu0 0.0
    %4626 = vmatprep.subr.mxu0 0.0
    %4627 = vmatpush1.msra.mxu0 0.0
    %4628 = vmatprep.subr.mxu0 0.0
    %4629 = vmatpush1.msra.mxu0 0.0
    %4630 = vmatprep.subr.mxu0 0.0
    %4631 = vmatpush1.msra.mxu0 0.0
    %4632 = vmatprep.subr.mxu0 0.0
    %4633 = vmatpush1.msra.mxu0 0.0
    %4634 = vmatprep.subr.mxu0 0.0
    %4635 = vmatpush1.msra.mxu0 0.0
    %4636 = vmatprep.subr.mxu0 0.0
    %4637 = vmatpush1.msra.mxu0 0.0
    %4638 = vmatprep.subr.mxu0 0.0
    %4639 = vmatpush1.msra.mxu0 0.0
    %4640 = vmatprep.subr.mxu0 0.0
    %4641 = vmatpush1.msra.mxu0 0.0
    %4642 = vmatprep.subr.mxu0 0.0
    %4643 = vmatpush1.msra.mxu0 0.0
    %4644 = vmatprep.subr.mxu0 0.0
    %4645 = vmatpush1.msra.mxu0 0.0
    %4646 = vmatprep.subr.mxu0 0.0
    %4647 = vmatpush1.msra.mxu0 0.0
    %4648 = vmatprep.subr.mxu0 0.0
    %4649 = vmatpush1.msra.mxu0 0.0
    %4650 = vmatprep.subr.mxu0 0.0
    %4651 = vmatpush1.msra.mxu0 0.0
    %4652 = vmatprep.subr.mxu0 0.0
    %4653 = vmatpush1.msra.mxu0 0.0
    %4654 = vmatprep.subr.mxu0 0.0
    %4655 = vmatpush1.msra.mxu0 0.0
    %4656 = vmatprep.mubr.f32.mxu0 0.0
    %4657 = vmatmul.mubr.f32.gmra.mrb[0].mxu0 %v4507
    %v4658 = vpop.f32.mrb[0].mxu0
    %v4659 = vadd.f32 0.0, %v4658
    %v4660 = vpop.f32.mrb[0].mxu0
    %4661 = vmatprep.mubr.f32.mxu0 0.0
    %4662 = vmatmul.mubr.f32.gmra.mrb[0].mxu0 %v4510
    %v4663 = vpop.f32.mrb[0].mxu0
    %v4664 = vadd.f32 0.0, %v4663
    %v4665 = vpop.f32.mrb[0].mxu0
    %4666 = vdwg.mxu0
    %v4667 = vmul.f32 %v4659, 0.5
    %v4668 = vmul.f32 %v4664, 0.5
    %v4669 = vmul.f32 %v4659, 0.044715
    %v4670 = vmul.f32 %v4664, 0.044715
    %v4671 = vmul.f32 %v4669, %v4659
    %v4672 = vmul.f32 %v4670, %v4664
    %v4673 = vmul.f32 %v4671, %v4659
    %v4674 = vmul.f32 %v4672, %v4664
    %v4675 = vadd.f32 %v4659, %v4673
    %v4676 = vadd.f32 %v4664, %v4674
    %v4677 = vmul.f32 %v4675, 0.7978846
    %v4678 = vmul.f32 %v4676, 0.7978846
    %v4679 = vtanh.pop %v4677
    %v4680 = vtanh.pop %v4678
    %v4681 = vadd.f32 %v4679, 1.0
    %v4682 = vadd.f32 %v4680, 1.0
    %v4683 = vmul.f32 %v4667, %v4681
    %v4684 = vmul.f32 %v4668, %v4682
    %v4685 = vmul.f32 %v4579, %v4683
    %v4686 = vmul.f32 %v4584, %v4684
    %s4687 = scalar_lea.vmem %s11, 64
    %v4688 = vld [vmem:[%s4687] sm:$0xff]
    %v4689 = vld [vmem:[%s4687 + $0x8] sm:$0xff]
    %v4690 = vld [vmem:[%s4687 + $0x10] sm:$0xff]
    %v4691 = vld [vmem:[%s4687 + $0x18] sm:$0xff]
    %v4692 = vld [vmem:[%s4687 + $0x20] sm:$0xff]
    %v4693 = vld [vmem:[%s4687 + $0x28] sm:$0xff]
    %v4694 = vld [vmem:[%s4687 + $0x30] sm:$0xff]
    %v4695 = vld [vmem:[%s4687 + $0x38] sm:$0xff]
    %v4697 = vsel %vm2440, %v4685, 0
    %v4700 = vsel %vm2440, %v4686, 0
    %4702 = vmatprep.subr.mxu0 0.0
    %4703 = vmatpush1.msra.mxu0 %v4688
    %4704 = vmatprep.subr.mxu0 0.0
    %4705 = vmatpush1.msra.mxu0 %v4689
    %4706 = vmatprep.subr.mxu0 0.0
    %4707 = vmatpush1.msra.mxu0 %v4690
    %4708 = vmatprep.subr.mxu0 0.0
    %4709 = vmatpush1.msra.mxu0 %v4691
    %4710 = vmatprep.subr.mxu0 0.0
    %4711 = vmatpush1.msra.mxu0 %v4692
    %4712 = vmatprep.subr.mxu0 0.0
    %4713 = vmatpush1.msra.mxu0 %v4693
    %4714 = vmatprep.subr.mxu0 0.0
    %4715 = vmatpush1.msra.mxu0 %v4694
    %4716 = vmatprep.subr.mxu0 0.0
    %4717 = vmatpush1.msra.mxu0 %v4695
    %4718 = vmatprep.subr.mxu0 0.0
    %4719 = vmatpush1.msra.mxu0 0.0
    %4720 = vmatprep.subr.mxu0 0.0
    %4721 = vmatpush1.msra.mxu0 0.0
    %4722 = vmatprep.subr.mxu0 0.0
    %4723 = vmatpush1.msra.mxu0 0.0
    %4724 = vmatprep.subr.mxu0 0.0
    %4725 = vmatpush1.msra.mxu0 0.0
    %4726 = vmatprep.subr.mxu0 0.0
    %4727 = vmatpush1.msra.mxu0 0.0
    %4728 = vmatprep.subr.mxu0 0.0
    %4729 = vmatpush1.msra.mxu0 0.0
    %4730 = vmatprep.subr.mxu0 0.0
    %4731 = vmatpush1.msra.mxu0 0.0
    %4732 = vmatprep.subr.mxu0 0.0
    %4733 = vmatpush1.msra.mxu0 0.0
    %4734 = vmatprep.subr.mxu0 0.0
    %4735 = vmatpush1.msra.mxu0 0.0
    %4736 = vmatprep.subr.mxu0 0.0
    %4737 = vmatpush1.msra.mxu0 0.0
    %4738 = vmatprep.subr.mxu0 0.0
    %4739 = vmatpush1.msra.mxu0 0.0
    %4740 = vmatprep.subr.mxu0 0.0
    %4741 = vmatpush1.msra.mxu0 0.0
    %4742 = vmatprep.subr.mxu0 0.0
    %4743 = vmatpush1.msra.mxu0 0.0
    %4744 = vmatprep.subr.mxu0 0.0
    %4745 = vmatpush1.msra.mxu0 0.0
    %4746 = vmatprep.subr.mxu0 0.0
    %4747 = vmatpush1.msra.mxu0 0.0
    %4748 = vmatprep.subr.mxu0 0.0
    %4749 = vmatpush1.msra.mxu0 0.0
    %4750 = vmatprep.subr.mxu0 0.0
    %4751 = vmatpush1.msra.mxu0 0.0
    %4752 = vmatprep.subr.mxu0 0.0
    %4753 = vmatpush1.msra.mxu0 0.0
    %4754 = vmatprep.subr.mxu0 0.0
    %4755 = vmatpush1.msra.mxu0 0.0
    %4756 = vmatprep.subr.mxu0 0.0
    %4757 = vmatpush1.msra.mxu0 0.0
    %4758 = vmatprep.subr.mxu0 0.0
    %4759 = vmatpush1.msra.mxu0 0.0
    %4760 = vmatprep.subr.mxu0 0.0
    %4761 = vmatpush1.msra.mxu0 0.0
    %4762 = vmatprep.subr.mxu0 0.0
    %4763 = vmatpush1.msra.mxu0 0.0
    %4764 = vmatprep.subr.mxu0 0.0
    %4765 = vmatpush1.msra.mxu0 0.0
    %4766 = vmatprep.mubr.f32.mxu0 0.0
    %4767 = vmatmul.mubr.f32.gmra.mrb[0].mxu0 %v4697
    %v4768 = vpop.f32.mrb[0].mxu0
    %v4769 = vadd.f32 0.0, %v4768
    %v4770 = vpop.f32.mrb[0].mxu0
    %4771 = vmatprep.mubr.f32.mxu0 0.0
    %4772 = vmatmul.mubr.f32.gmra.mrb[0].mxu0 %v4700
    %v4773 = vpop.f32.mrb[0].mxu0
    %v4774 = vadd.f32 0.0, %v4773
    %v4775 = vpop.f32.mrb[0].mxu0
    %4776 = vdwg.mxu0
    %v4777 = vadd.f32 %v4455, %v4769
    %v4778 = vadd.f32 %v4456, %v4774
    %v4779 = vld [vmem:[%s14] sm:$0x1]
    %v4780 = vmul.f32 %v4777, %v4777
    %v4781 = vmul.f32 %v4778, %v4778
    %v4782 = vsel %vm277, %v4780, 0.0
    %4783 = vadd.xlane.f32.xlu0 %v4782
    %v4784 = vpop.xlane.xlu0 %4783
    %v4785 = vsel %vm277, %v4781, 0.0
    %4786 = vadd.xlane.f32.xlu0 %v4785
    %v4787 = vpop.xlane.xlu0 %4786
    %v4788 = vmul.f32 %v4784, %v284
    %v4789 = vmul.f32 %v4787, %v284
    %v4790 = vadd.f32 %v4788, 1e-06
    %v4791 = vadd.f32 %v4789, 1e-06
    %v4792 = vrsqrt.pop %v4790
    %v4793 = vrsqrt.pop %v4791
    %v4794 = vmul.f32 %v4777, %v4792
    %v4795 = vmul.f32 %v4778, %v4793
    %v4797 = vlaneseq
    %v4798 = vshrl.u32 %v4797, 7
    %v4799 = vsub.s32 0, %v4798
    %v4800 = vrot.slane %v4779, %v4799
    %v4802 = vmul.f32 %v4800, %v4794
    %v4803 = vmul.f32 %v4800, %v4795
    %4804 = vst.msk [vmem:[#allocation16] sm:$0xff] %vm277, %v4802
    %4805 = vst.msk [vmem:[#allocation16 + $0x8] sm:$0xff] %vm277, %v4803
    // Predicated region
    $region94: #{transformer_stack.1} parent=1 // pred_check
      _
    $region95: #{transformer_stack.1} parent=1 // pred_check_branch
      %4807 = sbr.rel (0) target = $region97
    $region96: #{transformer_stack.1} parent=1 // pred_region
      %s4809 = ssub.s32 256, 256
      %4810 = vsyncadd [#allocation4], %s4809
      %s4811 = sshll.u32 [#allocation16], 4
      %s4812 = int_to_ptr.vmem [resolvable:$true] %s4811
      %4817 = dma.vmem_to_hbm [thread:$0]  %s4812, 256, %s15, [#allocation4], 128, 128, 8
    $region97: #{transformer_stack.1} parent=1 // pred_fallthru
      _
    // Predicated region
    $region98: #{transformer_stack.1} parent=1 // pred_check
      _
    $region99: #{transformer_stack.1} parent=1 // pred_check_branch
      %4819 = sbr.rel (0) target = $region101
    $region100: #{transformer_stack.1} parent=1 // pred_region
      %4820 = dma.done [#allocation4], 256
    $region101: #{transformer_stack.1} parent=1 // pred_fallthru
      _
    %4821 = vsyncpa [#allocation3], 1
    %4822 = vsyncpa [#allocation6], 1
    %4823 = vsyncpa [#allocation9], 1
    %4824 = vsyncpa [#allocation12], 1
    %4825 = vsyncpa [#allocation15], 1
    %4826 = vsyncpa [#allocation4], 1

</llo_original>
